<compile_context>
chip_gen: v5e
topology: v5e:2x2
jax: 0.10.0
libtpu: 0.0.40
codegen_flags: <defaults>
</compile_context>

<pallas_src>
import jax
import jax.numpy as jnp
from jax.experimental import pallas as pl
from jax.experimental.pallas import tpu as pltpu

_F32 = jnp.float32


def _round_up(x, m):
    return (x + m - 1) // m * m


def _cdiv(a, b):
    return -(-a // b)


# ---------------------------------------------------------------------------
# Pallas kernels
# ---------------------------------------------------------------------------
def _conv_relu_pool_kernel(p_ref, w_ref, b_ref, o_ref):
    """Fused Conv2d(valid, stride 1) + bias + ReLU + MaxPool2d(2,2) stage.

    p_ref : (TB, H, PWP, 2*KW*C)  width-expanded input:
            p[b, y, c, (dx*KW + j)*C + ic] == act[b, y, 2c + dx + j, ic]
    w_ref : (KH*KW*C, OC)   weight rows ordered (i, j, ic)
    b_ref : (1, OC)
    o_ref : (TB, PH, PWP, OC)  pooled ReLU activations (dense, no 128-lane pad)
    """
    tb, h, pwp, two_kwc = p_ref.shape
    kwc = two_kwc // 2
    k, oc = w_ref.shape
    kh = k // kwc
    ph = o_ref.shape[1]
    rows = tb * ph * pwp

    # Split the conv-row axis by parity once (leading-dim reshape: free).
    # y = 2*h2 + q, and every conv row we need is y = 2r + (dy + i).
    p = p_ref[...].reshape(tb, h // 2, 2, pwp, two_kwc)

    # Build the im2col LHS for the four 2x2 pool positions (dy, dx) using only
    # static leading-dim slices and lane slices, then one big matmul.
    groups = []
    for dy in range(2):
        for dx in range(2):
            slabs = []
            for i in range(kh):
                s = dy + i                                   # conv row = 2r + s
                sl = p[:, s // 2:s // 2 + ph, s % 2, :,
                       dx * kwc:(dx + 1) * kwc]              # (TB, PH, PWP, KWC)
                slabs.append(sl.reshape(rows, kwc))          # rows = (b, r, c)
            groups.append(jnp.concatenate(slabs, axis=-1))   # (rows, K)
    lhs = jnp.concatenate(groups, axis=0)                    # (4*rows, K)

    acc = jnp.dot(lhs, w_ref[...], preferred_element_type=jnp.float32)
    acc = acc.reshape(4, rows, oc).max(axis=0)    # 2x2 max-pool over the groups
    # Bias is constant across the pool window and ReLU is monotone, so
    # relu(max_g(x_g @ w) + b) == max_g(relu(x_g @ w + b)).
    out = jnp.maximum(acc + b_ref[...], 0.0)
    o_ref[...] = out.reshape(tb, ph, pwp, oc).astype(o_ref.dtype)


def _head_kernel(a_ref, w3_ref, b3_ref, w4_ref, b4_ref, w5_ref, b5_ref, o_ref):
    """conv3 (reduces to (B,400)x(400,120)) + ReLU + fc4 + ReLU + fc5.

    All intermediates stay in VMEM/vregs; output is written dense as (TB, 10).
    """
    h = jnp.dot(a_ref[...], w3_ref[...], preferred_element_type=jnp.float32)
    h = jnp.maximum(h + b3_ref[...], 0.0)                    # (TB, 120)
    h = jnp.dot(h, w4_ref[...], preferred_element_type=jnp.float32)
    h = jnp.maximum(h + b4_ref[...], 0.0)                    # (TB, 84)
    h = jnp.dot(h, w5_ref[...], preferred_element_type=jnp.float32)
    o_ref[...] = (h + b5_ref[...]).astype(o_ref.dtype)       # (TB, 10)


# ---------------------------------------------------------------------------
# Stage wrappers (trace-time glue is layout-only and small)
# ---------------------------------------------------------------------------
def conv_relu_pool_stage(x_nhwc, w, b, *, tile_b=8):
    """Conv2d (valid, stride 1) + ReLU + MaxPool2d(2,2) as one pallas_call.

    x_nhwc: (B,H,W,C) f32;  w: (OC,C,KH,KW) PyTorch layout;  b: (OC,)
    returns (B, (H-KH+1)//2, (W-KW+1)//2, OC) NHWC f32.
    """
    B, H, W, C = x_nhwc.shape
    OC, _, KH, KW = w.shape
    oh, ow = H - KH + 1, W - KW + 1
    ph, pw = oh // 2, ow // 2
    assert H % 2 == 0 and KH // 2 + ph <= H // 2
    pwp = _round_up(pw, 8)
    kwc = KW * C
    K = KH * kwc

    # Width-expanded LHS: p[b, y, c, (dx*KW + j)*C + ic] = x[b, y, 2c+dx+j, ic].
    # Same total bytes as a 2*KW*C-fold expansion of the input width (~4-5x),
    # vs the 4*KH*KW*C-fold (~20x) of a full pool-grouped im2col.
    cols = []
    for dx in range(2):
        for j in range(KW):
            cols.append(x_nhwc[:, :, dx + j::2, :][:, :, :pw, :])   # (B,H,pw,C)
    p = jnp.concatenate(cols, axis=-1)                       # (B, H, pw, 2*KW*C)
    if pwp != pw:
        p = jnp.pad(p, ((0, 0), (0, 0), (0, pwp - pw), (0, 0)))

    # Weights -> (K, OC) with (i, j, ic) row ordering matching the kernel.
    wm = jnp.transpose(w, (2, 3, 1, 0)).reshape(K, OC).astype(_F32)
    bm = b.reshape(1, OC).astype(_F32)

    # >= 2 grid steps whenever B >= 2 (megacore) but tiles still large enough
    # to amortize the ~0.35us/step pipeline overhead at realistic batch sizes.
    tb = max(1, min(tile_b, _cdiv(B, 2)))
    nb = _cdiv(B, tb)
    b_pad = nb * tb
    if b_pad != B:
        p = jnp.pad(p, ((0, b_pad - B), (0, 0), (0, 0), (0, 0)))

    out = pl.pallas_call(
        _conv_relu_pool_kernel,
        out_shape=jax.ShapeDtypeStruct((b_pad, ph, pwp, OC), _F32),
        grid_spec=pltpu.PrefetchScalarGridSpec(
            num_scalar_prefetch=0,
            grid=(nb,),
            in_specs=[
                pl.BlockSpec((tb, H, pwp, 2 * kwc), lambda m: (m, 0, 0, 0)),
                pl.BlockSpec((K, OC), lambda m: (0, 0)),      # resident weights
                pl.BlockSpec((1, OC), lambda m: (0, 0)),      # resident bias
            ],
            out_specs=pl.BlockSpec((tb, ph, pwp, OC), lambda m: (m, 0, 0, 0)),
        ),
        compiler_params=pltpu.CompilerParams(
            dimension_semantics=("parallel",),
            vmem_limit_bytes=32 * 1024 * 1024,   # actual need ~20 MiB at tb=8/32
        ),
        cost_estimate=pl.CostEstimate(
            flops=2 * 4 * b_pad * ph * pwp * K * OC,
            transcendentals=0,
            bytes_accessed=4 * (b_pad * H * pwp * 2 * kwc + K * OC + OC
                                + b_pad * ph * pwp * OC),
        ),
    )(p, wm, bm)
    return out[:B, :, :pw, :]


def head_stage(x_pool2_nhwc, params, *, tile_b=512):
    """conv3(16->120, 5x5 -> 1x1 spatial) + ReLU + fc4 + ReLU + fc5, one kernel."""
    B = x_pool2_nhwc.shape[0]
    a = x_pool2_nhwc.reshape(B, -1)                  # (B, 400), (i, j, ic) order
    K3 = a.shape[1]

    w3 = jnp.transpose(params["w3"], (2, 3, 1, 0)).reshape(K3, 120).astype(_F32)
    b3 = params["b3"].reshape(1, 120).astype(_F32)
    w4 = params["w4"].T.astype(_F32)                 # (120, 84)
    b4 = params["b4"].reshape(1, 84).astype(_F32)
    w5 = params["w5"].T.astype(_F32)                 # (84, 10)
    b5 = params["b5"].reshape(1, 10).astype(_F32)

    tb = min(tile_b, max(8, _round_up(_cdiv(B, 2), 8)))
    nb = _cdiv(B, tb)
    b_pad = nb * tb
    if b_pad != B:
        a = jnp.pad(a, ((0, b_pad - B), (0, 0)))

    out = pl.pallas_call(
        _head_kernel,
        out_shape=jax.ShapeDtypeStruct((b_pad, 10), _F32),
        grid_spec=pltpu.PrefetchScalarGridSpec(
            num_scalar_prefetch=0,
            grid=(nb,),
            in_specs=[
                pl.BlockSpec((tb, K3), lambda m: (m, 0)),
                pl.BlockSpec((K3, 120), lambda m: (0, 0)),
                pl.BlockSpec((1, 120), lambda m: (0, 0)),
                pl.BlockSpec((120, 84), lambda m: (0, 0)),
                pl.BlockSpec((1, 84), lambda m: (0, 0)),
                pl.BlockSpec((84, 10), lambda m: (0, 0)),
                pl.BlockSpec((1, 10), lambda m: (0, 0)),
            ],
            out_specs=pl.BlockSpec((tb, 10), lambda m: (m, 0)),
        ),
        compiler_params=pltpu.CompilerParams(
            dimension_semantics=("parallel",),
            vmem_limit_bytes=16 * 1024 * 1024,
        ),
        cost_estimate=pl.CostEstimate(
            flops=2 * b_pad * (K3 * 120 + 120 * 84 + 84 * 10),
            transcendentals=0,
            bytes_accessed=4 * (b_pad * (K3 + 10) + K3 * 120 + 120 * 84
                                + 84 * 10 + 120 + 84 + 10),
        ),
    )(a, w3, b3, w4, b4, w5, b5)
    return out[:B]


def lenet5_forward(x_nchw, params):
    """Exact semantics of LeNet5.forward (PyTorch). x: (B,1,32,32) f32 -> (B,10)."""
    x = jnp.transpose(x_nchw, (0, 2, 3, 1))                            # NHWC once
    x = conv_relu_pool_stage(x, params["w1"], params["b1"], tile_b=8)  # (B,14,14,6)
    x = conv_relu_pool_stage(x, params["w2"], params["b2"], tile_b=32) # (B,5,5,16)
    return head_stage(x, params)                                       # (B,10)


# ---------------------------------------------------------------------------
# Deterministic parameter init (shapes from LeNet5.__init__)
# ---------------------------------------------------------------------------
def init_params(key):
    def dense_init(k, shape, fan_in):
        return (jax.random.uniform(k, shape, jnp.float32, -1.0, 1.0)
                / jnp.sqrt(jnp.float32(fan_in)))

    ks = jax.random.split(key, 10)
    return {
        "w1": dense_init(ks[0], (6, 1, 5, 5), 1 * 5 * 5),
        "b1": dense_init(ks[1], (6,), 1 * 5 * 5),
        "w2": dense_init(ks[2], (16, 6, 5, 5), 6 * 5 * 5),
        "b2": dense_init(ks[3], (16,), 6 * 5 * 5),
        "w3": dense_init(ks[4], (120, 16, 5, 5), 16 * 5 * 5),
        "b3": dense_init(ks[5], (120,), 16 * 5 * 5),
        "w4": dense_init(ks[6], (84, 120), 120),   # PyTorch Linear: (out, in)
        "b4": dense_init(ks[7], (84,), 120),
        "w5": dense_init(ks[8], (10, 84), 84),
        "b5": dense_init(ks[9], (10,), 84),
    }


# ---------------------------------------------------------------------------
# Pure-JAX reference (correctness check only)
# ---------------------------------------------------------------------------
def _ref_forward(x, p):
    def conv(x, w, b):
        y = jax.lax.conv_general_dilated(
            x, w, (1, 1), "VALID",
            dimension_numbers=("NCHW", "OIHW", "NCHW"))
        return jax.nn.relu(y + b[None, :, None, None])

    def pool(x):
        B, C, H, W = x.shape
        return x.reshape(B, C, H // 2, 2, W // 2, 2).max(axis=(3, 5))

    x = pool(conv(x, p["w1"], p["b1"]))
    x = pool(conv(x, p["w2"], p["b2"]))
    x = conv(x, p["w3"], p["b3"])
    x = x.reshape(x.shape[0], -1)
    x = jax.nn.relu(x @ p["w4"].T + p["b4"])
    return x @ p["w5"].T + p["b5"]


if __name__ == "__main__":
    key = jax.random.PRNGKey(0)
    k_x, k_p = jax.random.split(key)
    # LeNet5 requires 32x32 single-channel input so c3 reduces to 1x1 spatial.
    x = jax.random.normal(k_x, (2, 1, 32, 32), dtype=jnp.float32)
    params = init_params(k_p)

    fwd = jax.jit(lenet5_forward)
    out = jax.block_until_ready(fwd(x, params))
    assert out.shape == (2, 10) and out.dtype == jnp.float32

    ref = jax.block_until_ready(_ref_forward(x, params))
    assert jnp.allclose(out, ref, atol=1e-4, rtol=1e-4), "mismatch vs reference"

    print("KERNEL_OK")
</pallas_src>

<mosaic_0001>
module attributes {stable_mosaic.version = 11 : i64} {
  func.func @_conv_relu_pool_kernel(%arg0: i32, %arg1: memref<1x32x16x10xf32, #tpu.memory_space<vmem>>, %arg2: memref<25x6xf32, #tpu.memory_space<vmem>>, %arg3: memref<1x6xf32, #tpu.memory_space<vmem>>, %arg4: memref<1x14x16x6xf32, #tpu.memory_space<vmem>>) attributes {dimension_semantics = [#tpu.dimension_semantics<parallel>], iteration_bounds = array<i64: 2>, scalar_prefetch = 0 : i64, scratch_operands = 0 : i64, tpu.core_type = #tpu.core_type<tc>, window_params = [{transform_indices = @transform_0, window_bounds = array<i64: 1, 32, 16, 10>}, {pipeline_mode = #tpu.pipeline_mode<synchronous>, transform_indices = @transform_1, window_bounds = array<i64: 25, 6>}, {pipeline_mode = #tpu.pipeline_mode<synchronous>, transform_indices = @transform_2, window_bounds = array<i64: 1, 6>}, {transform_indices = @transform_3, window_bounds = array<i64: 1, 14, 16, 6>}]} {
    %c0 = arith.constant 0 : index
    %c0_0 = arith.constant 0 : index
    %c0_1 = arith.constant 0 : index
    %c0_2 = arith.constant 0 : index
    %0 = vector.load %arg1[%c0, %c0_0, %c0_1, %c0_2] : memref<1x32x16x10xf32, #tpu.memory_space<vmem>>, vector<1x32x16x10xf32>
    %1 = vector.shape_cast %0 : vector<1x32x16x10xf32> to vector<1x16x2x16x10xf32>
    %2 = vector.extract_strided_slice %1 {offsets = [0, 0, 0, 0, 0], sizes = [1, 14, 1, 16, 5], strides = [1, 1, 1, 1, 1]} : vector<1x16x2x16x10xf32> to vector<1x14x1x16x5xf32>
    %3 = vector.shape_cast %2 : vector<1x14x1x16x5xf32> to vector<1x14x16x5xf32>
    %4 = vector.shape_cast %3 : vector<1x14x16x5xf32> to vector<224x5xf32>
    %5 = vector.extract_strided_slice %1 {offsets = [0, 0, 1, 0, 0], sizes = [1, 14, 1, 16, 5], strides = [1, 1, 1, 1, 1]} : vector<1x16x2x16x10xf32> to vector<1x14x1x16x5xf32>
    %6 = vector.shape_cast %5 : vector<1x14x1x16x5xf32> to vector<1x14x16x5xf32>
    %7 = vector.shape_cast %6 : vector<1x14x16x5xf32> to vector<224x5xf32>
    %8 = vector.extract_strided_slice %1 {offsets = [0, 1, 0, 0, 0], sizes = [1, 14, 1, 16, 5], strides = [1, 1, 1, 1, 1]} : vector<1x16x2x16x10xf32> to vector<1x14x1x16x5xf32>
    %9 = vector.shape_cast %8 : vector<1x14x1x16x5xf32> to vector<1x14x16x5xf32>
    %10 = vector.shape_cast %9 : vector<1x14x16x5xf32> to vector<224x5xf32>
    %11 = vector.extract_strided_slice %1 {offsets = [0, 1, 1, 0, 0], sizes = [1, 14, 1, 16, 5], strides = [1, 1, 1, 1, 1]} : vector<1x16x2x16x10xf32> to vector<1x14x1x16x5xf32>
    %12 = vector.shape_cast %11 : vector<1x14x1x16x5xf32> to vector<1x14x16x5xf32>
    %13 = vector.shape_cast %12 : vector<1x14x16x5xf32> to vector<224x5xf32>
    %14 = vector.extract_strided_slice %1 {offsets = [0, 2, 0, 0, 0], sizes = [1, 14, 1, 16, 5], strides = [1, 1, 1, 1, 1]} : vector<1x16x2x16x10xf32> to vector<1x14x1x16x5xf32>
    %15 = vector.shape_cast %14 : vector<1x14x1x16x5xf32> to vector<1x14x16x5xf32>
    %16 = vector.shape_cast %15 : vector<1x14x16x5xf32> to vector<224x5xf32>
    %17 = tpu.concatenate %4, %7, %10, %13, %16 in 1 : vector<224x5xf32>, vector<224x5xf32>, vector<224x5xf32>, vector<224x5xf32>, vector<224x5xf32> -> vector<224x25xf32>
    %18 = vector.extract_strided_slice %1 {offsets = [0, 0, 0, 0, 5], sizes = [1, 14, 1, 16, 5], strides = [1, 1, 1, 1, 1]} : vector<1x16x2x16x10xf32> to vector<1x14x1x16x5xf32>
    %19 = vector.shape_cast %18 : vector<1x14x1x16x5xf32> to vector<1x14x16x5xf32>
    %20 = vector.shape_cast %19 : vector<1x14x16x5xf32> to vector<224x5xf32>
    %21 = vector.extract_strided_slice %1 {offsets = [0, 0, 1, 0, 5], sizes = [1, 14, 1, 16, 5], strides = [1, 1, 1, 1, 1]} : vector<1x16x2x16x10xf32> to vector<1x14x1x16x5xf32>
    %22 = vector.shape_cast %21 : vector<1x14x1x16x5xf32> to vector<1x14x16x5xf32>
    %23 = vector.shape_cast %22 : vector<1x14x16x5xf32> to vector<224x5xf32>
    %24 = vector.extract_strided_slice %1 {offsets = [0, 1, 0, 0, 5], sizes = [1, 14, 1, 16, 5], strides = [1, 1, 1, 1, 1]} : vector<1x16x2x16x10xf32> to vector<1x14x1x16x5xf32>
    %25 = vector.shape_cast %24 : vector<1x14x1x16x5xf32> to vector<1x14x16x5xf32>
    %26 = vector.shape_cast %25 : vector<1x14x16x5xf32> to vector<224x5xf32>
    %27 = vector.extract_strided_slice %1 {offsets = [0, 1, 1, 0, 5], sizes = [1, 14, 1, 16, 5], strides = [1, 1, 1, 1, 1]} : vector<1x16x2x16x10xf32> to vector<1x14x1x16x5xf32>
    %28 = vector.shape_cast %27 : vector<1x14x1x16x5xf32> to vector<1x14x16x5xf32>
    %29 = vector.shape_cast %28 : vector<1x14x16x5xf32> to vector<224x5xf32>
    %30 = vector.extract_strided_slice %1 {offsets = [0, 2, 0, 0, 5], sizes = [1, 14, 1, 16, 5], strides = [1, 1, 1, 1, 1]} : vector<1x16x2x16x10xf32> to vector<1x14x1x16x5xf32>
    %31 = vector.shape_cast %30 : vector<1x14x1x16x5xf32> to vector<1x14x16x5xf32>
    %32 = vector.shape_cast %31 : vector<1x14x16x5xf32> to vector<224x5xf32>
    %33 = tpu.concatenate %20, %23, %26, %29, %32 in 1 : vector<224x5xf32>, vector<224x5xf32>, vector<224x5xf32>, vector<224x5xf32>, vector<224x5xf32> -> vector<224x25xf32>
    %34 = vector.extract_strided_slice %1 {offsets = [0, 0, 1, 0, 0], sizes = [1, 14, 1, 16, 5], strides = [1, 1, 1, 1, 1]} : vector<1x16x2x16x10xf32> to vector<1x14x1x16x5xf32>
    %35 = vector.shape_cast %34 : vector<1x14x1x16x5xf32> to vector<1x14x16x5xf32>
    %36 = vector.shape_cast %35 : vector<1x14x16x5xf32> to vector<224x5xf32>
    %37 = vector.extract_strided_slice %1 {offsets = [0, 1, 0, 0, 0], sizes = [1, 14, 1, 16, 5], strides = [1, 1, 1, 1, 1]} : vector<1x16x2x16x10xf32> to vector<1x14x1x16x5xf32>
    %38 = vector.shape_cast %37 : vector<1x14x1x16x5xf32> to vector<1x14x16x5xf32>
    %39 = vector.shape_cast %38 : vector<1x14x16x5xf32> to vector<224x5xf32>
    %40 = vector.extract_strided_slice %1 {offsets = [0, 1, 1, 0, 0], sizes = [1, 14, 1, 16, 5], strides = [1, 1, 1, 1, 1]} : vector<1x16x2x16x10xf32> to vector<1x14x1x16x5xf32>
    %41 = vector.shape_cast %40 : vector<1x14x1x16x5xf32> to vector<1x14x16x5xf32>
    %42 = vector.shape_cast %41 : vector<1x14x16x5xf32> to vector<224x5xf32>
    %43 = vector.extract_strided_slice %1 {offsets = [0, 2, 0, 0, 0], sizes = [1, 14, 1, 16, 5], strides = [1, 1, 1, 1, 1]} : vector<1x16x2x16x10xf32> to vector<1x14x1x16x5xf32>
    %44 = vector.shape_cast %43 : vector<1x14x1x16x5xf32> to vector<1x14x16x5xf32>
    %45 = vector.shape_cast %44 : vector<1x14x16x5xf32> to vector<224x5xf32>
    %46 = vector.extract_strided_slice %1 {offsets = [0, 2, 1, 0, 0], sizes = [1, 14, 1, 16, 5], strides = [1, 1, 1, 1, 1]} : vector<1x16x2x16x10xf32> to vector<1x14x1x16x5xf32>
    %47 = vector.shape_cast %46 : vector<1x14x1x16x5xf32> to vector<1x14x16x5xf32>
    %48 = vector.shape_cast %47 : vector<1x14x16x5xf32> to vector<224x5xf32>
    %49 = tpu.concatenate %36, %39, %42, %45, %48 in 1 : vector<224x5xf32>, vector<224x5xf32>, vector<224x5xf32>, vector<224x5xf32>, vector<224x5xf32> -> vector<224x25xf32>
    %50 = vector.extract_strided_slice %1 {offsets = [0, 0, 1, 0, 5], sizes = [1, 14, 1, 16, 5], strides = [1, 1, 1, 1, 1]} : vector<1x16x2x16x10xf32> to vector<1x14x1x16x5xf32>
    %51 = vector.shape_cast %50 : vector<1x14x1x16x5xf32> to vector<1x14x16x5xf32>
    %52 = vector.shape_cast %51 : vector<1x14x16x5xf32> to vector<224x5xf32>
    %53 = vector.extract_strided_slice %1 {offsets = [0, 1, 0, 0, 5], sizes = [1, 14, 1, 16, 5], strides = [1, 1, 1, 1, 1]} : vector<1x16x2x16x10xf32> to vector<1x14x1x16x5xf32>
    %54 = vector.shape_cast %53 : vector<1x14x1x16x5xf32> to vector<1x14x16x5xf32>
    %55 = vector.shape_cast %54 : vector<1x14x16x5xf32> to vector<224x5xf32>
    %56 = vector.extract_strided_slice %1 {offsets = [0, 1, 1, 0, 5], sizes = [1, 14, 1, 16, 5], strides = [1, 1, 1, 1, 1]} : vector<1x16x2x16x10xf32> to vector<1x14x1x16x5xf32>
    %57 = vector.shape_cast %56 : vector<1x14x1x16x5xf32> to vector<1x14x16x5xf32>
    %58 = vector.shape_cast %57 : vector<1x14x16x5xf32> to vector<224x5xf32>
    %59 = vector.extract_strided_slice %1 {offsets = [0, 2, 0, 0, 5], sizes = [1, 14, 1, 16, 5], strides = [1, 1, 1, 1, 1]} : vector<1x16x2x16x10xf32> to vector<1x14x1x16x5xf32>
    %60 = vector.shape_cast %59 : vector<1x14x1x16x5xf32> to vector<1x14x16x5xf32>
    %61 = vector.shape_cast %60 : vector<1x14x16x5xf32> to vector<224x5xf32>
    %62 = vector.extract_strided_slice %1 {offsets = [0, 2, 1, 0, 5], sizes = [1, 14, 1, 16, 5], strides = [1, 1, 1, 1, 1]} : vector<1x16x2x16x10xf32> to vector<1x14x1x16x5xf32>
    %63 = vector.shape_cast %62 : vector<1x14x1x16x5xf32> to vector<1x14x16x5xf32>
    %64 = vector.shape_cast %63 : vector<1x14x16x5xf32> to vector<224x5xf32>
    %65 = tpu.concatenate %52, %55, %58, %61, %64 in 1 : vector<224x5xf32>, vector<224x5xf32>, vector<224x5xf32>, vector<224x5xf32>, vector<224x5xf32> -> vector<224x25xf32>
    %66 = tpu.concatenate %17, %33, %49, %65 in 0 : vector<224x25xf32>, vector<224x25xf32>, vector<224x25xf32>, vector<224x25xf32> -> vector<896x25xf32>
    %c0_3 = arith.constant 0 : index
    %c0_4 = arith.constant 0 : index
    %67 = vector.load %arg2[%c0_3, %c0_4] : memref<25x6xf32, #tpu.memory_space<vmem>>, vector<25x6xf32>
    %cst = arith.constant dense<0.000000e+00> : vector<896x6xf32>
    %68 = tpu.matmul %66, %67, %cst {dimension_numbers = #tpu.dot_dimension_numbers<[1], [0], [0], [1], [0, 0, 1, 1], [], []>} : vector<896x25xf32>, vector<25x6xf32>, vector<896x6xf32> -> vector<896x6xf32>
    %69 = vector.shape_cast %68 : vector<896x6xf32> to vector<4x224x6xf32>
    %cst_5 = arith.constant dense<0xFF800000> : vector<224x6xf32>
    %70 = vector.multi_reduction <maximumf>, %69, %cst_5 [0] : vector<4x224x6xf32> to vector<224x6xf32>
    %c0_6 = arith.constant 0 : index
    %c0_7 = arith.constant 0 : index
    %71 = vector.load %arg3[%c0_6, %c0_7] : memref<1x6xf32, #tpu.memory_space<vmem>>, vector<1x6xf32>
    %72 = vector.broadcast %71 : vector<1x6xf32> to vector<224x6xf32>
    %73 = arith.addf %70, %72 : vector<224x6xf32>
    %cst_8 = arith.constant 0.000000e+00 : f32
    %74 = vector.broadcast %cst_8 : f32 to vector<224x6xf32>
    %75 = arith.maximumf %73, %74 : vector<224x6xf32>
    %76 = vector.shape_cast %75 : vector<224x6xf32> to vector<1x14x16x6xf32>
    %c0_9 = arith.constant 0 : index
    %c0_10 = arith.constant 0 : index
    %c0_11 = arith.constant 0 : index
    %c0_12 = arith.constant 0 : index
    %77 = vector.load %arg4[%c0_9, %c0_10, %c0_11, %c0_12] : memref<1x14x16x6xf32, #tpu.memory_space<vmem>>, vector<1x14x16x6xf32>
    tpu.vector_store %arg4[%c0_9, %c0_10, %c0_11, %c0_12], %76 {strides = array<i32>} : memref<1x14x16x6xf32, #tpu.memory_space<vmem>>, vector<1x14x16x6xf32>,
    return
  }
  func.func @transform_0(%arg0: i32) -> (i32, i32, i32, i32) {
    %c0_i32 = arith.constant 0 : i32
    %c0_i32_0 = arith.constant 0 : i32
    %c0_i32_1 = arith.constant 0 : i32
    %c0_i32_2 = arith.constant 0 : i32
    return %arg0, %c0_i32, %c0_i32_0, %c0_i32_1 : i32, i32, i32, i32
  }
  func.func @transform_1(%arg0: i32) -> (i32, i32) {
    %c0_i32 = arith.constant 0 : i32
    %c0_i32_0 = arith.constant 0 : i32
    %c0_i32_1 = arith.constant 0 : i32
    return %c0_i32, %c0_i32_0 : i32, i32
  }
  func.func @transform_2(%arg0: i32) -> (i32, i32) {
    %c0_i32 = arith.constant 0 : i32
    %c0_i32_0 = arith.constant 0 : i32
    %c0_i32_1 = arith.constant 0 : i32
    return %c0_i32, %c0_i32_0 : i32, i32
  }
  func.func @transform_3(%arg0: i32) -> (i32, i32, i32, i32) {
    %c0_i32 = arith.constant 0 : i32
    %c0_i32_0 = arith.constant 0 : i32
    %c0_i32_1 = arith.constant 0 : i32
    %c0_i32_2 = arith.constant 0 : i32
    return %arg0, %c0_i32, %c0_i32_0, %c0_i32_1 : i32, i32, i32, i32
  }
}

module attributes {stable_mosaic.version = 11 : i64} {
  func.func @_conv_relu_pool_kernel(%arg0: i32, %arg1: memref<1x14x8x60xf32, #tpu.memory_space<vmem>>, %arg2: memref<150x16xf32, #tpu.memory_space<vmem>>, %arg3: memref<1x16xf32, #tpu.memory_space<vmem>>, %arg4: memref<1x5x8x16xf32, #tpu.memory_space<vmem>>) attributes {dimension_semantics = [#tpu.dimension_semantics<parallel>], iteration_bounds = array<i64: 2>, scalar_prefetch = 0 : i64, scratch_operands = 0 : i64, tpu.core_type = #tpu.core_type<tc>, window_params = [{transform_indices = @transform_0, window_bounds = array<i64: 1, 14, 8, 60>}, {pipeline_mode = #tpu.pipeline_mode<synchronous>, transform_indices = @transform_1, window_bounds = array<i64: 150, 16>}, {pipeline_mode = #tpu.pipeline_mode<synchronous>, transform_indices = @transform_2, window_bounds = array<i64: 1, 16>}, {transform_indices = @transform_3, window_bounds = array<i64: 1, 5, 8, 16>}]} {
    %c0 = arith.constant 0 : index
    %c0_0 = arith.constant 0 : index
    %c0_1 = arith.constant 0 : index
    %c0_2 = arith.constant 0 : index
    %0 = vector.load %arg1[%c0, %c0_0, %c0_1, %c0_2] : memref<1x14x8x60xf32, #tpu.memory_space<vmem>>, vector<1x14x8x60xf32>
    %1 = vector.shape_cast %0 : vector<1x14x8x60xf32> to vector<1x7x2x8x60xf32>
    %2 = vector.extract_strided_slice %1 {offsets = [0, 0, 0, 0, 0], sizes = [1, 5, 1, 8, 30], strides = [1, 1, 1, 1, 1]} : vector<1x7x2x8x60xf32> to vector<1x5x1x8x30xf32>
    %3 = vector.shape_cast %2 : vector<1x5x1x8x30xf32> to vector<1x5x8x30xf32>
    %4 = vector.shape_cast %3 : vector<1x5x8x30xf32> to vector<40x30xf32>
    %5 = vector.extract_strided_slice %1 {offsets = [0, 0, 1, 0, 0], sizes = [1, 5, 1, 8, 30], strides = [1, 1, 1, 1, 1]} : vector<1x7x2x8x60xf32> to vector<1x5x1x8x30xf32>
    %6 = vector.shape_cast %5 : vector<1x5x1x8x30xf32> to vector<1x5x8x30xf32>
    %7 = vector.shape_cast %6 : vector<1x5x8x30xf32> to vector<40x30xf32>
    %8 = vector.extract_strided_slice %1 {offsets = [0, 1, 0, 0, 0], sizes = [1, 5, 1, 8, 30], strides = [1, 1, 1, 1, 1]} : vector<1x7x2x8x60xf32> to vector<1x5x1x8x30xf32>
    %9 = vector.shape_cast %8 : vector<1x5x1x8x30xf32> to vector<1x5x8x30xf32>
    %10 = vector.shape_cast %9 : vector<1x5x8x30xf32> to vector<40x30xf32>
    %11 = vector.extract_strided_slice %1 {offsets = [0, 1, 1, 0, 0], sizes = [1, 5, 1, 8, 30], strides = [1, 1, 1, 1, 1]} : vector<1x7x2x8x60xf32> to vector<1x5x1x8x30xf32>
    %12 = vector.shape_cast %11 : vector<1x5x1x8x30xf32> to vector<1x5x8x30xf32>
    %13 = vector.shape_cast %12 : vector<1x5x8x30xf32> to vector<40x30xf32>
    %14 = vector.extract_strided_slice %1 {offsets = [0, 2, 0, 0, 0], sizes = [1, 5, 1, 8, 30], strides = [1, 1, 1, 1, 1]} : vector<1x7x2x8x60xf32> to vector<1x5x1x8x30xf32>
    %15 = vector.shape_cast %14 : vector<1x5x1x8x30xf32> to vector<1x5x8x30xf32>
    %16 = vector.shape_cast %15 : vector<1x5x8x30xf32> to vector<40x30xf32>
    %17 = tpu.concatenate %4, %7, %10, %13, %16 in 1 : vector<40x30xf32>, vector<40x30xf32>, vector<40x30xf32>, vector<40x30xf32>, vector<40x30xf32> -> vector<40x150xf32>
    %18 = vector.extract_strided_slice %1 {offsets = [0, 0, 0, 0, 30], sizes = [1, 5, 1, 8, 30], strides = [1, 1, 1, 1, 1]} : vector<1x7x2x8x60xf32> to vector<1x5x1x8x30xf32>
    %19 = vector.shape_cast %18 : vector<1x5x1x8x30xf32> to vector<1x5x8x30xf32>
    %20 = vector.shape_cast %19 : vector<1x5x8x30xf32> to vector<40x30xf32>
    %21 = vector.extract_strided_slice %1 {offsets = [0, 0, 1, 0, 30], sizes = [1, 5, 1, 8, 30], strides = [1, 1, 1, 1, 1]} : vector<1x7x2x8x60xf32> to vector<1x5x1x8x30xf32>
    %22 = vector.shape_cast %21 : vector<1x5x1x8x30xf32> to vector<1x5x8x30xf32>
    %23 = vector.shape_cast %22 : vector<1x5x8x30xf32> to vector<40x30xf32>
    %24 = vector.extract_strided_slice %1 {offsets = [0, 1, 0, 0, 30], sizes = [1, 5, 1, 8, 30], strides = [1, 1, 1, 1, 1]} : vector<1x7x2x8x60xf32> to vector<1x5x1x8x30xf32>
    %25 = vector.shape_cast %24 : vector<1x5x1x8x30xf32> to vector<1x5x8x30xf32>
    %26 = vector.shape_cast %25 : vector<1x5x8x30xf32> to vector<40x30xf32>
    %27 = vector.extract_strided_slice %1 {offsets = [0, 1, 1, 0, 30], sizes = [1, 5, 1, 8, 30], strides = [1, 1, 1, 1, 1]} : vector<1x7x2x8x60xf32> to vector<1x5x1x8x30xf32>
    %28 = vector.shape_cast %27 : vector<1x5x1x8x30xf32> to vector<1x5x8x30xf32>
    %29 = vector.shape_cast %28 : vector<1x5x8x30xf32> to vector<40x30xf32>
    %30 = vector.extract_strided_slice %1 {offsets = [0, 2, 0, 0, 30], sizes = [1, 5, 1, 8, 30], strides = [1, 1, 1, 1, 1]} : vector<1x7x2x8x60xf32> to vector<1x5x1x8x30xf32>
    %31 = vector.shape_cast %30 : vector<1x5x1x8x30xf32> to vector<1x5x8x30xf32>
    %32 = vector.shape_cast %31 : vector<1x5x8x30xf32> to vector<40x30xf32>
    %33 = tpu.concatenate %20, %23, %26, %29, %32 in 1 : vector<40x30xf32>, vector<40x30xf32>, vector<40x30xf32>, vector<40x30xf32>, vector<40x30xf32> -> vector<40x150xf32>
    %34 = vector.extract_strided_slice %1 {offsets = [0, 0, 1, 0, 0], sizes = [1, 5, 1, 8, 30], strides = [1, 1, 1, 1, 1]} : vector<1x7x2x8x60xf32> to vector<1x5x1x8x30xf32>
    %35 = vector.shape_cast %34 : vector<1x5x1x8x30xf32> to vector<1x5x8x30xf32>
    %36 = vector.shape_cast %35 : vector<1x5x8x30xf32> to vector<40x30xf32>
    %37 = vector.extract_strided_slice %1 {offsets = [0, 1, 0, 0, 0], sizes = [1, 5, 1, 8, 30], strides = [1, 1, 1, 1, 1]} : vector<1x7x2x8x60xf32> to vector<1x5x1x8x30xf32>
    %38 = vector.shape_cast %37 : vector<1x5x1x8x30xf32> to vector<1x5x8x30xf32>
    %39 = vector.shape_cast %38 : vector<1x5x8x30xf32> to vector<40x30xf32>
    %40 = vector.extract_strided_slice %1 {offsets = [0, 1, 1, 0, 0], sizes = [1, 5, 1, 8, 30], strides = [1, 1, 1, 1, 1]} : vector<1x7x2x8x60xf32> to vector<1x5x1x8x30xf32>
    %41 = vector.shape_cast %40 : vector<1x5x1x8x30xf32> to vector<1x5x8x30xf32>
    %42 = vector.shape_cast %41 : vector<1x5x8x30xf32> to vector<40x30xf32>
    %43 = vector.extract_strided_slice %1 {offsets = [0, 2, 0, 0, 0], sizes = [1, 5, 1, 8, 30], strides = [1, 1, 1, 1, 1]} : vector<1x7x2x8x60xf32> to vector<1x5x1x8x30xf32>
    %44 = vector.shape_cast %43 : vector<1x5x1x8x30xf32> to vector<1x5x8x30xf32>
    %45 = vector.shape_cast %44 : vector<1x5x8x30xf32> to vector<40x30xf32>
    %46 = vector.extract_strided_slice %1 {offsets = [0, 2, 1, 0, 0], sizes = [1, 5, 1, 8, 30], strides = [1, 1, 1, 1, 1]} : vector<1x7x2x8x60xf32> to vector<1x5x1x8x30xf32>
    %47 = vector.shape_cast %46 : vector<1x5x1x8x30xf32> to vector<1x5x8x30xf32>
    %48 = vector.shape_cast %47 : vector<1x5x8x30xf32> to vector<40x30xf32>
    %49 = tpu.concatenate %36, %39, %42, %45, %48 in 1 : vector<40x30xf32>, vector<40x30xf32>, vector<40x30xf32>, vector<40x30xf32>, vector<40x30xf32> -> vector<40x150xf32>
    %50 = vector.extract_strided_slice %1 {offsets = [0, 0, 1, 0, 30], sizes = [1, 5, 1, 8, 30], strides = [1, 1, 1, 1, 1]} : vector<1x7x2x8x60xf32> to vector<1x5x1x8x30xf32>
    %51 = vector.shape_cast %50 : vector<1x5x1x8x30xf32> to vector<1x5x8x30xf32>
    %52 = vector.shape_cast %51 : vector<1x5x8x30xf32> to vector<40x30xf32>
    %53 = vector.extract_strided_slice %1 {offsets = [0, 1, 0, 0, 30], sizes = [1, 5, 1, 8, 30], strides = [1, 1, 1, 1, 1]} : vector<1x7x2x8x60xf32> to vector<1x5x1x8x30xf32>
    %54 = vector.shape_cast %53 : vector<1x5x1x8x30xf32> to vector<1x5x8x30xf32>
    %55 = vector.shape_cast %54 : vector<1x5x8x30xf32> to vector<40x30xf32>
    %56 = vector.extract_strided_slice %1 {offsets = [0, 1, 1, 0, 30], sizes = [1, 5, 1, 8, 30], strides = [1, 1, 1, 1, 1]} : vector<1x7x2x8x60xf32> to vector<1x5x1x8x30xf32>
    %57 = vector.shape_cast %56 : vector<1x5x1x8x30xf32> to vector<1x5x8x30xf32>
    %58 = vector.shape_cast %57 : vector<1x5x8x30xf32> to vector<40x30xf32>
    %59 = vector.extract_strided_slice %1 {offsets = [0, 2, 0, 0, 30], sizes = [1, 5, 1, 8, 30], strides = [1, 1, 1, 1, 1]} : vector<1x7x2x8x60xf32> to vector<1x5x1x8x30xf32>
    %60 = vector.shape_cast %59 : vector<1x5x1x8x30xf32> to vector<1x5x8x30xf32>
    %61 = vector.shape_cast %60 : vector<1x5x8x30xf32> to vector<40x30xf32>
    %62 = vector.extract_strided_slice %1 {offsets = [0, 2, 1, 0, 30], sizes = [1, 5, 1, 8, 30], strides = [1, 1, 1, 1, 1]} : vector<1x7x2x8x60xf32> to vector<1x5x1x8x30xf32>
    %63 = vector.shape_cast %62 : vector<1x5x1x8x30xf32> to vector<1x5x8x30xf32>
    %64 = vector.shape_cast %63 : vector<1x5x8x30xf32> to vector<40x30xf32>
    %65 = tpu.concatenate %52, %55, %58, %61, %64 in 1 : vector<40x30xf32>, vector<40x30xf32>, vector<40x30xf32>, vector<40x30xf32>, vector<40x30xf32> -> vector<40x150xf32>
    %66 = tpu.concatenate %17, %33, %49, %65 in 0 : vector<40x150xf32>, vector<40x150xf32>, vector<40x150xf32>, vector<40x150xf32> -> vector<160x150xf32>
    %c0_3 = arith.constant 0 : index
    %c0_4 = arith.constant 0 : index
    %67 = vector.load %arg2[%c0_3, %c0_4] : memref<150x16xf32, #tpu.memory_space<vmem>>, vector<150x16xf32>
    %cst = arith.constant dense<0.000000e+00> : vector<160x16xf32>
    %68 = tpu.matmul %66, %67, %cst {dimension_numbers = #tpu.dot_dimension_numbers<[1], [0], [0], [1], [0, 0, 1, 1], [], []>} : vector<160x150xf32>, vector<150x16xf32>, vector<160x16xf32> -> vector<160x16xf32>
    %69 = vector.shape_cast %68 : vector<160x16xf32> to vector<4x40x16xf32>
    %cst_5 = arith.constant dense<0xFF800000> : vector<40x16xf32>
    %70 = vector.multi_reduction <maximumf>, %69, %cst_5 [0] : vector<4x40x16xf32> to vector<40x16xf32>
    %c0_6 = arith.constant 0 : index
    %c0_7 = arith.constant 0 : index
    %71 = vector.load %arg3[%c0_6, %c0_7] : memref<1x16xf32, #tpu.memory_space<vmem>>, vector<1x16xf32>
    %72 = vector.broadcast %71 : vector<1x16xf32> to vector<40x16xf32>
    %73 = arith.addf %70, %72 : vector<40x16xf32>
    %cst_8 = arith.constant 0.000000e+00 : f32
    %74 = vector.broadcast %cst_8 : f32 to vector<40x16xf32>
    %75 = arith.maximumf %73, %74 : vector<40x16xf32>
    %76 = vector.shape_cast %75 : vector<40x16xf32> to vector<1x5x8x16xf32>
    %c0_9 = arith.constant 0 : index
    %c0_10 = arith.constant 0 : index
    %c0_11 = arith.constant 0 : index
    %c0_12 = arith.constant 0 : index
    %77 = vector.load %arg4[%c0_9, %c0_10, %c0_11, %c0_12] : memref<1x5x8x16xf32, #tpu.memory_space<vmem>>, vector<1x5x8x16xf32>
    tpu.vector_store %arg4[%c0_9, %c0_10, %c0_11, %c0_12], %76 {strides = array<i32>} : memref<1x5x8x16xf32, #tpu.memory_space<vmem>>, vector<1x5x8x16xf32>,
    return
  }
  func.func @transform_0(%arg0: i32) -> (i32, i32, i32, i32) {
    %c0_i32 = arith.constant 0 : i32
    %c0_i32_0 = arith.constant 0 : i32
    %c0_i32_1 = arith.constant 0 : i32
    %c0_i32_2 = arith.constant 0 : i32
    return %arg0, %c0_i32, %c0_i32_0, %c0_i32_1 : i32, i32, i32, i32
  }
  func.func @transform_1(%arg0: i32) -> (i32, i32) {
    %c0_i32 = arith.constant 0 : i32
    %c0_i32_0 = arith.constant 0 : i32
    %c0_i32_1 = arith.constant 0 : i32
    return %c0_i32, %c0_i32_0 : i32, i32
  }
  func.func @transform_2(%arg0: i32) -> (i32, i32) {
    %c0_i32 = arith.constant 0 : i32
    %c0_i32_0 = arith.constant 0 : i32
    %c0_i32_1 = arith.constant 0 : i32
    return %c0_i32, %c0_i32_0 : i32, i32
  }
  func.func @transform_3(%arg0: i32) -> (i32, i32, i32, i32) {
    %c0_i32 = arith.constant 0 : i32
    %c0_i32_0 = arith.constant 0 : i32
    %c0_i32_1 = arith.constant 0 : i32
    %c0_i32_2 = arith.constant 0 : i32
    return %arg0, %c0_i32, %c0_i32_0, %c0_i32_1 : i32, i32, i32, i32
  }
}

module attributes {stable_mosaic.version = 11 : i64} {
  func.func @_head_kernel(%arg0: i32, %arg1: memref<8x400xf32, #tpu.memory_space<vmem>>, %arg2: memref<400x120xf32, #tpu.memory_space<vmem>>, %arg3: memref<1x120xf32, #tpu.memory_space<vmem>>, %arg4: memref<120x84xf32, #tpu.memory_space<vmem>>, %arg5: memref<1x84xf32, #tpu.memory_space<vmem>>, %arg6: memref<84x10xf32, #tpu.memory_space<vmem>>, %arg7: memref<1x10xf32, #tpu.memory_space<vmem>>, %arg8: memref<8x10xf32, #tpu.memory_space<vmem>>) attributes {dimension_semantics = [#tpu.dimension_semantics<parallel>], iteration_bounds = array<i64: 1>, scalar_prefetch = 0 : i64, scratch_operands = 0 : i64, tpu.core_type = #tpu.core_type<tc>, window_params = [{transform_indices = @transform_0, window_bounds = array<i64: 8, 400>}, {pipeline_mode = #tpu.pipeline_mode<synchronous>, transform_indices = @transform_1, window_bounds = array<i64: 400, 120>}, {pipeline_mode = #tpu.pipeline_mode<synchronous>, transform_indices = @transform_2, window_bounds = array<i64: 1, 120>}, {pipeline_mode = #tpu.pipeline_mode<synchronous>, transform_indices = @transform_3, window_bounds = array<i64: 120, 84>}, {pipeline_mode = #tpu.pipeline_mode<synchronous>, transform_indices = @transform_4, window_bounds = array<i64: 1, 84>}, {pipeline_mode = #tpu.pipeline_mode<synchronous>, transform_indices = @transform_5, window_bounds = array<i64: 84, 10>}, {pipeline_mode = #tpu.pipeline_mode<synchronous>, transform_indices = @transform_6, window_bounds = array<i64: 1, 10>}, {transform_indices = @transform_7, window_bounds = array<i64: 8, 10>}]} {
    %c0 = arith.constant 0 : index
    %c0_0 = arith.constant 0 : index
    %0 = vector.load %arg1[%c0, %c0_0] : memref<8x400xf32, #tpu.memory_space<vmem>>, vector<8x400xf32>
    %c0_1 = arith.constant 0 : index
    %c0_2 = arith.constant 0 : index
    %1 = vector.load %arg2[%c0_1, %c0_2] : memref<400x120xf32, #tpu.memory_space<vmem>>, vector<400x120xf32>
    %cst = arith.constant dense<0.000000e+00> : vector<8x120xf32>
    %2 = tpu.matmul %0, %1, %cst {dimension_numbers = #tpu.dot_dimension_numbers<[1], [0], [0], [1], [0, 0, 1, 1], [], []>} : vector<8x400xf32>, vector<400x120xf32>, vector<8x120xf32> -> vector<8x120xf32>
    %c0_3 = arith.constant 0 : index
    %c0_4 = arith.constant 0 : index
    %3 = vector.load %arg3[%c0_3, %c0_4] : memref<1x120xf32, #tpu.memory_space<vmem>>, vector<1x120xf32>
    %4 = vector.broadcast %3 : vector<1x120xf32> to vector<8x120xf32>
    %5 = arith.addf %2, %4 : vector<8x120xf32>
    %cst_5 = arith.constant 0.000000e+00 : f32
    %6 = vector.broadcast %cst_5 : f32 to vector<8x120xf32>
    %7 = arith.maximumf %5, %6 : vector<8x120xf32>
    %c0_6 = arith.constant 0 : index
    %c0_7 = arith.constant 0 : index
    %8 = vector.load %arg4[%c0_6, %c0_7] : memref<120x84xf32, #tpu.memory_space<vmem>>, vector<120x84xf32>
    %cst_8 = arith.constant dense<0.000000e+00> : vector<8x84xf32>
    %9 = tpu.matmul %7, %8, %cst_8 {dimension_numbers = #tpu.dot_dimension_numbers<[1], [0], [0], [1], [0, 0, 1, 1], [], []>} : vector<8x120xf32>, vector<120x84xf32>, vector<8x84xf32> -> vector<8x84xf32>
    %c0_9 = arith.constant 0 : index
    %c0_10 = arith.constant 0 : index
    %10 = vector.load %arg5[%c0_9, %c0_10] : memref<1x84xf32, #tpu.memory_space<vmem>>, vector<1x84xf32>
    %11 = vector.broadcast %10 : vector<1x84xf32> to vector<8x84xf32>
    %12 = arith.addf %9, %11 : vector<8x84xf32>
    %cst_11 = arith.constant 0.000000e+00 : f32
    %13 = vector.broadcast %cst_11 : f32 to vector<8x84xf32>
    %14 = arith.maximumf %12, %13 : vector<8x84xf32>
    %c0_12 = arith.constant 0 : index
    %c0_13 = arith.constant 0 : index
    %15 = vector.load %arg6[%c0_12, %c0_13] : memref<84x10xf32, #tpu.memory_space<vmem>>, vector<84x10xf32>
    %cst_14 = arith.constant dense<0.000000e+00> : vector<8x10xf32>
    %16 = tpu.matmul %14, %15, %cst_14 {dimension_numbers = #tpu.dot_dimension_numbers<[1], [0], [0], [1], [0, 0, 1, 1], [], []>} : vector<8x84xf32>, vector<84x10xf32>, vector<8x10xf32> -> vector<8x10xf32>
    %c0_15 = arith.constant 0 : index
    %c0_16 = arith.constant 0 : index
    %17 = vector.load %arg7[%c0_15, %c0_16] : memref<1x10xf32, #tpu.memory_space<vmem>>, vector<1x10xf32>
    %18 = vector.broadcast %17 : vector<1x10xf32> to vector<8x10xf32>
    %19 = arith.addf %16, %18 : vector<8x10xf32>
    %c0_17 = arith.constant 0 : index
    %c0_18 = arith.constant 0 : index
    %20 = vector.load %arg8[%c0_17, %c0_18] : memref<8x10xf32, #tpu.memory_space<vmem>>, vector<8x10xf32>
    tpu.vector_store %arg8[%c0_17, %c0_18], %19 {strides = array<i32>} : memref<8x10xf32, #tpu.memory_space<vmem>>, vector<8x10xf32>,
    return
  }
  func.func @transform_0(%arg0: i32) -> (i32, i32) {
    %c0_i32 = arith.constant 0 : i32
    %c0_i32_0 = arith.constant 0 : i32
    return %arg0, %c0_i32 : i32, i32
  }
  func.func @transform_1(%arg0: i32) -> (i32, i32) {
    %c0_i32 = arith.constant 0 : i32
    %c0_i32_0 = arith.constant 0 : i32
    %c0_i32_1 = arith.constant 0 : i32
    return %c0_i32, %c0_i32_0 : i32, i32
  }
  func.func @transform_2(%arg0: i32) -> (i32, i32) {
    %c0_i32 = arith.constant 0 : i32
    %c0_i32_0 = arith.constant 0 : i32
    %c0_i32_1 = arith.constant 0 : i32
    return %c0_i32, %c0_i32_0 : i32, i32
  }
  func.func @transform_3(%arg0: i32) -> (i32, i32) {
    %c0_i32 = arith.constant 0 : i32
    %c0_i32_0 = arith.constant 0 : i32
    %c0_i32_1 = arith.constant 0 : i32
    return %c0_i32, %c0_i32_0 : i32, i32
  }
  func.func @transform_4(%arg0: i32) -> (i32, i32) {
    %c0_i32 = arith.constant 0 : i32
    %c0_i32_0 = arith.constant 0 : i32
    %c0_i32_1 = arith.constant 0 : i32
    return %c0_i32, %c0_i32_0 : i32, i32
  }
  func.func @transform_5(%arg0: i32) -> (i32, i32) {
    %c0_i32 = arith.constant 0 : i32
    %c0_i32_0 = arith.constant 0 : i32
    %c0_i32_1 = arith.constant 0 : i32
    return %c0_i32, %c0_i32_0 : i32, i32
  }
  func.func @transform_6(%arg0: i32) -> (i32, i32) {
    %c0_i32 = arith.constant 0 : i32
    %c0_i32_0 = arith.constant 0 : i32
    %c0_i32_1 = arith.constant 0 : i32
    return %c0_i32, %c0_i32_0 : i32, i32
  }
  func.func @transform_7(%arg0: i32) -> (i32, i32) {
    %c0_i32 = arith.constant 0 : i32
    %c0_i32_0 = arith.constant 0 : i32
    return %arg0, %c0_i32 : i32, i32
  }
}

</mosaic_0001>

<llo_original>
// kernel: lenet5_forward.4
$region0: #{lenet5_forward.4}
  #allocation0 [shape = 'u32[]', space=smem, size = 0x4, offset = 0x4, fixed_abs, tag = 'smem constant byte address 0x4 - core index']
  #allocation1 [shape = 'u32[72,128]{1,0:T(1,128)}', space=vmem, size = 0x9000, scoped, tag = 'internal scratch']
  %s0 = inlined_call_operand.vmem [shape: f32[2,14,8,60], index: 0, kind: input, shape index: {}]
  %s1 = inlined_call_operand.vmem [shape: f32[150,16], index: 1, kind: input, shape index: {}]
  %s2 = inlined_call_operand.vmem [shape: f32[1,16], index: 2, kind: input, shape index: {}]
  %s3 = inlined_call_operand.vmem [shape: f32[2,5,8,16], index: 3, kind: output, shape index: {}]
  %s4 = sld [smem:[#allocation0]]
  $region45: #{lenet5_forward.4} parent=0
    _
  %s6 = ssub.s32 1, %s4
  %s7 = scalar_select 0, %s6, %s4
  loop: start=0, step=1, limit=4
  $region2: #{lenet5_forward.4} parent=0 // loop_pre_header
    _
  $region3: #{lenet5_forward.4} parent=0 // loop_header
    %s9 = sphi 0, %s13
    %p10 = scmp.ge.s32.totalorder %s9, 4
    %s19 = sphi 0, %s21
    %s22 = sphi 0, %s19
    %s23 = sphi 0, %s22
    %s39 = sphi 0, %s23
    %s43 = sphi 0, %s43
    %s45 = sphi 0, %s43
    %s46 = sphi 0, %s45
    %s60 = sphi 0, %s46
    %s64 = sphi 0, %s64
    %s66 = sphi 0, %s64
    %s67 = sphi 0, %s66
    %s81 = sphi 0, %s67
    %s87 = sphi 0, %s89
    %s90 = sphi 0, %s87
    %s91 = sphi 0, %s90
    %s107 = sphi 0, %s91
  $region4: #{lenet5_forward.4} parent=0 // loop_header_branch
    %12 = sbr.rel (%p10) target = $region8
  $region5: #{lenet5_forward.4} parent=0 // loop_body
    %s14 = ssub.s32 %s9, 1
    %s15 = ssub.s32 %s9, 2
    %s16 = sadd.s32 %s9, 1
    %s17 = ssub.s32 %s9, %s16
    %p18 = scmp.eq.s32.totalorder %s17, 0
    %s20 = sadd.s32 %s19, 1
    %s21 = scalar_select %p18, %s19, %s20
    %p24 = pneg %p18
    %p25 = scmp.eq.s32.totalorder %s9, 1
    %p26 = por %p24, %p25
    %p27 = scmp.ne.s32.totalorder %s19, %s22
    %p28 = scmp.eq.s32.totalorder %s9, 0
    %p29 = por %p27, %p28
    %p30 = scmp.ne.s32.totalorder %s19, %s22
    %p31 = scmp.eq.s32.totalorder %s14, 1
    %p32 = por %p30, %p31
    %p33 = scmp.ne.s32.totalorder %s22, %s23
    %p34 = scmp.eq.s32.totalorder %s14, 0
    %p35 = por %p33, %p34
    %p36 = scmp.ne.s32.totalorder %s22, %s23
    %p37 = scmp.eq.s32.totalorder %s15, 1
    %p38 = por %p36, %p37
    %p40 = scmp.ne.s32.totalorder %s23, %s39
    %p41 = scmp.eq.s32.totalorder %s15, 0
    %p42 = por %p40, %p41
    %s44 = sadd.s32 %s43, 1
    %p47 = scmp.eq.s32.totalorder %s9, 1
    %p48 = scmp.ne.s32.totalorder %s43, %s45
    %p49 = scmp.eq.s32.totalorder %s9, 0
    %p50 = por %p48, %p49
    %p51 = scmp.ne.s32.totalorder %s43, %s45
    %p52 = scmp.eq.s32.totalorder %s14, 1
    %p53 = por %p51, %p52
    %p54 = scmp.ne.s32.totalorder %s45, %s46
    %p55 = scmp.eq.s32.totalorder %s14, 0
    %p56 = por %p54, %p55
    %p57 = scmp.ne.s32.totalorder %s45, %s46
    %p58 = scmp.eq.s32.totalorder %s15, 1
    %p59 = por %p57, %p58
    %p61 = scmp.ne.s32.totalorder %s46, %s60
    %p62 = scmp.eq.s32.totalorder %s15, 0
    %p63 = por %p61, %p62
    %s65 = sadd.s32 %s64, 1
    %p68 = scmp.eq.s32.totalorder %s9, 1
    %p69 = scmp.ne.s32.totalorder %s64, %s66
    %p70 = scmp.eq.s32.totalorder %s9, 0
    %p71 = por %p69, %p70
    %p72 = scmp.ne.s32.totalorder %s64, %s66
    %p73 = scmp.eq.s32.totalorder %s14, 1
    %p74 = por %p72, %p73
    %p75 = scmp.ne.s32.totalorder %s66, %s67
    %p76 = scmp.eq.s32.totalorder %s14, 0
    %p77 = por %p75, %p76
    %p78 = scmp.ne.s32.totalorder %s66, %s67
    %p79 = scmp.eq.s32.totalorder %s15, 1
    %p80 = por %p78, %p79
    %p82 = scmp.ne.s32.totalorder %s67, %s81
    %p83 = scmp.eq.s32.totalorder %s15, 0
    %p84 = por %p82, %p83
    %s85 = ssub.s32 %s9, %s16
    %p86 = scmp.eq.s32.totalorder %s85, 0
    %s88 = sadd.s32 %s87, 1
    %s89 = scalar_select %p86, %s87, %s88
    %p92 = pneg %p86
    %p93 = scmp.eq.s32.totalorder %s9, 1
    %p94 = por %p92, %p93
    %p95 = scmp.ne.s32.totalorder %s87, %s90
    %p96 = scmp.eq.s32.totalorder %s9, 0
    %p97 = por %p95, %p96
    %p98 = scmp.ne.s32.totalorder %s87, %s90
    %p99 = scmp.eq.s32.totalorder %s14, 1
    %p100 = por %p98, %p99
    %p101 = scmp.ne.s32.totalorder %s90, %s91
    %p102 = scmp.eq.s32.totalorder %s14, 0
    %p103 = por %p101, %p102
    %p104 = scmp.ne.s32.totalorder %s90, %s91
    %p105 = scmp.eq.s32.totalorder %s15, 1
    %p106 = por %p104, %p105
    %p108 = scmp.ne.s32.totalorder %s91, %s107
    %p109 = scmp.eq.s32.totalorder %s15, 0
    %p110 = por %p108, %p109
    %p111 = scmp.le.s32.totalorder 1, %s9
    %p112 = scmp.lt.s32.totalorder %s9, 3
    %p113 = pnand %p111, %p112
    %p114 = pneg %p113
    // Predicated region
    $region9: #{lenet5_forward.4} parent=5 // pred_check
      _
    $region10: #{lenet5_forward.4} parent=5 // pred_check_branch
      %116 = sbr.rel (%p113) target = $region12
    $region11: #{lenet5_forward.4} parent=5 // pred_region
      %s117 = ssub.s32 %s9, 1
      // Predicated region
      $region13: #{lenet5_forward.4} parent=11 // pred_check
        %p118 = pneg %p56
      $region14: #{lenet5_forward.4} parent=11 // pred_check_branch
        %120 = sbr.rel (%p118) target = $region16
      $region15: #{lenet5_forward.4} parent=11 // pred_region
        _
      $region16: #{lenet5_forward.4} parent=11 // pred_fallthru
        _
      // Predicated region
      $region17: #{lenet5_forward.4} parent=11 // pred_check
        %p121 = pneg %p77
      $region18: #{lenet5_forward.4} parent=11 // pred_check_branch
        %123 = sbr.rel (%p121) target = $region20
      $region19: #{lenet5_forward.4} parent=11 // pred_region
        _
      $region20: #{lenet5_forward.4} parent=11 // pred_fallthru
        _
    $region12: #{lenet5_forward.4} parent=5 // pred_fallthru
      _
    %p124 = scmp.lt.s32.totalorder %s9, 2
    // Predicated region
    $region21: #{lenet5_forward.4} parent=5 // pred_check
      %p125 = pneg %p124
    $region22: #{lenet5_forward.4} parent=5 // pred_check_branch
      %127 = sbr.rel (%p125) target = $region24
    $region23: #{lenet5_forward.4} parent=5 // pred_region
      // Predicated region
      $region25: #{lenet5_forward.4} parent=23 // pred_check
        %p128 = pneg %p29
      $region26: #{lenet5_forward.4} parent=23 // pred_check_branch
        %130 = sbr.rel (%p128) target = $region28
      $region27: #{lenet5_forward.4} parent=23 // pred_region
        %p131 = scmp.lt.s32.totalorder %s9, 1
        %s132 = scalar_select %p131, %s9, 1
        %s133 = smul.addr %s132, 14
        %s134 = smul.addr %s133, 8
        %s135 = scalar_lea.vmem %s0, %s134
      $region28: #{lenet5_forward.4} parent=23 // pred_fallthru
        _
    $region24: #{lenet5_forward.4} parent=5 // pred_fallthru
      _
    %p136 = scmp.le.s32.totalorder 1, %s9
    %p137 = scmp.lt.s32.totalorder %s9, 3
    %p138 = pnand %p136, %p137
    %p139 = pneg %p138
    // Predicated region
    $region29: #{lenet5_forward.4} parent=5 // pred_check
      _
    $region30: #{lenet5_forward.4} parent=5 // pred_check_branch
      %141 = sbr.rel (%p138) target = $region32
    $region31: #{lenet5_forward.4} parent=5 // pred_region
      %s142 = ssub.s32 %s9, 1
      %p143 = scmp.lt.s32.totalorder %s14, 1
      %s144 = scalar_select %p143, %s14, 1
      %s145 = smul.addr %s144, 14
      %s146 = smul.addr %s145, 8
      %s147 = scalar_lea.vmem %s0, %s146
      %p148 = pneg %p35
      %p149 = pneg %p32
      %p150 = pneg %p56
      %p151 = pneg %p53
      %p152 = pneg %p77
      %p153 = pneg %p74
      %p154 = pneg %p103
      %p155 = pneg %p100
      %p156 = scmp.lt.s32.totalorder %s14, 1
      %s157 = scalar_select %p156, %s14, 1
      %s158 = smul.addr %s157, 5
      %s159 = smul.addr %s158, 8
      %s160 = scalar_lea.vmem %s3, %s159
      %p161 = scmp.lt.s32.totalorder %s14, 1
      %s162 = scalar_select %p161, %s14, 1
      %s163 = smul.addr %s162, 14
      %s164 = smul.addr %s163, 8
      %s165 = scalar_lea.vmem %s0, %s164
      %p166 = scmp.lt.s32.totalorder %s14, 1
      %s167 = scalar_select %p166, %s14, 1
      %s168 = smul.addr %s167, 5
      %s169 = smul.addr %s168, 8
      %s170 = scalar_lea.vmem %s3, %s169
      %v171 = vld [vmem:[%s165] sm:$0xff]
      %v172 = vld [vmem:[%s165 + $0x8] sm:$0xff]
      %v173 = vld [vmem:[%s165 + $0x10] sm:$0xff]
      %v174 = vld [vmem:[%s165 + $0x18] sm:$0xff]
      %v175 = vld [vmem:[%s165 + $0x20] sm:$0xff]
      %v176 = vld [vmem:[%s165 + $0x28] sm:$0xff]
      %v177 = vld [vmem:[%s165 + $0x30] sm:$0xff]
      %v178 = vld [vmem:[%s165 + $0x38] sm:$0xff]
      %v179 = vld [vmem:[%s165 + $0x40] sm:$0xff]
      %v180 = vld [vmem:[%s165 + $0x48] sm:$0xff]
      %v181 = vld [vmem:[%s165 + $0x50] sm:$0xff]
      %v182 = vld [vmem:[%s165 + $0x58] sm:$0xff]
      %v183 = vld [vmem:[%s165 + $0x60] sm:$0xff]
      %v184 = vld [vmem:[%s165 + $0x68] sm:$0xff]
      %190 = vrot.lane.b32.xlu0 %v172, 30
      %v191 = vpop.permute.xlu0 %190
      %192 = vrot.lane.b32.xlu0 %v174, 30
      %v193 = vpop.permute.xlu0 %192
      %194 = vrot.lane.b32.xlu0 %v176, 30
      %v195 = vpop.permute.xlu0 %194
      %196 = vrot.lane.b32.xlu0 %v178, 30
      %v197 = vpop.permute.xlu0 %196
      %198 = vrot.lane.b32.xlu0 %v180, 30
      %v199 = vpop.permute.xlu0 %198
      %210 = vrot.lane.b32.xlu0 %v173, 60
      %v211 = vpop.permute.xlu0 %210
      %212 = vrot.lane.b32.xlu0 %v175, 60
      %v213 = vpop.permute.xlu0 %212
      %214 = vrot.lane.b32.xlu0 %v177, 60
      %v215 = vpop.permute.xlu0 %214
      %216 = vrot.lane.b32.xlu0 %v179, 60
      %v217 = vpop.permute.xlu0 %216
      %218 = vrot.lane.b32.xlu0 %v181, 60
      %v219 = vpop.permute.xlu0 %218
      %226 = vrot.lane.b32.xlu0 %v174, 90
      %v227 = vpop.permute.xlu0 %226
      %228 = vrot.lane.b32.xlu0 %v176, 90
      %v229 = vpop.permute.xlu0 %228
      %230 = vrot.lane.b32.xlu0 %v178, 90
      %v231 = vpop.permute.xlu0 %230
      %232 = vrot.lane.b32.xlu0 %v180, 90
      %v233 = vpop.permute.xlu0 %232
      %234 = vrot.lane.b32.xlu0 %v182, 90
      %v235 = vpop.permute.xlu0 %234
      %242 = vrot.lane.b32.xlu0 %v175, 120
      %v243 = vpop.permute.xlu0 %242
      %244 = vrot.lane.b32.xlu0 %v177, 120
      %v245 = vpop.permute.xlu0 %244
      %246 = vrot.lane.b32.xlu0 %v179, 120
      %v247 = vpop.permute.xlu0 %246
      %248 = vrot.lane.b32.xlu0 %v181, 120
      %v249 = vpop.permute.xlu0 %248
      %250 = vrot.lane.b32.xlu0 %v183, 120
      %v251 = vpop.permute.xlu0 %250
      %vm257 = vcmask 244736
      %v258 = vsel %vm257, %v171, %v191
      %v259 = vsel %vm257, %v173, %v193
      %v260 = vsel %vm257, %v175, %v195
      %v261 = vsel %vm257, %v177, %v197
      %v262 = vsel %vm257, %v179, %v199
      %vm263 = vcmask 490496
      %v264 = vsel %vm263, %v258, %v211
      %v265 = vsel %vm263, %v259, %v213
      %v266 = vsel %vm263, %v260, %v215
      %v267 = vsel %vm263, %v261, %v217
      %v268 = vsel %vm263, %v262, %v219
      %vm269 = vcmask 736256
      %v270 = vsel %vm269, %v264, %v227
      %v271 = vsel %vm269, %v265, %v229
      %v272 = vsel %vm269, %v266, %v231
      %v273 = vsel %vm269, %v267, %v233
      %v274 = vsel %vm269, %v268, %v235
      %vm275 = vcmask 982016
      %v276 = vsel %vm275, %v270, %v243
      %v277 = vsel %vm275, %v271, %v245
      %v278 = vsel %vm275, %v272, %v247
      %v279 = vsel %vm275, %v273, %v249
      %v280 = vsel %vm275, %v274, %v251
      %282 = vrot.lane.b32.xlu0 %v171, 98
      %v283 = vpop.permute.xlu0 %282
      %284 = vrot.lane.b32.xlu0 %v173, 98
      %v285 = vpop.permute.xlu0 %284
      %286 = vrot.lane.b32.xlu0 %v175, 98
      %v287 = vpop.permute.xlu0 %286
      %288 = vrot.lane.b32.xlu0 %v177, 98
      %v289 = vpop.permute.xlu0 %288
      %290 = vrot.lane.b32.xlu0 %v179, 98
      %v291 = vpop.permute.xlu0 %290
      %297 = vrot.lane.b32.xlu0 %v173, 30
      %v298 = vpop.permute.xlu0 %297
      %299 = vrot.lane.b32.xlu0 %v175, 30
      %v300 = vpop.permute.xlu0 %299
      %301 = vrot.lane.b32.xlu0 %v177, 30
      %v302 = vpop.permute.xlu0 %301
      %303 = vrot.lane.b32.xlu0 %v179, 30
      %v304 = vpop.permute.xlu0 %303
      %305 = vrot.lane.b32.xlu0 %v181, 30
      %v306 = vpop.permute.xlu0 %305
      %312 = vrot.lane.b32.xlu0 %v174, 60
      %v313 = vpop.permute.xlu0 %312
      %314 = vrot.lane.b32.xlu0 %v176, 60
      %v315 = vpop.permute.xlu0 %314
      %316 = vrot.lane.b32.xlu0 %v178, 60
      %v317 = vpop.permute.xlu0 %316
      %318 = vrot.lane.b32.xlu0 %v180, 60
      %v319 = vpop.permute.xlu0 %318
      %320 = vrot.lane.b32.xlu0 %v182, 60
      %v321 = vpop.permute.xlu0 %320
      %327 = vrot.lane.b32.xlu0 %v175, 90
      %v328 = vpop.permute.xlu0 %327
      %329 = vrot.lane.b32.xlu0 %v177, 90
      %v330 = vpop.permute.xlu0 %329
      %331 = vrot.lane.b32.xlu0 %v179, 90
      %v332 = vpop.permute.xlu0 %331
      %333 = vrot.lane.b32.xlu0 %v181, 90
      %v334 = vpop.permute.xlu0 %333
      %335 = vrot.lane.b32.xlu0 %v183, 90
      %v336 = vpop.permute.xlu0 %335
      %v342 = vsel %vm257, %v283, %v172
      %v343 = vsel %vm257, %v285, %v174
      %v344 = vsel %vm257, %v287, %v176
      %v345 = vsel %vm257, %v289, %v178
      %v346 = vsel %vm257, %v291, %v180
      %v347 = vsel %vm263, %v342, %v298
      %v348 = vsel %vm263, %v343, %v300
      %v349 = vsel %vm263, %v344, %v302
      %v350 = vsel %vm263, %v345, %v304
      %v351 = vsel %vm263, %v346, %v306
      %v352 = vsel %vm269, %v347, %v313
      %v353 = vsel %vm269, %v348, %v315
      %v354 = vsel %vm269, %v349, %v317
      %v355 = vsel %vm269, %v350, %v319
      %v356 = vsel %vm269, %v351, %v321
      %v357 = vsel %vm275, %v352, %v328
      %v358 = vsel %vm275, %v353, %v330
      %v359 = vsel %vm275, %v354, %v332
      %v360 = vsel %vm275, %v355, %v334
      %v361 = vsel %vm275, %v356, %v336
      %363 = vrot.lane.b32.xlu0 %v176, 120
      %v364 = vpop.permute.xlu0 %363
      %365 = vrot.lane.b32.xlu0 %v178, 120
      %v366 = vpop.permute.xlu0 %365
      %367 = vrot.lane.b32.xlu0 %v180, 120
      %v368 = vpop.permute.xlu0 %367
      %369 = vrot.lane.b32.xlu0 %v182, 120
      %v370 = vpop.permute.xlu0 %369
      %371 = vrot.lane.b32.xlu0 %v184, 120
      %v372 = vpop.permute.xlu0 %371
      %v378 = vsel %vm257, %v172, %v298
      %v379 = vsel %vm257, %v174, %v300
      %v380 = vsel %vm257, %v176, %v302
      %v381 = vsel %vm257, %v178, %v304
      %v382 = vsel %vm257, %v180, %v306
      %v383 = vsel %vm263, %v378, %v313
      %v384 = vsel %vm263, %v379, %v315
      %v385 = vsel %vm263, %v380, %v317
      %v386 = vsel %vm263, %v381, %v319
      %v387 = vsel %vm263, %v382, %v321
      %v388 = vsel %vm269, %v383, %v328
      %v389 = vsel %vm269, %v384, %v330
      %v390 = vsel %vm269, %v385, %v332
      %v391 = vsel %vm269, %v386, %v334
      %v392 = vsel %vm269, %v387, %v336
      %v393 = vsel %vm275, %v388, %v364
      %v394 = vsel %vm275, %v389, %v366
      %v395 = vsel %vm275, %v390, %v368
      %v396 = vsel %vm275, %v391, %v370
      %v397 = vsel %vm275, %v392, %v372
      %398 = vrot.lane.b32.xlu0 %v172, 98
      %v399 = vpop.permute.xlu0 %398
      %400 = vrot.lane.b32.xlu0 %v174, 98
      %v401 = vpop.permute.xlu0 %400
      %402 = vrot.lane.b32.xlu0 %v176, 98
      %v403 = vpop.permute.xlu0 %402
      %404 = vrot.lane.b32.xlu0 %v178, 98
      %v405 = vpop.permute.xlu0 %404
      %406 = vrot.lane.b32.xlu0 %v180, 98
      %v407 = vpop.permute.xlu0 %406
      %413 = vrot.lane.b32.xlu0 %v182, 30
      %v414 = vpop.permute.xlu0 %413
      %416 = vrot.lane.b32.xlu0 %v183, 60
      %v417 = vpop.permute.xlu0 %416
      %419 = vrot.lane.b32.xlu0 %v184, 90
      %v420 = vpop.permute.xlu0 %419
      %v422 = vsel %vm257, %v399, %v173
      %v423 = vsel %vm257, %v401, %v175
      %v424 = vsel %vm257, %v403, %v177
      %v425 = vsel %vm257, %v405, %v179
      %v426 = vsel %vm257, %v407, %v181
      %v427 = vsel %vm263, %v422, %v193
      %v428 = vsel %vm263, %v423, %v195
      %v429 = vsel %vm263, %v424, %v197
      %v430 = vsel %vm263, %v425, %v199
      %v431 = vsel %vm263, %v426, %v414
      %v432 = vsel %vm269, %v427, %v213
      %v433 = vsel %vm269, %v428, %v215
      %v434 = vsel %vm269, %v429, %v217
      %v435 = vsel %vm269, %v430, %v219
      %v436 = vsel %vm269, %v431, %v417
      %v437 = vsel %vm275, %v432, %v229
      %v438 = vsel %vm275, %v433, %v231
      %v439 = vsel %vm275, %v434, %v233
      %v440 = vsel %vm275, %v435, %v235
      %v441 = vsel %vm275, %v436, %v420
      %v442 = vld [vmem:[%s1] sm:$0xff]
      %v443 = vld [vmem:[%s1 + $0x8] sm:$0xff]
      %v444 = vld [vmem:[%s1 + $0x10] sm:$0xff]
      %v445 = vld [vmem:[%s1 + $0x18] sm:$0xff]
      %v446 = vld [vmem:[%s1 + $0x20] sm:$0xff]
      %v447 = vld [vmem:[%s1 + $0x28] sm:$0xff]
      %v448 = vld [vmem:[%s1 + $0x30] sm:$0xff]
      %v449 = vld [vmem:[%s1 + $0x38] sm:$0xff]
      %v450 = vld [vmem:[%s1 + $0x40] sm:$0xff]
      %v451 = vld [vmem:[%s1 + $0x48] sm:$0xff]
      %v452 = vld [vmem:[%s1 + $0x50] sm:$0xff]
      %v453 = vld [vmem:[%s1 + $0x58] sm:$0xff]
      %v454 = vld [vmem:[%s1 + $0x60] sm:$0xff]
      %v455 = vld [vmem:[%s1 + $0x68] sm:$0xff]
      %v456 = vld [vmem:[%s1 + $0x70] sm:$0xff]
      %v457 = vld [vmem:[%s1 + $0x78] sm:$0xff]
      %v458 = vld [vmem:[%s1 + $0x80] sm:$0xff]
      %v459 = vld [vmem:[%s1 + $0x88] sm:$0xff]
      %v460 = vld [vmem:[%s1 + $0x90] sm:$0x3f]
      %vm461 = vcmask 179200
      %v462 = vsel %vm461, %v243, 0
      %v464 = vsel %vm461, %v245, 0
      %v466 = vsel %vm461, %v247, 0
      %v468 = vsel %vm461, %v249, 0
      %v470 = vsel %vm461, %v251, 0
      %v472 = vsel %vm461, %v328, 0
      %v474 = vsel %vm461, %v330, 0
      %v476 = vsel %vm461, %v332, 0
      %v478 = vsel %vm461, %v334, 0
      %v480 = vsel %vm461, %v336, 0
      %v482 = vsel %vm461, %v364, 0
      %v484 = vsel %vm461, %v366, 0
      %v486 = vsel %vm461, %v368, 0
      %v488 = vsel %vm461, %v370, 0
      %v490 = vsel %vm461, %v372, 0
      %v492 = vsel %vm461, %v229, 0
      %v494 = vsel %vm461, %v231, 0
      %v496 = vsel %vm461, %v233, 0
      %v498 = vsel %vm461, %v235, 0
      %v500 = vsel %vm461, %v420, 0
      %vm502 = vcmask 1045504
      %v504 = vsel %vm502, %v460, 0
      %506 = vmatpush.msra.mxu0 %v457
      %507 = vmatpush.msra.mxu0 %v456
      %508 = vmatpush.msra.mxu0 %v455
      %509 = vmatpush.msra.mxu0 %v454
      %510 = vmatpush.msra.mxu0 %v453
      %511 = vmatpush.msra.mxu0 %v452
      %512 = vmatpush.msra.mxu0 %v451
      %513 = vmatpush.msra.mxu0 %v450
      %514 = vmatpush.msra.mxu0 %v449
      %515 = vmatpush.msra.mxu0 %v448
      %516 = vmatpush.msra.mxu0 %v447
      %517 = vmatpush.msra.mxu0 %v446
      %518 = vmatpush.msra.mxu0 %v445
      %519 = vmatpush.msra.mxu0 %v444
      %520 = vmatpush.msra.mxu0 %v443
      %521 = vmatpush.msra.mxu0 %v442
      %522 = vmatmul.f32.gmra.mxu0 %v276
      %v523 = vpop.f32.mrf.mxu0
      %v524 = vadd.f32 0.0, %v523
      %525 = vmatmul.f32.gmra.mxu0 %v277
      %v526 = vpop.f32.mrf.mxu0
      %v527 = vadd.f32 0.0, %v526
      %528 = vmatmul.f32.gmra.mxu0 %v278
      %v529 = vpop.f32.mrf.mxu0
      %v530 = vadd.f32 0.0, %v529
      %531 = vmatmul.f32.gmra.mxu0 %v279
      %v532 = vpop.f32.mrf.mxu0
      %v533 = vadd.f32 0.0, %v532
      %534 = vmatmul.f32.gmra.mxu0 %v280
      %v535 = vpop.f32.mrf.mxu0
      %v536 = vadd.f32 0.0, %v535
      %537 = vmatmul.f32.gmra.mxu0 %v357
      %v538 = vpop.f32.mrf.mxu0
      %v539 = vadd.f32 0.0, %v538
      %540 = vmatmul.f32.gmra.mxu0 %v358
      %v541 = vpop.f32.mrf.mxu0
      %v542 = vadd.f32 0.0, %v541
      %543 = vmatmul.f32.gmra.mxu0 %v359
      %v544 = vpop.f32.mrf.mxu0
      %v545 = vadd.f32 0.0, %v544
      %546 = vmatmul.f32.gmra.mxu0 %v360
      %v547 = vpop.f32.mrf.mxu0
      %v548 = vadd.f32 0.0, %v547
      %549 = vmatmul.f32.gmra.mxu0 %v361
      %v550 = vpop.f32.mrf.mxu0
      %v551 = vadd.f32 0.0, %v550
      %552 = vmatmul.f32.gmra.mxu0 %v393
      %v553 = vpop.f32.mrf.mxu0
      %v554 = vadd.f32 0.0, %v553
      %555 = vmatmul.f32.gmra.mxu0 %v394
      %v556 = vpop.f32.mrf.mxu0
      %v557 = vadd.f32 0.0, %v556
      %558 = vmatmul.f32.gmra.mxu0 %v395
      %v559 = vpop.f32.mrf.mxu0
      %v560 = vadd.f32 0.0, %v559
      %561 = vmatmul.f32.gmra.mxu0 %v396
      %v562 = vpop.f32.mrf.mxu0
      %v563 = vadd.f32 0.0, %v562
      %564 = vmatmul.f32.gmra.mxu0 %v397
      %v565 = vpop.f32.mrf.mxu0
      %v566 = vadd.f32 0.0, %v565
      %567 = vmatmul.f32.gmra.mxu0 %v437
      %v568 = vpop.f32.mrf.mxu0
      %v569 = vadd.f32 0.0, %v568
      %570 = vmatmul.f32.gmra.mxu0 %v438
      %v571 = vpop.f32.mrf.mxu0
      %v572 = vadd.f32 0.0, %v571
      %573 = vmatmul.f32.gmra.mxu0 %v439
      %v574 = vpop.f32.mrf.mxu0
      %v575 = vadd.f32 0.0, %v574
      %576 = vmatmul.f32.gmra.mxu0 %v440
      %v577 = vpop.f32.mrf.mxu0
      %v578 = vadd.f32 0.0, %v577
      %579 = vmatmul.f32.gmra.mxu0 %v441
      %v580 = vpop.f32.mrf.mxu0
      %v581 = vadd.f32 0.0, %v580
      %582 = vdwg.mxu0
      %583 = vmatpush.msra.mxu0 0.0
      %584 = vmatpush.msra.mxu0 0.0
      %585 = vmatpush.msra.mxu0 0.0
      %586 = vmatpush.msra.mxu0 0.0
      %587 = vmatpush.msra.mxu0 0.0
      %588 = vmatpush.msra.mxu0 0.0
      %589 = vmatpush.msra.mxu0 0.0
      %590 = vmatpush.msra.mxu0 0.0
      %591 = vmatpush.msra.mxu0 0.0
      %592 = vmatpush.msra.mxu0 0.0
      %593 = vmatpush.msra.mxu0 0.0
      %594 = vmatpush.msra.mxu0 0.0
      %595 = vmatpush.msra.mxu0 0.0
      %596 = vmatpush.msra.mxu0 %v504
      %597 = vmatpush.msra.mxu0 %v459
      %598 = vmatpush.msra.mxu0 %v458
      %599 = vmatmul.f32.gmra.mxu0 %v462
      %v600 = vpop.f32.mrf.mxu0
      %v601 = vadd.f32 %v524, %v600
      %602 = vmatmul.f32.gmra.mxu0 %v464
      %v603 = vpop.f32.mrf.mxu0
      %v604 = vadd.f32 %v527, %v603
      %605 = vmatmul.f32.gmra.mxu0 %v466
      %v606 = vpop.f32.mrf.mxu0
      %v607 = vadd.f32 %v530, %v606
      %608 = vmatmul.f32.gmra.mxu0 %v468
      %v609 = vpop.f32.mrf.mxu0
      %v610 = vadd.f32 %v533, %v609
      %611 = vmatmul.f32.gmra.mxu0 %v470
      %v612 = vpop.f32.mrf.mxu0
      %v613 = vadd.f32 %v536, %v612
      %614 = vmatmul.f32.gmra.mxu0 %v472
      %v615 = vpop.f32.mrf.mxu0
      %v616 = vadd.f32 %v539, %v615
      %617 = vmatmul.f32.gmra.mxu0 %v474
      %v618 = vpop.f32.mrf.mxu0
      %v619 = vadd.f32 %v542, %v618
      %620 = vmatmul.f32.gmra.mxu0 %v476
      %v621 = vpop.f32.mrf.mxu0
      %v622 = vadd.f32 %v545, %v621
      %623 = vmatmul.f32.gmra.mxu0 %v478
      %v624 = vpop.f32.mrf.mxu0
      %v625 = vadd.f32 %v548, %v624
      %626 = vmatmul.f32.gmra.mxu0 %v480
      %v627 = vpop.f32.mrf.mxu0
      %v628 = vadd.f32 %v551, %v627
      %629 = vmatmul.f32.gmra.mxu0 %v482
      %v630 = vpop.f32.mrf.mxu0
      %v631 = vadd.f32 %v554, %v630
      %632 = vmatmul.f32.gmra.mxu0 %v484
      %v633 = vpop.f32.mrf.mxu0
      %v634 = vadd.f32 %v557, %v633
      %635 = vmatmul.f32.gmra.mxu0 %v486
      %v636 = vpop.f32.mrf.mxu0
      %v637 = vadd.f32 %v560, %v636
      %638 = vmatmul.f32.gmra.mxu0 %v488
      %v639 = vpop.f32.mrf.mxu0
      %v640 = vadd.f32 %v563, %v639
      %641 = vmatmul.f32.gmra.mxu0 %v490
      %v642 = vpop.f32.mrf.mxu0
      %v643 = vadd.f32 %v566, %v642
      %644 = vmatmul.f32.gmra.mxu0 %v492
      %v645 = vpop.f32.mrf.mxu0
      %v646 = vadd.f32 %v569, %v645
      %647 = vmatmul.f32.gmra.mxu0 %v494
      %v648 = vpop.f32.mrf.mxu0
      %v649 = vadd.f32 %v572, %v648
      %650 = vmatmul.f32.gmra.mxu0 %v496
      %v651 = vpop.f32.mrf.mxu0
      %v652 = vadd.f32 %v575, %v651
      %653 = vmatmul.f32.gmra.mxu0 %v498
      %v654 = vpop.f32.mrf.mxu0
      %v655 = vadd.f32 %v578, %v654
      %656 = vmatmul.f32.gmra.mxu0 %v500
      %v657 = vpop.f32.mrf.mxu0
      %v658 = vadd.f32 %v581, %v657
      %659 = vdwg.mxu0
      %vm660 = vcmask 130048
      %v661 = vsel %vm660, %v601, -inf
      %v662 = vsel %vm660, %v616, -inf
      %v663 = vmax.f32 %v661, %v662
      %v664 = vsel %vm660, %v631, -inf
      %v665 = vmax.f32 %v663, %v664
      %v666 = vsel %vm660, %v646, -inf
      %v667 = vmax.f32 %v665, %v666
      %v668 = vsel %vm660, %v604, -inf
      %v669 = vsel %vm660, %v619, -inf
      %v670 = vmax.f32 %v668, %v669
      %v671 = vsel %vm660, %v634, -inf
      %v672 = vmax.f32 %v670, %v671
      %v673 = vsel %vm660, %v649, -inf
      %v674 = vmax.f32 %v672, %v673
      %v675 = vsel %vm660, %v607, -inf
      %v676 = vsel %vm660, %v622, -inf
      %v677 = vmax.f32 %v675, %v676
      %v678 = vsel %vm660, %v637, -inf
      %v679 = vmax.f32 %v677, %v678
      %v680 = vsel %vm660, %v652, -inf
      %v681 = vmax.f32 %v679, %v680
      %v682 = vsel %vm660, %v610, -inf
      %v683 = vsel %vm660, %v625, -inf
      %v684 = vmax.f32 %v682, %v683
      %v685 = vsel %vm660, %v640, -inf
      %v686 = vmax.f32 %v684, %v685
      %v687 = vsel %vm660, %v655, -inf
      %v688 = vmax.f32 %v686, %v687
      %v689 = vsel %vm660, %v613, -inf
      %v690 = vsel %vm660, %v628, -inf
      %v691 = vmax.f32 %v689, %v690
      %v692 = vsel %vm660, %v643, -inf
      %v693 = vmax.f32 %v691, %v692
      %v694 = vsel %vm660, %v658, -inf
      %v695 = vmax.f32 %v693, %v694
      %v696 = vld [vmem:[%s2] sm:$0x1]
      %v698 = vperm.slane %v696, 0
      %v700 = vadd.f32 %v667, %v698
      %v701 = vadd.f32 %v674, %v698
      %v702 = vadd.f32 %v681, %v698
      %v703 = vadd.f32 %v688, %v698
      %v704 = vadd.f32 %v695, %v698
      %v705 = vmax.f32 %v700, 0.0
      %v706 = vmax.f32 %v701, 0.0
      %v707 = vmax.f32 %v702, 0.0
      %v708 = vmax.f32 %v703, 0.0
      %v709 = vmax.f32 %v704, 0.0
      %710 = vst.msk [vmem:[%s170] sm:$0xff] %vm660, %v705
      %711 = vst.msk [vmem:[%s170 + $0x8] sm:$0xff] %vm660, %v706
      %712 = vst.msk [vmem:[%s170 + $0x10] sm:$0xff] %vm660, %v707
      %713 = vst.msk [vmem:[%s170 + $0x18] sm:$0xff] %vm660, %v708
      %714 = vst.msk [vmem:[%s170 + $0x20] sm:$0xff] %vm660, %v709
      %p715 = scmp.lt.s32.totalorder %s14, 1
      %s716 = scalar_select %p715, %s14, 1
      %s717 = smul.addr %s716, 5
      %s718 = smul.addr %s717, 8
      %s719 = scalar_lea.vmem %s3, %s718
      // Predicated region
      $region33: #{lenet5_forward.4} parent=31 // pred_check
        %p720 = pneg %p100
      $region34: #{lenet5_forward.4} parent=31 // pred_check_branch
        %722 = sbr.rel (%p720) target = $region36
      $region35: #{lenet5_forward.4} parent=31 // pred_region
        _
      $region36: #{lenet5_forward.4} parent=31 // pred_fallthru
        _
    $region32: #{lenet5_forward.4} parent=5 // pred_fallthru
      _
    %p723 = scmp.le.s32.totalorder 2, %s9
    // Predicated region
    $region37: #{lenet5_forward.4} parent=5 // pred_check
      %p724 = pneg %p723
    $region38: #{lenet5_forward.4} parent=5 // pred_check_branch
      %726 = sbr.rel (%p724) target = $region40
    $region39: #{lenet5_forward.4} parent=5 // pred_region
      %s727 = ssub.s32 %s9, 2
      // Predicated region
      $region41: #{lenet5_forward.4} parent=39 // pred_check
        %p728 = pneg %p106
      $region42: #{lenet5_forward.4} parent=39 // pred_check_branch
        %730 = sbr.rel (%p728) target = $region44
      $region43: #{lenet5_forward.4} parent=39 // pred_region
        %p731 = scmp.lt.s32.totalorder %s15, 1
        %s732 = scalar_select %p731, %s15, 1
        %s733 = smul.addr %s732, 5
        %s734 = smul.addr %s733, 8
        %s735 = scalar_lea.vmem %s3, %s734
      $region44: #{lenet5_forward.4} parent=39 // pred_fallthru
        _
    $region40: #{lenet5_forward.4} parent=5 // pred_fallthru
      _
  $region6: #{lenet5_forward.4} parent=0 // loop_footer
    %s13 = sadd.s32 1, %s9
  $region7: #{lenet5_forward.4} parent=0 // loop_footer_branch
    %8 = sbr.rel target = $region3
  $region8: #{lenet5_forward.4} parent=0 // loop_exit
    _

// kernel: lenet5_forward.3
$region0: #{lenet5_forward.3}
  #allocation0 [shape = 'u32[]', space=smem, size = 0x4, offset = 0x4, fixed_abs, tag = 'smem constant byte address 0x4 - core index']
  #allocation1 [shape = 'u32[72,128]{1,0:T(1,128)}', space=vmem, size = 0x9000, scoped, tag = 'internal scratch']
  %s0 = inlined_call_operand.vmem [shape: f32[2,32,16,10], index: 0, kind: input, shape index: {}]
  %s1 = inlined_call_operand.vmem [shape: f32[25,6], index: 1, kind: input, shape index: {}]
  %s2 = inlined_call_operand.vmem [shape: f32[1,6], index: 2, kind: input, shape index: {}]
  %s3 = inlined_call_operand.vmem [shape: f32[2,14,16,6], index: 3, kind: output, shape index: {}]
  %s4 = sld [smem:[#allocation0]]
  $region45: #{lenet5_forward.3} parent=0
    _
  %s6 = ssub.s32 1, %s4
  %s7 = scalar_select 0, %s6, %s4
  loop: start=0, step=1, limit=4
  $region2: #{lenet5_forward.3} parent=0 // loop_pre_header
    _
  $region3: #{lenet5_forward.3} parent=0 // loop_header
    %s9 = sphi 0, %s13
    %p10 = scmp.ge.s32.totalorder %s9, 4
    %s19 = sphi 0, %s21
    %s22 = sphi 0, %s19
    %s23 = sphi 0, %s22
    %s39 = sphi 0, %s23
    %s43 = sphi 0, %s43
    %s45 = sphi 0, %s43
    %s46 = sphi 0, %s45
    %s60 = sphi 0, %s46
    %s64 = sphi 0, %s64
    %s66 = sphi 0, %s64
    %s67 = sphi 0, %s66
    %s81 = sphi 0, %s67
    %s87 = sphi 0, %s89
    %s90 = sphi 0, %s87
    %s91 = sphi 0, %s90
    %s107 = sphi 0, %s91
  $region4: #{lenet5_forward.3} parent=0 // loop_header_branch
    %12 = sbr.rel (%p10) target = $region8
  $region5: #{lenet5_forward.3} parent=0 // loop_body
    %s14 = ssub.s32 %s9, 1
    %s15 = ssub.s32 %s9, 2
    %s16 = sadd.s32 %s9, 1
    %s17 = ssub.s32 %s9, %s16
    %p18 = scmp.eq.s32.totalorder %s17, 0
    %s20 = sadd.s32 %s19, 1
    %s21 = scalar_select %p18, %s19, %s20
    %p24 = pneg %p18
    %p25 = scmp.eq.s32.totalorder %s9, 1
    %p26 = por %p24, %p25
    %p27 = scmp.ne.s32.totalorder %s19, %s22
    %p28 = scmp.eq.s32.totalorder %s9, 0
    %p29 = por %p27, %p28
    %p30 = scmp.ne.s32.totalorder %s19, %s22
    %p31 = scmp.eq.s32.totalorder %s14, 1
    %p32 = por %p30, %p31
    %p33 = scmp.ne.s32.totalorder %s22, %s23
    %p34 = scmp.eq.s32.totalorder %s14, 0
    %p35 = por %p33, %p34
    %p36 = scmp.ne.s32.totalorder %s22, %s23
    %p37 = scmp.eq.s32.totalorder %s15, 1
    %p38 = por %p36, %p37
    %p40 = scmp.ne.s32.totalorder %s23, %s39
    %p41 = scmp.eq.s32.totalorder %s15, 0
    %p42 = por %p40, %p41
    %s44 = sadd.s32 %s43, 1
    %p47 = scmp.eq.s32.totalorder %s9, 1
    %p48 = scmp.ne.s32.totalorder %s43, %s45
    %p49 = scmp.eq.s32.totalorder %s9, 0
    %p50 = por %p48, %p49
    %p51 = scmp.ne.s32.totalorder %s43, %s45
    %p52 = scmp.eq.s32.totalorder %s14, 1
    %p53 = por %p51, %p52
    %p54 = scmp.ne.s32.totalorder %s45, %s46
    %p55 = scmp.eq.s32.totalorder %s14, 0
    %p56 = por %p54, %p55
    %p57 = scmp.ne.s32.totalorder %s45, %s46
    %p58 = scmp.eq.s32.totalorder %s15, 1
    %p59 = por %p57, %p58
    %p61 = scmp.ne.s32.totalorder %s46, %s60
    %p62 = scmp.eq.s32.totalorder %s15, 0
    %p63 = por %p61, %p62
    %s65 = sadd.s32 %s64, 1
    %p68 = scmp.eq.s32.totalorder %s9, 1
    %p69 = scmp.ne.s32.totalorder %s64, %s66
    %p70 = scmp.eq.s32.totalorder %s9, 0
    %p71 = por %p69, %p70
    %p72 = scmp.ne.s32.totalorder %s64, %s66
    %p73 = scmp.eq.s32.totalorder %s14, 1
    %p74 = por %p72, %p73
    %p75 = scmp.ne.s32.totalorder %s66, %s67
    %p76 = scmp.eq.s32.totalorder %s14, 0
    %p77 = por %p75, %p76
    %p78 = scmp.ne.s32.totalorder %s66, %s67
    %p79 = scmp.eq.s32.totalorder %s15, 1
    %p80 = por %p78, %p79
    %p82 = scmp.ne.s32.totalorder %s67, %s81
    %p83 = scmp.eq.s32.totalorder %s15, 0
    %p84 = por %p82, %p83
    %s85 = ssub.s32 %s9, %s16
    %p86 = scmp.eq.s32.totalorder %s85, 0
    %s88 = sadd.s32 %s87, 1
    %s89 = scalar_select %p86, %s87, %s88
    %p92 = pneg %p86
    %p93 = scmp.eq.s32.totalorder %s9, 1
    %p94 = por %p92, %p93
    %p95 = scmp.ne.s32.totalorder %s87, %s90
    %p96 = scmp.eq.s32.totalorder %s9, 0
    %p97 = por %p95, %p96
    %p98 = scmp.ne.s32.totalorder %s87, %s90
    %p99 = scmp.eq.s32.totalorder %s14, 1
    %p100 = por %p98, %p99
    %p101 = scmp.ne.s32.totalorder %s90, %s91
    %p102 = scmp.eq.s32.totalorder %s14, 0
    %p103 = por %p101, %p102
    %p104 = scmp.ne.s32.totalorder %s90, %s91
    %p105 = scmp.eq.s32.totalorder %s15, 1
    %p106 = por %p104, %p105
    %p108 = scmp.ne.s32.totalorder %s91, %s107
    %p109 = scmp.eq.s32.totalorder %s15, 0
    %p110 = por %p108, %p109
    %p111 = scmp.le.s32.totalorder 1, %s9
    %p112 = scmp.lt.s32.totalorder %s9, 3
    %p113 = pnand %p111, %p112
    %p114 = pneg %p113
    // Predicated region
    $region9: #{lenet5_forward.3} parent=5 // pred_check
      _
    $region10: #{lenet5_forward.3} parent=5 // pred_check_branch
      %116 = sbr.rel (%p113) target = $region12
    $region11: #{lenet5_forward.3} parent=5 // pred_region
      %s117 = ssub.s32 %s9, 1
      // Predicated region
      $region13: #{lenet5_forward.3} parent=11 // pred_check
        %p118 = pneg %p56
      $region14: #{lenet5_forward.3} parent=11 // pred_check_branch
        %120 = sbr.rel (%p118) target = $region16
      $region15: #{lenet5_forward.3} parent=11 // pred_region
        _
      $region16: #{lenet5_forward.3} parent=11 // pred_fallthru
        _
      // Predicated region
      $region17: #{lenet5_forward.3} parent=11 // pred_check
        %p121 = pneg %p77
      $region18: #{lenet5_forward.3} parent=11 // pred_check_branch
        %123 = sbr.rel (%p121) target = $region20
      $region19: #{lenet5_forward.3} parent=11 // pred_region
        _
      $region20: #{lenet5_forward.3} parent=11 // pred_fallthru
        _
    $region12: #{lenet5_forward.3} parent=5 // pred_fallthru
      _
    %p124 = scmp.lt.s32.totalorder %s9, 2
    // Predicated region
    $region21: #{lenet5_forward.3} parent=5 // pred_check
      %p125 = pneg %p124
    $region22: #{lenet5_forward.3} parent=5 // pred_check_branch
      %127 = sbr.rel (%p125) target = $region24
    $region23: #{lenet5_forward.3} parent=5 // pred_region
      // Predicated region
      $region25: #{lenet5_forward.3} parent=23 // pred_check
        %p128 = pneg %p29
      $region26: #{lenet5_forward.3} parent=23 // pred_check_branch
        %130 = sbr.rel (%p128) target = $region28
      $region27: #{lenet5_forward.3} parent=23 // pred_region
        %p131 = scmp.lt.s32.totalorder %s9, 1
        %s132 = scalar_select %p131, %s9, 1
        %s133 = smul.addr %s132, 64
        %s134 = smul.addr %s133, 8
        %s135 = scalar_lea.vmem %s0, %s134
      $region28: #{lenet5_forward.3} parent=23 // pred_fallthru
        _
    $region24: #{lenet5_forward.3} parent=5 // pred_fallthru
      _
    %p136 = scmp.le.s32.totalorder 1, %s9
    %p137 = scmp.lt.s32.totalorder %s9, 3
    %p138 = pnand %p136, %p137
    %p139 = pneg %p138
    // Predicated region
    $region29: #{lenet5_forward.3} parent=5 // pred_check
      _
    $region30: #{lenet5_forward.3} parent=5 // pred_check_branch
      %141 = sbr.rel (%p138) target = $region32
    $region31: #{lenet5_forward.3} parent=5 // pred_region
      %s142 = ssub.s32 %s9, 1
      %p143 = scmp.lt.s32.totalorder %s14, 1
      %s144 = scalar_select %p143, %s14, 1
      %s145 = smul.addr %s144, 64
      %s146 = smul.addr %s145, 8
      %s147 = scalar_lea.vmem %s0, %s146
      %p148 = pneg %p35
      %p149 = pneg %p32
      %p150 = pneg %p56
      %p151 = pneg %p53
      %p152 = pneg %p77
      %p153 = pneg %p74
      %p154 = pneg %p103
      %p155 = pneg %p100
      %p156 = scmp.lt.s32.totalorder %s14, 1
      %s157 = scalar_select %p156, %s14, 1
      %s158 = smul.addr %s157, 28
      %s159 = smul.addr %s158, 8
      %s160 = scalar_lea.vmem %s3, %s159
      %p161 = scmp.lt.s32.totalorder %s14, 1
      %s162 = scalar_select %p161, %s14, 1
      %s163 = smul.addr %s162, 64
      %s164 = smul.addr %s163, 8
      %s165 = scalar_lea.vmem %s0, %s164
      %p166 = scmp.lt.s32.totalorder %s14, 1
      %s167 = scalar_select %p166, %s14, 1
      %s168 = smul.addr %s167, 28
      %s169 = smul.addr %s168, 8
      %s170 = scalar_lea.vmem %s3, %s169
      %v171 = vld [vmem:[%s165] sm:$0xff]
      %v172 = vld [vmem:[%s165 + $0x8] sm:$0xff]
      %v173 = vld [vmem:[%s165 + $0x10] sm:$0xff]
      %v174 = vld [vmem:[%s165 + $0x18] sm:$0xff]
      %v175 = vld [vmem:[%s165 + $0x20] sm:$0xff]
      %v176 = vld [vmem:[%s165 + $0x28] sm:$0xff]
      %v177 = vld [vmem:[%s165 + $0x30] sm:$0xff]
      %v178 = vld [vmem:[%s165 + $0x38] sm:$0xff]
      %v179 = vld [vmem:[%s165 + $0x40] sm:$0xff]
      %v180 = vld [vmem:[%s165 + $0x48] sm:$0xff]
      %v181 = vld [vmem:[%s165 + $0x50] sm:$0xff]
      %v182 = vld [vmem:[%s165 + $0x58] sm:$0xff]
      %v183 = vld [vmem:[%s165 + $0x60] sm:$0xff]
      %v184 = vld [vmem:[%s165 + $0x68] sm:$0xff]
      %v185 = vld [vmem:[%s165 + $0x70] sm:$0xff]
      %v186 = vld [vmem:[%s165 + $0x78] sm:$0xff]
      %v187 = vld [vmem:[%s165 + $0x80] sm:$0xff]
      %v188 = vld [vmem:[%s165 + $0x88] sm:$0xff]
      %v189 = vld [vmem:[%s165 + $0x90] sm:$0xff]
      %v190 = vld [vmem:[%s165 + $0x98] sm:$0xff]
      %v191 = vld [vmem:[%s165 + $0xa0] sm:$0xff]
      %v192 = vld [vmem:[%s165 + $0xa8] sm:$0xff]
      %v193 = vld [vmem:[%s165 + $0xb0] sm:$0xff]
      %v194 = vld [vmem:[%s165 + $0xb8] sm:$0xff]
      %v195 = vld [vmem:[%s165 + $0xc0] sm:$0xff]
      %v196 = vld [vmem:[%s165 + $0xc8] sm:$0xff]
      %v197 = vld [vmem:[%s165 + $0xd0] sm:$0xff]
      %v198 = vld [vmem:[%s165 + $0xd8] sm:$0xff]
      %v199 = vld [vmem:[%s165 + $0xe0] sm:$0xff]
      %v200 = vld [vmem:[%s165 + $0xe8] sm:$0xff]
      %v201 = vld [vmem:[%s165 + $0xf0] sm:$0xff]
      %v202 = vld [vmem:[%s165 + $0xf8] sm:$0xff]
      %v203 = vld [vmem:[%s165 + $0x100] sm:$0xff]
      %v204 = vld [vmem:[%s165 + $0x108] sm:$0xff]
      %v205 = vld [vmem:[%s165 + $0x110] sm:$0xff]
      %v206 = vld [vmem:[%s165 + $0x118] sm:$0xff]
      %v207 = vld [vmem:[%s165 + $0x120] sm:$0xff]
      %v208 = vld [vmem:[%s165 + $0x128] sm:$0xff]
      %v209 = vld [vmem:[%s165 + $0x130] sm:$0xff]
      %v210 = vld [vmem:[%s165 + $0x138] sm:$0xff]
      %v211 = vld [vmem:[%s165 + $0x140] sm:$0xff]
      %v212 = vld [vmem:[%s165 + $0x148] sm:$0xff]
      %v213 = vld [vmem:[%s165 + $0x150] sm:$0xff]
      %v214 = vld [vmem:[%s165 + $0x158] sm:$0xff]
      %v215 = vld [vmem:[%s165 + $0x160] sm:$0xff]
      %v216 = vld [vmem:[%s165 + $0x168] sm:$0xff]
      %v217 = vld [vmem:[%s165 + $0x170] sm:$0xff]
      %v218 = vld [vmem:[%s165 + $0x178] sm:$0xff]
      %v219 = vld [vmem:[%s165 + $0x180] sm:$0xff]
      %v220 = vld [vmem:[%s165 + $0x188] sm:$0xff]
      %v221 = vld [vmem:[%s165 + $0x190] sm:$0xff]
      %v222 = vld [vmem:[%s165 + $0x198] sm:$0xff]
      %v223 = vld [vmem:[%s165 + $0x1a0] sm:$0xff]
      %v224 = vld [vmem:[%s165 + $0x1a8] sm:$0xff]
      %v225 = vld [vmem:[%s165 + $0x1b0] sm:$0xff]
      %v226 = vld [vmem:[%s165 + $0x1b8] sm:$0xff]
      %v227 = vld [vmem:[%s165 + $0x1c0] sm:$0xff]
      %v228 = vld [vmem:[%s165 + $0x1c8] sm:$0xff]
      %v229 = vld [vmem:[%s165 + $0x1d0] sm:$0xff]
      %v230 = vld [vmem:[%s165 + $0x1d8] sm:$0xff]
      %v231 = vld [vmem:[%s165 + $0x1e0] sm:$0xff]
      %v232 = vld [vmem:[%s165 + $0x1e8] sm:$0xff]
      %v233 = vld [vmem:[%s165 + $0x1f0] sm:$0xff]
      %v234 = vld [vmem:[%s165 + $0x1f8] sm:$0xff]
      %263 = vrot.lane.b32.xlu0 %v173, 5
      %v264 = vpop.permute.xlu0 %263
      %265 = vrot.lane.b32.xlu0 %v174, 5
      %v266 = vpop.permute.xlu0 %265
      %267 = vrot.lane.b32.xlu0 %v177, 5
      %v268 = vpop.permute.xlu0 %267
      %269 = vrot.lane.b32.xlu0 %v178, 5
      %v270 = vpop.permute.xlu0 %269
      %271 = vrot.lane.b32.xlu0 %v181, 5
      %v272 = vpop.permute.xlu0 %271
      %273 = vrot.lane.b32.xlu0 %v182, 5
      %v274 = vpop.permute.xlu0 %273
      %275 = vrot.lane.b32.xlu0 %v185, 5
      %v276 = vpop.permute.xlu0 %275
      %277 = vrot.lane.b32.xlu0 %v186, 5
      %v278 = vpop.permute.xlu0 %277
      %279 = vrot.lane.b32.xlu0 %v189, 5
      %v280 = vpop.permute.xlu0 %279
      %281 = vrot.lane.b32.xlu0 %v190, 5
      %v282 = vpop.permute.xlu0 %281
      %283 = vrot.lane.b32.xlu0 %v193, 5
      %v284 = vpop.permute.xlu0 %283
      %285 = vrot.lane.b32.xlu0 %v194, 5
      %v286 = vpop.permute.xlu0 %285
      %287 = vrot.lane.b32.xlu0 %v197, 5
      %v288 = vpop.permute.xlu0 %287
      %289 = vrot.lane.b32.xlu0 %v198, 5
      %v290 = vpop.permute.xlu0 %289
      %291 = vrot.lane.b32.xlu0 %v201, 5
      %v292 = vpop.permute.xlu0 %291
      %293 = vrot.lane.b32.xlu0 %v202, 5
      %v294 = vpop.permute.xlu0 %293
      %295 = vrot.lane.b32.xlu0 %v205, 5
      %v296 = vpop.permute.xlu0 %295
      %297 = vrot.lane.b32.xlu0 %v206, 5
      %v298 = vpop.permute.xlu0 %297
      %299 = vrot.lane.b32.xlu0 %v209, 5
      %v300 = vpop.permute.xlu0 %299
      %301 = vrot.lane.b32.xlu0 %v210, 5
      %v302 = vpop.permute.xlu0 %301
      %303 = vrot.lane.b32.xlu0 %v213, 5
      %v304 = vpop.permute.xlu0 %303
      %305 = vrot.lane.b32.xlu0 %v214, 5
      %v306 = vpop.permute.xlu0 %305
      %307 = vrot.lane.b32.xlu0 %v217, 5
      %v308 = vpop.permute.xlu0 %307
      %309 = vrot.lane.b32.xlu0 %v218, 5
      %v310 = vpop.permute.xlu0 %309
      %311 = vrot.lane.b32.xlu0 %v221, 5
      %v312 = vpop.permute.xlu0 %311
      %313 = vrot.lane.b32.xlu0 %v222, 5
      %v314 = vpop.permute.xlu0 %313
      %315 = vrot.lane.b32.xlu0 %v225, 5
      %v316 = vpop.permute.xlu0 %315
      %317 = vrot.lane.b32.xlu0 %v226, 5
      %v318 = vpop.permute.xlu0 %317
      %375 = vrot.lane.b32.xlu0 %v175, 10
      %v376 = vpop.permute.xlu0 %375
      %377 = vrot.lane.b32.xlu0 %v176, 10
      %v378 = vpop.permute.xlu0 %377
      %379 = vrot.lane.b32.xlu0 %v179, 10
      %v380 = vpop.permute.xlu0 %379
      %381 = vrot.lane.b32.xlu0 %v180, 10
      %v382 = vpop.permute.xlu0 %381
      %383 = vrot.lane.b32.xlu0 %v183, 10
      %v384 = vpop.permute.xlu0 %383
      %385 = vrot.lane.b32.xlu0 %v184, 10
      %v386 = vpop.permute.xlu0 %385
      %387 = vrot.lane.b32.xlu0 %v187, 10
      %v388 = vpop.permute.xlu0 %387
      %389 = vrot.lane.b32.xlu0 %v188, 10
      %v390 = vpop.permute.xlu0 %389
      %391 = vrot.lane.b32.xlu0 %v191, 10
      %v392 = vpop.permute.xlu0 %391
      %393 = vrot.lane.b32.xlu0 %v192, 10
      %v394 = vpop.permute.xlu0 %393
      %395 = vrot.lane.b32.xlu0 %v195, 10
      %v396 = vpop.permute.xlu0 %395
      %397 = vrot.lane.b32.xlu0 %v196, 10
      %v398 = vpop.permute.xlu0 %397
      %399 = vrot.lane.b32.xlu0 %v199, 10
      %v400 = vpop.permute.xlu0 %399
      %401 = vrot.lane.b32.xlu0 %v200, 10
      %v402 = vpop.permute.xlu0 %401
      %403 = vrot.lane.b32.xlu0 %v203, 10
      %v404 = vpop.permute.xlu0 %403
      %405 = vrot.lane.b32.xlu0 %v204, 10
      %v406 = vpop.permute.xlu0 %405
      %407 = vrot.lane.b32.xlu0 %v207, 10
      %v408 = vpop.permute.xlu0 %407
      %409 = vrot.lane.b32.xlu0 %v208, 10
      %v410 = vpop.permute.xlu0 %409
      %411 = vrot.lane.b32.xlu0 %v211, 10
      %v412 = vpop.permute.xlu0 %411
      %413 = vrot.lane.b32.xlu0 %v212, 10
      %v414 = vpop.permute.xlu0 %413
      %415 = vrot.lane.b32.xlu0 %v215, 10
      %v416 = vpop.permute.xlu0 %415
      %417 = vrot.lane.b32.xlu0 %v216, 10
      %v418 = vpop.permute.xlu0 %417
      %419 = vrot.lane.b32.xlu0 %v219, 10
      %v420 = vpop.permute.xlu0 %419
      %421 = vrot.lane.b32.xlu0 %v220, 10
      %v422 = vpop.permute.xlu0 %421
      %423 = vrot.lane.b32.xlu0 %v223, 10
      %v424 = vpop.permute.xlu0 %423
      %425 = vrot.lane.b32.xlu0 %v224, 10
      %v426 = vpop.permute.xlu0 %425
      %427 = vrot.lane.b32.xlu0 %v227, 10
      %v428 = vpop.permute.xlu0 %427
      %429 = vrot.lane.b32.xlu0 %v228, 10
      %v430 = vpop.permute.xlu0 %429
      %461 = vrot.lane.b32.xlu0 %v177, 15
      %v462 = vpop.permute.xlu0 %461
      %463 = vrot.lane.b32.xlu0 %v178, 15
      %v464 = vpop.permute.xlu0 %463
      %465 = vrot.lane.b32.xlu0 %v181, 15
      %v466 = vpop.permute.xlu0 %465
      %467 = vrot.lane.b32.xlu0 %v182, 15
      %v468 = vpop.permute.xlu0 %467
      %469 = vrot.lane.b32.xlu0 %v185, 15
      %v470 = vpop.permute.xlu0 %469
      %471 = vrot.lane.b32.xlu0 %v186, 15
      %v472 = vpop.permute.xlu0 %471
      %473 = vrot.lane.b32.xlu0 %v189, 15
      %v474 = vpop.permute.xlu0 %473
      %475 = vrot.lane.b32.xlu0 %v190, 15
      %v476 = vpop.permute.xlu0 %475
      %477 = vrot.lane.b32.xlu0 %v193, 15
      %v478 = vpop.permute.xlu0 %477
      %479 = vrot.lane.b32.xlu0 %v194, 15
      %v480 = vpop.permute.xlu0 %479
      %481 = vrot.lane.b32.xlu0 %v197, 15
      %v482 = vpop.permute.xlu0 %481
      %483 = vrot.lane.b32.xlu0 %v198, 15
      %v484 = vpop.permute.xlu0 %483
      %485 = vrot.lane.b32.xlu0 %v201, 15
      %v486 = vpop.permute.xlu0 %485
      %487 = vrot.lane.b32.xlu0 %v202, 15
      %v488 = vpop.permute.xlu0 %487
      %489 = vrot.lane.b32.xlu0 %v205, 15
      %v490 = vpop.permute.xlu0 %489
      %491 = vrot.lane.b32.xlu0 %v206, 15
      %v492 = vpop.permute.xlu0 %491
      %493 = vrot.lane.b32.xlu0 %v209, 15
      %v494 = vpop.permute.xlu0 %493
      %495 = vrot.lane.b32.xlu0 %v210, 15
      %v496 = vpop.permute.xlu0 %495
      %497 = vrot.lane.b32.xlu0 %v213, 15
      %v498 = vpop.permute.xlu0 %497
      %499 = vrot.lane.b32.xlu0 %v214, 15
      %v500 = vpop.permute.xlu0 %499
      %501 = vrot.lane.b32.xlu0 %v217, 15
      %v502 = vpop.permute.xlu0 %501
      %503 = vrot.lane.b32.xlu0 %v218, 15
      %v504 = vpop.permute.xlu0 %503
      %505 = vrot.lane.b32.xlu0 %v221, 15
      %v506 = vpop.permute.xlu0 %505
      %507 = vrot.lane.b32.xlu0 %v222, 15
      %v508 = vpop.permute.xlu0 %507
      %509 = vrot.lane.b32.xlu0 %v225, 15
      %v510 = vpop.permute.xlu0 %509
      %511 = vrot.lane.b32.xlu0 %v226, 15
      %v512 = vpop.permute.xlu0 %511
      %513 = vrot.lane.b32.xlu0 %v229, 15
      %v514 = vpop.permute.xlu0 %513
      %515 = vrot.lane.b32.xlu0 %v230, 15
      %v516 = vpop.permute.xlu0 %515
      %547 = vrot.lane.b32.xlu0 %v179, 20
      %v548 = vpop.permute.xlu0 %547
      %549 = vrot.lane.b32.xlu0 %v180, 20
      %v550 = vpop.permute.xlu0 %549
      %551 = vrot.lane.b32.xlu0 %v183, 20
      %v552 = vpop.permute.xlu0 %551
      %553 = vrot.lane.b32.xlu0 %v184, 20
      %v554 = vpop.permute.xlu0 %553
      %555 = vrot.lane.b32.xlu0 %v187, 20
      %v556 = vpop.permute.xlu0 %555
      %557 = vrot.lane.b32.xlu0 %v188, 20
      %v558 = vpop.permute.xlu0 %557
      %559 = vrot.lane.b32.xlu0 %v191, 20
      %v560 = vpop.permute.xlu0 %559
      %561 = vrot.lane.b32.xlu0 %v192, 20
      %v562 = vpop.permute.xlu0 %561
      %563 = vrot.lane.b32.xlu0 %v195, 20
      %v564 = vpop.permute.xlu0 %563
      %565 = vrot.lane.b32.xlu0 %v196, 20
      %v566 = vpop.permute.xlu0 %565
      %567 = vrot.lane.b32.xlu0 %v199, 20
      %v568 = vpop.permute.xlu0 %567
      %569 = vrot.lane.b32.xlu0 %v200, 20
      %v570 = vpop.permute.xlu0 %569
      %571 = vrot.lane.b32.xlu0 %v203, 20
      %v572 = vpop.permute.xlu0 %571
      %573 = vrot.lane.b32.xlu0 %v204, 20
      %v574 = vpop.permute.xlu0 %573
      %575 = vrot.lane.b32.xlu0 %v207, 20
      %v576 = vpop.permute.xlu0 %575
      %577 = vrot.lane.b32.xlu0 %v208, 20
      %v578 = vpop.permute.xlu0 %577
      %579 = vrot.lane.b32.xlu0 %v211, 20
      %v580 = vpop.permute.xlu0 %579
      %581 = vrot.lane.b32.xlu0 %v212, 20
      %v582 = vpop.permute.xlu0 %581
      %583 = vrot.lane.b32.xlu0 %v215, 20
      %v584 = vpop.permute.xlu0 %583
      %585 = vrot.lane.b32.xlu0 %v216, 20
      %v586 = vpop.permute.xlu0 %585
      %587 = vrot.lane.b32.xlu0 %v219, 20
      %v588 = vpop.permute.xlu0 %587
      %589 = vrot.lane.b32.xlu0 %v220, 20
      %v590 = vpop.permute.xlu0 %589
      %591 = vrot.lane.b32.xlu0 %v223, 20
      %v592 = vpop.permute.xlu0 %591
      %593 = vrot.lane.b32.xlu0 %v224, 20
      %v594 = vpop.permute.xlu0 %593
      %595 = vrot.lane.b32.xlu0 %v227, 20
      %v596 = vpop.permute.xlu0 %595
      %597 = vrot.lane.b32.xlu0 %v228, 20
      %v598 = vpop.permute.xlu0 %597
      %599 = vrot.lane.b32.xlu0 %v231, 20
      %v600 = vpop.permute.xlu0 %599
      %601 = vrot.lane.b32.xlu0 %v232, 20
      %v602 = vpop.permute.xlu0 %601
      %vm631 = vcmask 39936
      %v632 = vsel %vm631, %v171, %v264
      %v633 = vsel %vm631, %v172, %v266
      %v634 = vsel %vm631, %v175, %v268
      %v635 = vsel %vm631, %v176, %v270
      %v636 = vsel %vm631, %v179, %v272
      %v637 = vsel %vm631, %v180, %v274
      %v638 = vsel %vm631, %v183, %v276
      %v639 = vsel %vm631, %v184, %v278
      %v640 = vsel %vm631, %v187, %v280
      %v641 = vsel %vm631, %v188, %v282
      %v642 = vsel %vm631, %v191, %v284
      %v643 = vsel %vm631, %v192, %v286
      %v644 = vsel %vm631, %v195, %v288
      %v645 = vsel %vm631, %v196, %v290
      %v646 = vsel %vm631, %v199, %v292
      %v647 = vsel %vm631, %v200, %v294
      %v648 = vsel %vm631, %v203, %v296
      %v649 = vsel %vm631, %v204, %v298
      %v650 = vsel %vm631, %v207, %v300
      %v651 = vsel %vm631, %v208, %v302
      %v652 = vsel %vm631, %v211, %v304
      %v653 = vsel %vm631, %v212, %v306
      %v654 = vsel %vm631, %v215, %v308
      %v655 = vsel %vm631, %v216, %v310
      %v656 = vsel %vm631, %v219, %v312
      %v657 = vsel %vm631, %v220, %v314
      %v658 = vsel %vm631, %v223, %v316
      %v659 = vsel %vm631, %v224, %v318
      %vm660 = vcmask 80896
      %v661 = vsel %vm660, %v632, %v376
      %v662 = vsel %vm660, %v633, %v378
      %v663 = vsel %vm660, %v634, %v380
      %v664 = vsel %vm660, %v635, %v382
      %v665 = vsel %vm660, %v636, %v384
      %v666 = vsel %vm660, %v637, %v386
      %v667 = vsel %vm660, %v638, %v388
      %v668 = vsel %vm660, %v639, %v390
      %v669 = vsel %vm660, %v640, %v392
      %v670 = vsel %vm660, %v641, %v394
      %v671 = vsel %vm660, %v642, %v396
      %v672 = vsel %vm660, %v643, %v398
      %v673 = vsel %vm660, %v644, %v400
      %v674 = vsel %vm660, %v645, %v402
      %v675 = vsel %vm660, %v646, %v404
      %v676 = vsel %vm660, %v647, %v406
      %v677 = vsel %vm660, %v648, %v408
      %v678 = vsel %vm660, %v649, %v410
      %v679 = vsel %vm660, %v650, %v412
      %v680 = vsel %vm660, %v651, %v414
      %v681 = vsel %vm660, %v652, %v416
      %v682 = vsel %vm660, %v653, %v418
      %v683 = vsel %vm660, %v654, %v420
      %v684 = vsel %vm660, %v655, %v422
      %v685 = vsel %vm660, %v656, %v424
      %v686 = vsel %vm660, %v657, %v426
      %v687 = vsel %vm660, %v658, %v428
      %v688 = vsel %vm660, %v659, %v430
      %vm689 = vcmask 121856
      %v690 = vsel %vm689, %v661, %v462
      %v691 = vsel %vm689, %v662, %v464
      %v692 = vsel %vm689, %v663, %v466
      %v693 = vsel %vm689, %v664, %v468
      %v694 = vsel %vm689, %v665, %v470
      %v695 = vsel %vm689, %v666, %v472
      %v696 = vsel %vm689, %v667, %v474
      %v697 = vsel %vm689, %v668, %v476
      %v698 = vsel %vm689, %v669, %v478
      %v699 = vsel %vm689, %v670, %v480
      %v700 = vsel %vm689, %v671, %v482
      %v701 = vsel %vm689, %v672, %v484
      %v702 = vsel %vm689, %v673, %v486
      %v703 = vsel %vm689, %v674, %v488
      %v704 = vsel %vm689, %v675, %v490
      %v705 = vsel %vm689, %v676, %v492
      %v706 = vsel %vm689, %v677, %v494
      %v707 = vsel %vm689, %v678, %v496
      %v708 = vsel %vm689, %v679, %v498
      %v709 = vsel %vm689, %v680, %v500
      %v710 = vsel %vm689, %v681, %v502
      %v711 = vsel %vm689, %v682, %v504
      %v712 = vsel %vm689, %v683, %v506
      %v713 = vsel %vm689, %v684, %v508
      %v714 = vsel %vm689, %v685, %v510
      %v715 = vsel %vm689, %v686, %v512
      %v716 = vsel %vm689, %v687, %v514
      %v717 = vsel %vm689, %v688, %v516
      %vm718 = vcmask 162816
      %v719 = vsel %vm718, %v690, %v548
      %v720 = vsel %vm718, %v691, %v550
      %v721 = vsel %vm718, %v692, %v552
      %v722 = vsel %vm718, %v693, %v554
      %v723 = vsel %vm718, %v694, %v556
      %v724 = vsel %vm718, %v695, %v558
      %v725 = vsel %vm718, %v696, %v560
      %v726 = vsel %vm718, %v697, %v562
      %v727 = vsel %vm718, %v698, %v564
      %v728 = vsel %vm718, %v699, %v566
      %v729 = vsel %vm718, %v700, %v568
      %v730 = vsel %vm718, %v701, %v570
      %v731 = vsel %vm718, %v702, %v572
      %v732 = vsel %vm718, %v703, %v574
      %v733 = vsel %vm718, %v704, %v576
      %v734 = vsel %vm718, %v705, %v578
      %v735 = vsel %vm718, %v706, %v580
      %v736 = vsel %vm718, %v707, %v582
      %v737 = vsel %vm718, %v708, %v584
      %v738 = vsel %vm718, %v709, %v586
      %v739 = vsel %vm718, %v710, %v588
      %v740 = vsel %vm718, %v711, %v590
      %v741 = vsel %vm718, %v712, %v592
      %v742 = vsel %vm718, %v713, %v594
      %v743 = vsel %vm718, %v714, %v596
      %v744 = vsel %vm718, %v715, %v598
      %v745 = vsel %vm718, %v716, %v600
      %v746 = vsel %vm718, %v717, %v602
      %749 = vrot.lane.b32.xlu0 %v171, 123
      %v750 = vpop.permute.xlu0 %749
      %751 = vrot.lane.b32.xlu0 %v172, 123
      %v752 = vpop.permute.xlu0 %751
      %753 = vrot.lane.b32.xlu0 %v175, 123
      %v754 = vpop.permute.xlu0 %753
      %755 = vrot.lane.b32.xlu0 %v176, 123
      %v756 = vpop.permute.xlu0 %755
      %757 = vrot.lane.b32.xlu0 %v179, 123
      %v758 = vpop.permute.xlu0 %757
      %759 = vrot.lane.b32.xlu0 %v180, 123
      %v760 = vpop.permute.xlu0 %759
      %761 = vrot.lane.b32.xlu0 %v183, 123
      %v762 = vpop.permute.xlu0 %761
      %763 = vrot.lane.b32.xlu0 %v184, 123
      %v764 = vpop.permute.xlu0 %763
      %765 = vrot.lane.b32.xlu0 %v187, 123
      %v766 = vpop.permute.xlu0 %765
      %767 = vrot.lane.b32.xlu0 %v188, 123
      %v768 = vpop.permute.xlu0 %767
      %769 = vrot.lane.b32.xlu0 %v191, 123
      %v770 = vpop.permute.xlu0 %769
      %771 = vrot.lane.b32.xlu0 %v192, 123
      %v772 = vpop.permute.xlu0 %771
      %773 = vrot.lane.b32.xlu0 %v195, 123
      %v774 = vpop.permute.xlu0 %773
      %775 = vrot.lane.b32.xlu0 %v196, 123
      %v776 = vpop.permute.xlu0 %775
      %777 = vrot.lane.b32.xlu0 %v199, 123
      %v778 = vpop.permute.xlu0 %777
      %779 = vrot.lane.b32.xlu0 %v200, 123
      %v780 = vpop.permute.xlu0 %779
      %781 = vrot.lane.b32.xlu0 %v203, 123
      %v782 = vpop.permute.xlu0 %781
      %783 = vrot.lane.b32.xlu0 %v204, 123
      %v784 = vpop.permute.xlu0 %783
      %785 = vrot.lane.b32.xlu0 %v207, 123
      %v786 = vpop.permute.xlu0 %785
      %787 = vrot.lane.b32.xlu0 %v208, 123
      %v788 = vpop.permute.xlu0 %787
      %789 = vrot.lane.b32.xlu0 %v211, 123
      %v790 = vpop.permute.xlu0 %789
      %791 = vrot.lane.b32.xlu0 %v212, 123
      %v792 = vpop.permute.xlu0 %791
      %793 = vrot.lane.b32.xlu0 %v215, 123
      %v794 = vpop.permute.xlu0 %793
      %795 = vrot.lane.b32.xlu0 %v216, 123
      %v796 = vpop.permute.xlu0 %795
      %797 = vrot.lane.b32.xlu0 %v219, 123
      %v798 = vpop.permute.xlu0 %797
      %799 = vrot.lane.b32.xlu0 %v220, 123
      %v800 = vpop.permute.xlu0 %799
      %801 = vrot.lane.b32.xlu0 %v223, 123
      %v802 = vpop.permute.xlu0 %801
      %803 = vrot.lane.b32.xlu0 %v224, 123
      %v804 = vpop.permute.xlu0 %803
      %833 = vrot.lane.b32.xlu0 %v175, 5
      %v834 = vpop.permute.xlu0 %833
      %835 = vrot.lane.b32.xlu0 %v176, 5
      %v836 = vpop.permute.xlu0 %835
      %837 = vrot.lane.b32.xlu0 %v179, 5
      %v838 = vpop.permute.xlu0 %837
      %839 = vrot.lane.b32.xlu0 %v180, 5
      %v840 = vpop.permute.xlu0 %839
      %841 = vrot.lane.b32.xlu0 %v183, 5
      %v842 = vpop.permute.xlu0 %841
      %843 = vrot.lane.b32.xlu0 %v184, 5
      %v844 = vpop.permute.xlu0 %843
      %845 = vrot.lane.b32.xlu0 %v187, 5
      %v846 = vpop.permute.xlu0 %845
      %847 = vrot.lane.b32.xlu0 %v188, 5
      %v848 = vpop.permute.xlu0 %847
      %849 = vrot.lane.b32.xlu0 %v191, 5
      %v850 = vpop.permute.xlu0 %849
      %851 = vrot.lane.b32.xlu0 %v192, 5
      %v852 = vpop.permute.xlu0 %851
      %853 = vrot.lane.b32.xlu0 %v195, 5
      %v854 = vpop.permute.xlu0 %853
      %855 = vrot.lane.b32.xlu0 %v196, 5
      %v856 = vpop.permute.xlu0 %855
      %857 = vrot.lane.b32.xlu0 %v199, 5
      %v858 = vpop.permute.xlu0 %857
      %859 = vrot.lane.b32.xlu0 %v200, 5
      %v860 = vpop.permute.xlu0 %859
      %861 = vrot.lane.b32.xlu0 %v203, 5
      %v862 = vpop.permute.xlu0 %861
      %863 = vrot.lane.b32.xlu0 %v204, 5
      %v864 = vpop.permute.xlu0 %863
      %865 = vrot.lane.b32.xlu0 %v207, 5
      %v866 = vpop.permute.xlu0 %865
      %867 = vrot.lane.b32.xlu0 %v208, 5
      %v868 = vpop.permute.xlu0 %867
      %869 = vrot.lane.b32.xlu0 %v211, 5
      %v870 = vpop.permute.xlu0 %869
      %871 = vrot.lane.b32.xlu0 %v212, 5
      %v872 = vpop.permute.xlu0 %871
      %873 = vrot.lane.b32.xlu0 %v215, 5
      %v874 = vpop.permute.xlu0 %873
      %875 = vrot.lane.b32.xlu0 %v216, 5
      %v876 = vpop.permute.xlu0 %875
      %877 = vrot.lane.b32.xlu0 %v219, 5
      %v878 = vpop.permute.xlu0 %877
      %879 = vrot.lane.b32.xlu0 %v220, 5
      %v880 = vpop.permute.xlu0 %879
      %881 = vrot.lane.b32.xlu0 %v223, 5
      %v882 = vpop.permute.xlu0 %881
      %883 = vrot.lane.b32.xlu0 %v224, 5
      %v884 = vpop.permute.xlu0 %883
      %885 = vrot.lane.b32.xlu0 %v227, 5
      %v886 = vpop.permute.xlu0 %885
      %887 = vrot.lane.b32.xlu0 %v228, 5
      %v888 = vpop.permute.xlu0 %887
      %917 = vrot.lane.b32.xlu0 %v177, 10
      %v918 = vpop.permute.xlu0 %917
      %919 = vrot.lane.b32.xlu0 %v178, 10
      %v920 = vpop.permute.xlu0 %919
      %921 = vrot.lane.b32.xlu0 %v181, 10
      %v922 = vpop.permute.xlu0 %921
      %923 = vrot.lane.b32.xlu0 %v182, 10
      %v924 = vpop.permute.xlu0 %923
      %925 = vrot.lane.b32.xlu0 %v185, 10
      %v926 = vpop.permute.xlu0 %925
      %927 = vrot.lane.b32.xlu0 %v186, 10
      %v928 = vpop.permute.xlu0 %927
      %929 = vrot.lane.b32.xlu0 %v189, 10
      %v930 = vpop.permute.xlu0 %929
      %931 = vrot.lane.b32.xlu0 %v190, 10
      %v932 = vpop.permute.xlu0 %931
      %933 = vrot.lane.b32.xlu0 %v193, 10
      %v934 = vpop.permute.xlu0 %933
      %935 = vrot.lane.b32.xlu0 %v194, 10
      %v936 = vpop.permute.xlu0 %935
      %937 = vrot.lane.b32.xlu0 %v197, 10
      %v938 = vpop.permute.xlu0 %937
      %939 = vrot.lane.b32.xlu0 %v198, 10
      %v940 = vpop.permute.xlu0 %939
      %941 = vrot.lane.b32.xlu0 %v201, 10
      %v942 = vpop.permute.xlu0 %941
      %943 = vrot.lane.b32.xlu0 %v202, 10
      %v944 = vpop.permute.xlu0 %943
      %945 = vrot.lane.b32.xlu0 %v205, 10
      %v946 = vpop.permute.xlu0 %945
      %947 = vrot.lane.b32.xlu0 %v206, 10
      %v948 = vpop.permute.xlu0 %947
      %949 = vrot.lane.b32.xlu0 %v209, 10
      %v950 = vpop.permute.xlu0 %949
      %951 = vrot.lane.b32.xlu0 %v210, 10
      %v952 = vpop.permute.xlu0 %951
      %953 = vrot.lane.b32.xlu0 %v213, 10
      %v954 = vpop.permute.xlu0 %953
      %955 = vrot.lane.b32.xlu0 %v214, 10
      %v956 = vpop.permute.xlu0 %955
      %957 = vrot.lane.b32.xlu0 %v217, 10
      %v958 = vpop.permute.xlu0 %957
      %959 = vrot.lane.b32.xlu0 %v218, 10
      %v960 = vpop.permute.xlu0 %959
      %961 = vrot.lane.b32.xlu0 %v221, 10
      %v962 = vpop.permute.xlu0 %961
      %963 = vrot.lane.b32.xlu0 %v222, 10
      %v964 = vpop.permute.xlu0 %963
      %965 = vrot.lane.b32.xlu0 %v225, 10
      %v966 = vpop.permute.xlu0 %965
      %967 = vrot.lane.b32.xlu0 %v226, 10
      %v968 = vpop.permute.xlu0 %967
      %969 = vrot.lane.b32.xlu0 %v229, 10
      %v970 = vpop.permute.xlu0 %969
      %971 = vrot.lane.b32.xlu0 %v230, 10
      %v972 = vpop.permute.xlu0 %971
      %1001 = vrot.lane.b32.xlu0 %v179, 15
      %v1002 = vpop.permute.xlu0 %1001
      %1003 = vrot.lane.b32.xlu0 %v180, 15
      %v1004 = vpop.permute.xlu0 %1003
      %1005 = vrot.lane.b32.xlu0 %v183, 15
      %v1006 = vpop.permute.xlu0 %1005
      %1007 = vrot.lane.b32.xlu0 %v184, 15
      %v1008 = vpop.permute.xlu0 %1007
      %1009 = vrot.lane.b32.xlu0 %v187, 15
      %v1010 = vpop.permute.xlu0 %1009
      %1011 = vrot.lane.b32.xlu0 %v188, 15
      %v1012 = vpop.permute.xlu0 %1011
      %1013 = vrot.lane.b32.xlu0 %v191, 15
      %v1014 = vpop.permute.xlu0 %1013
      %1015 = vrot.lane.b32.xlu0 %v192, 15
      %v1016 = vpop.permute.xlu0 %1015
      %1017 = vrot.lane.b32.xlu0 %v195, 15
      %v1018 = vpop.permute.xlu0 %1017
      %1019 = vrot.lane.b32.xlu0 %v196, 15
      %v1020 = vpop.permute.xlu0 %1019
      %1021 = vrot.lane.b32.xlu0 %v199, 15
      %v1022 = vpop.permute.xlu0 %1021
      %1023 = vrot.lane.b32.xlu0 %v200, 15
      %v1024 = vpop.permute.xlu0 %1023
      %1025 = vrot.lane.b32.xlu0 %v203, 15
      %v1026 = vpop.permute.xlu0 %1025
      %1027 = vrot.lane.b32.xlu0 %v204, 15
      %v1028 = vpop.permute.xlu0 %1027
      %1029 = vrot.lane.b32.xlu0 %v207, 15
      %v1030 = vpop.permute.xlu0 %1029
      %1031 = vrot.lane.b32.xlu0 %v208, 15
      %v1032 = vpop.permute.xlu0 %1031
      %1033 = vrot.lane.b32.xlu0 %v211, 15
      %v1034 = vpop.permute.xlu0 %1033
      %1035 = vrot.lane.b32.xlu0 %v212, 15
      %v1036 = vpop.permute.xlu0 %1035
      %1037 = vrot.lane.b32.xlu0 %v215, 15
      %v1038 = vpop.permute.xlu0 %1037
      %1039 = vrot.lane.b32.xlu0 %v216, 15
      %v1040 = vpop.permute.xlu0 %1039
      %1041 = vrot.lane.b32.xlu0 %v219, 15
      %v1042 = vpop.permute.xlu0 %1041
      %1043 = vrot.lane.b32.xlu0 %v220, 15
      %v1044 = vpop.permute.xlu0 %1043
      %1045 = vrot.lane.b32.xlu0 %v223, 15
      %v1046 = vpop.permute.xlu0 %1045
      %1047 = vrot.lane.b32.xlu0 %v224, 15
      %v1048 = vpop.permute.xlu0 %1047
      %1049 = vrot.lane.b32.xlu0 %v227, 15
      %v1050 = vpop.permute.xlu0 %1049
      %1051 = vrot.lane.b32.xlu0 %v228, 15
      %v1052 = vpop.permute.xlu0 %1051
      %1053 = vrot.lane.b32.xlu0 %v231, 15
      %v1054 = vpop.permute.xlu0 %1053
      %1055 = vrot.lane.b32.xlu0 %v232, 15
      %v1056 = vpop.permute.xlu0 %1055
      %v1085 = vsel %vm631, %v750, %v173
      %v1086 = vsel %vm631, %v752, %v174
      %v1087 = vsel %vm631, %v754, %v177
      %v1088 = vsel %vm631, %v756, %v178
      %v1089 = vsel %vm631, %v758, %v181
      %v1090 = vsel %vm631, %v760, %v182
      %v1091 = vsel %vm631, %v762, %v185
      %v1092 = vsel %vm631, %v764, %v186
      %v1093 = vsel %vm631, %v766, %v189
      %v1094 = vsel %vm631, %v768, %v190
      %v1095 = vsel %vm631, %v770, %v193
      %v1096 = vsel %vm631, %v772, %v194
      %v1097 = vsel %vm631, %v774, %v197
      %v1098 = vsel %vm631, %v776, %v198
      %v1099 = vsel %vm631, %v778, %v201
      %v1100 = vsel %vm631, %v780, %v202
      %v1101 = vsel %vm631, %v782, %v205
      %v1102 = vsel %vm631, %v784, %v206
      %v1103 = vsel %vm631, %v786, %v209
      %v1104 = vsel %vm631, %v788, %v210
      %v1105 = vsel %vm631, %v790, %v213
      %v1106 = vsel %vm631, %v792, %v214
      %v1107 = vsel %vm631, %v794, %v217
      %v1108 = vsel %vm631, %v796, %v218
      %v1109 = vsel %vm631, %v798, %v221
      %v1110 = vsel %vm631, %v800, %v222
      %v1111 = vsel %vm631, %v802, %v225
      %v1112 = vsel %vm631, %v804, %v226
      %v1113 = vsel %vm660, %v1085, %v834
      %v1114 = vsel %vm660, %v1086, %v836
      %v1115 = vsel %vm660, %v1087, %v838
      %v1116 = vsel %vm660, %v1088, %v840
      %v1117 = vsel %vm660, %v1089, %v842
      %v1118 = vsel %vm660, %v1090, %v844
      %v1119 = vsel %vm660, %v1091, %v846
      %v1120 = vsel %vm660, %v1092, %v848
      %v1121 = vsel %vm660, %v1093, %v850
      %v1122 = vsel %vm660, %v1094, %v852
      %v1123 = vsel %vm660, %v1095, %v854
      %v1124 = vsel %vm660, %v1096, %v856
      %v1125 = vsel %vm660, %v1097, %v858
      %v1126 = vsel %vm660, %v1098, %v860
      %v1127 = vsel %vm660, %v1099, %v862
      %v1128 = vsel %vm660, %v1100, %v864
      %v1129 = vsel %vm660, %v1101, %v866
      %v1130 = vsel %vm660, %v1102, %v868
      %v1131 = vsel %vm660, %v1103, %v870
      %v1132 = vsel %vm660, %v1104, %v872
      %v1133 = vsel %vm660, %v1105, %v874
      %v1134 = vsel %vm660, %v1106, %v876
      %v1135 = vsel %vm660, %v1107, %v878
      %v1136 = vsel %vm660, %v1108, %v880
      %v1137 = vsel %vm660, %v1109, %v882
      %v1138 = vsel %vm660, %v1110, %v884
      %v1139 = vsel %vm660, %v1111, %v886
      %v1140 = vsel %vm660, %v1112, %v888
      %v1141 = vsel %vm689, %v1113, %v918
      %v1142 = vsel %vm689, %v1114, %v920
      %v1143 = vsel %vm689, %v1115, %v922
      %v1144 = vsel %vm689, %v1116, %v924
      %v1145 = vsel %vm689, %v1117, %v926
      %v1146 = vsel %vm689, %v1118, %v928
      %v1147 = vsel %vm689, %v1119, %v930
      %v1148 = vsel %vm689, %v1120, %v932
      %v1149 = vsel %vm689, %v1121, %v934
      %v1150 = vsel %vm689, %v1122, %v936
      %v1151 = vsel %vm689, %v1123, %v938
      %v1152 = vsel %vm689, %v1124, %v940
      %v1153 = vsel %vm689, %v1125, %v942
      %v1154 = vsel %vm689, %v1126, %v944
      %v1155 = vsel %vm689, %v1127, %v946
      %v1156 = vsel %vm689, %v1128, %v948
      %v1157 = vsel %vm689, %v1129, %v950
      %v1158 = vsel %vm689, %v1130, %v952
      %v1159 = vsel %vm689, %v1131, %v954
      %v1160 = vsel %vm689, %v1132, %v956
      %v1161 = vsel %vm689, %v1133, %v958
      %v1162 = vsel %vm689, %v1134, %v960
      %v1163 = vsel %vm689, %v1135, %v962
      %v1164 = vsel %vm689, %v1136, %v964
      %v1165 = vsel %vm689, %v1137, %v966
      %v1166 = vsel %vm689, %v1138, %v968
      %v1167 = vsel %vm689, %v1139, %v970
      %v1168 = vsel %vm689, %v1140, %v972
      %v1169 = vsel %vm718, %v1141, %v1002
      %v1170 = vsel %vm718, %v1142, %v1004
      %v1171 = vsel %vm718, %v1143, %v1006
      %v1172 = vsel %vm718, %v1144, %v1008
      %v1173 = vsel %vm718, %v1145, %v1010
      %v1174 = vsel %vm718, %v1146, %v1012
      %v1175 = vsel %vm718, %v1147, %v1014
      %v1176 = vsel %vm718, %v1148, %v1016
      %v1177 = vsel %vm718, %v1149, %v1018
      %v1178 = vsel %vm718, %v1150, %v1020
      %v1179 = vsel %vm718, %v1151, %v1022
      %v1180 = vsel %vm718, %v1152, %v1024
      %v1181 = vsel %vm718, %v1153, %v1026
      %v1182 = vsel %vm718, %v1154, %v1028
      %v1183 = vsel %vm718, %v1155, %v1030
      %v1184 = vsel %vm718, %v1156, %v1032
      %v1185 = vsel %vm718, %v1157, %v1034
      %v1186 = vsel %vm718, %v1158, %v1036
      %v1187 = vsel %vm718, %v1159, %v1038
      %v1188 = vsel %vm718, %v1160, %v1040
      %v1189 = vsel %vm718, %v1161, %v1042
      %v1190 = vsel %vm718, %v1162, %v1044
      %v1191 = vsel %vm718, %v1163, %v1046
      %v1192 = vsel %vm718, %v1164, %v1048
      %v1193 = vsel %vm718, %v1165, %v1050
      %v1194 = vsel %vm718, %v1166, %v1052
      %v1195 = vsel %vm718, %v1167, %v1054
      %v1196 = vsel %vm718, %v1168, %v1056
      %1199 = vrot.lane.b32.xlu0 %v181, 20
      %v1200 = vpop.permute.xlu0 %1199
      %1201 = vrot.lane.b32.xlu0 %v182, 20
      %v1202 = vpop.permute.xlu0 %1201
      %1203 = vrot.lane.b32.xlu0 %v185, 20
      %v1204 = vpop.permute.xlu0 %1203
      %1205 = vrot.lane.b32.xlu0 %v186, 20
      %v1206 = vpop.permute.xlu0 %1205
      %1207 = vrot.lane.b32.xlu0 %v189, 20
      %v1208 = vpop.permute.xlu0 %1207
      %1209 = vrot.lane.b32.xlu0 %v190, 20
      %v1210 = vpop.permute.xlu0 %1209
      %1211 = vrot.lane.b32.xlu0 %v193, 20
      %v1212 = vpop.permute.xlu0 %1211
      %1213 = vrot.lane.b32.xlu0 %v194, 20
      %v1214 = vpop.permute.xlu0 %1213
      %1215 = vrot.lane.b32.xlu0 %v197, 20
      %v1216 = vpop.permute.xlu0 %1215
      %1217 = vrot.lane.b32.xlu0 %v198, 20
      %v1218 = vpop.permute.xlu0 %1217
      %1219 = vrot.lane.b32.xlu0 %v201, 20
      %v1220 = vpop.permute.xlu0 %1219
      %1221 = vrot.lane.b32.xlu0 %v202, 20
      %v1222 = vpop.permute.xlu0 %1221
      %1223 = vrot.lane.b32.xlu0 %v205, 20
      %v1224 = vpop.permute.xlu0 %1223
      %1225 = vrot.lane.b32.xlu0 %v206, 20
      %v1226 = vpop.permute.xlu0 %1225
      %1227 = vrot.lane.b32.xlu0 %v209, 20
      %v1228 = vpop.permute.xlu0 %1227
      %1229 = vrot.lane.b32.xlu0 %v210, 20
      %v1230 = vpop.permute.xlu0 %1229
      %1231 = vrot.lane.b32.xlu0 %v213, 20
      %v1232 = vpop.permute.xlu0 %1231
      %1233 = vrot.lane.b32.xlu0 %v214, 20
      %v1234 = vpop.permute.xlu0 %1233
      %1235 = vrot.lane.b32.xlu0 %v217, 20
      %v1236 = vpop.permute.xlu0 %1235
      %1237 = vrot.lane.b32.xlu0 %v218, 20
      %v1238 = vpop.permute.xlu0 %1237
      %1239 = vrot.lane.b32.xlu0 %v221, 20
      %v1240 = vpop.permute.xlu0 %1239
      %1241 = vrot.lane.b32.xlu0 %v222, 20
      %v1242 = vpop.permute.xlu0 %1241
      %1243 = vrot.lane.b32.xlu0 %v225, 20
      %v1244 = vpop.permute.xlu0 %1243
      %1245 = vrot.lane.b32.xlu0 %v226, 20
      %v1246 = vpop.permute.xlu0 %1245
      %1247 = vrot.lane.b32.xlu0 %v229, 20
      %v1248 = vpop.permute.xlu0 %1247
      %1249 = vrot.lane.b32.xlu0 %v230, 20
      %v1250 = vpop.permute.xlu0 %1249
      %1251 = vrot.lane.b32.xlu0 %v233, 20
      %v1252 = vpop.permute.xlu0 %1251
      %1253 = vrot.lane.b32.xlu0 %v234, 20
      %v1254 = vpop.permute.xlu0 %1253
      %v1283 = vsel %vm631, %v173, %v834
      %v1284 = vsel %vm631, %v174, %v836
      %v1285 = vsel %vm631, %v177, %v838
      %v1286 = vsel %vm631, %v178, %v840
      %v1287 = vsel %vm631, %v181, %v842
      %v1288 = vsel %vm631, %v182, %v844
      %v1289 = vsel %vm631, %v185, %v846
      %v1290 = vsel %vm631, %v186, %v848
      %v1291 = vsel %vm631, %v189, %v850
      %v1292 = vsel %vm631, %v190, %v852
      %v1293 = vsel %vm631, %v193, %v854
      %v1294 = vsel %vm631, %v194, %v856
      %v1295 = vsel %vm631, %v197, %v858
      %v1296 = vsel %vm631, %v198, %v860
      %v1297 = vsel %vm631, %v201, %v862
      %v1298 = vsel %vm631, %v202, %v864
      %v1299 = vsel %vm631, %v205, %v866
      %v1300 = vsel %vm631, %v206, %v868
      %v1301 = vsel %vm631, %v209, %v870
      %v1302 = vsel %vm631, %v210, %v872
      %v1303 = vsel %vm631, %v213, %v874
      %v1304 = vsel %vm631, %v214, %v876
      %v1305 = vsel %vm631, %v217, %v878
      %v1306 = vsel %vm631, %v218, %v880
      %v1307 = vsel %vm631, %v221, %v882
      %v1308 = vsel %vm631, %v222, %v884
      %v1309 = vsel %vm631, %v225, %v886
      %v1310 = vsel %vm631, %v226, %v888
      %v1311 = vsel %vm660, %v1283, %v918
      %v1312 = vsel %vm660, %v1284, %v920
      %v1313 = vsel %vm660, %v1285, %v922
      %v1314 = vsel %vm660, %v1286, %v924
      %v1315 = vsel %vm660, %v1287, %v926
      %v1316 = vsel %vm660, %v1288, %v928
      %v1317 = vsel %vm660, %v1289, %v930
      %v1318 = vsel %vm660, %v1290, %v932
      %v1319 = vsel %vm660, %v1291, %v934
      %v1320 = vsel %vm660, %v1292, %v936
      %v1321 = vsel %vm660, %v1293, %v938
      %v1322 = vsel %vm660, %v1294, %v940
      %v1323 = vsel %vm660, %v1295, %v942
      %v1324 = vsel %vm660, %v1296, %v944
      %v1325 = vsel %vm660, %v1297, %v946
      %v1326 = vsel %vm660, %v1298, %v948
      %v1327 = vsel %vm660, %v1299, %v950
      %v1328 = vsel %vm660, %v1300, %v952
      %v1329 = vsel %vm660, %v1301, %v954
      %v1330 = vsel %vm660, %v1302, %v956
      %v1331 = vsel %vm660, %v1303, %v958
      %v1332 = vsel %vm660, %v1304, %v960
      %v1333 = vsel %vm660, %v1305, %v962
      %v1334 = vsel %vm660, %v1306, %v964
      %v1335 = vsel %vm660, %v1307, %v966
      %v1336 = vsel %vm660, %v1308, %v968
      %v1337 = vsel %vm660, %v1309, %v970
      %v1338 = vsel %vm660, %v1310, %v972
      %v1339 = vsel %vm689, %v1311, %v1002
      %v1340 = vsel %vm689, %v1312, %v1004
      %v1341 = vsel %vm689, %v1313, %v1006
      %v1342 = vsel %vm689, %v1314, %v1008
      %v1343 = vsel %vm689, %v1315, %v1010
      %v1344 = vsel %vm689, %v1316, %v1012
      %v1345 = vsel %vm689, %v1317, %v1014
      %v1346 = vsel %vm689, %v1318, %v1016
      %v1347 = vsel %vm689, %v1319, %v1018
      %v1348 = vsel %vm689, %v1320, %v1020
      %v1349 = vsel %vm689, %v1321, %v1022
      %v1350 = vsel %vm689, %v1322, %v1024
      %v1351 = vsel %vm689, %v1323, %v1026
      %v1352 = vsel %vm689, %v1324, %v1028
      %v1353 = vsel %vm689, %v1325, %v1030
      %v1354 = vsel %vm689, %v1326, %v1032
      %v1355 = vsel %vm689, %v1327, %v1034
      %v1356 = vsel %vm689, %v1328, %v1036
      %v1357 = vsel %vm689, %v1329, %v1038
      %v1358 = vsel %vm689, %v1330, %v1040
      %v1359 = vsel %vm689, %v1331, %v1042
      %v1360 = vsel %vm689, %v1332, %v1044
      %v1361 = vsel %vm689, %v1333, %v1046
      %v1362 = vsel %vm689, %v1334, %v1048
      %v1363 = vsel %vm689, %v1335, %v1050
      %v1364 = vsel %vm689, %v1336, %v1052
      %v1365 = vsel %vm689, %v1337, %v1054
      %v1366 = vsel %vm689, %v1338, %v1056
      %v1367 = vsel %vm718, %v1339, %v1200
      %v1368 = vsel %vm718, %v1340, %v1202
      %v1369 = vsel %vm718, %v1341, %v1204
      %v1370 = vsel %vm718, %v1342, %v1206
      %v1371 = vsel %vm718, %v1343, %v1208
      %v1372 = vsel %vm718, %v1344, %v1210
      %v1373 = vsel %vm718, %v1345, %v1212
      %v1374 = vsel %vm718, %v1346, %v1214
      %v1375 = vsel %vm718, %v1347, %v1216
      %v1376 = vsel %vm718, %v1348, %v1218
      %v1377 = vsel %vm718, %v1349, %v1220
      %v1378 = vsel %vm718, %v1350, %v1222
      %v1379 = vsel %vm718, %v1351, %v1224
      %v1380 = vsel %vm718, %v1352, %v1226
      %v1381 = vsel %vm718, %v1353, %v1228
      %v1382 = vsel %vm718, %v1354, %v1230
      %v1383 = vsel %vm718, %v1355, %v1232
      %v1384 = vsel %vm718, %v1356, %v1234
      %v1385 = vsel %vm718, %v1357, %v1236
      %v1386 = vsel %vm718, %v1358, %v1238
      %v1387 = vsel %vm718, %v1359, %v1240
      %v1388 = vsel %vm718, %v1360, %v1242
      %v1389 = vsel %vm718, %v1361, %v1244
      %v1390 = vsel %vm718, %v1362, %v1246
      %v1391 = vsel %vm718, %v1363, %v1248
      %v1392 = vsel %vm718, %v1364, %v1250
      %v1393 = vsel %vm718, %v1365, %v1252
      %v1394 = vsel %vm718, %v1366, %v1254
      %1395 = vrot.lane.b32.xlu0 %v173, 123
      %v1396 = vpop.permute.xlu0 %1395
      %1397 = vrot.lane.b32.xlu0 %v174, 123
      %v1398 = vpop.permute.xlu0 %1397
      %1399 = vrot.lane.b32.xlu0 %v177, 123
      %v1400 = vpop.permute.xlu0 %1399
      %1401 = vrot.lane.b32.xlu0 %v178, 123
      %v1402 = vpop.permute.xlu0 %1401
      %1403 = vrot.lane.b32.xlu0 %v181, 123
      %v1404 = vpop.permute.xlu0 %1403
      %1405 = vrot.lane.b32.xlu0 %v182, 123
      %v1406 = vpop.permute.xlu0 %1405
      %1407 = vrot.lane.b32.xlu0 %v185, 123
      %v1408 = vpop.permute.xlu0 %1407
      %1409 = vrot.lane.b32.xlu0 %v186, 123
      %v1410 = vpop.permute.xlu0 %1409
      %1411 = vrot.lane.b32.xlu0 %v189, 123
      %v1412 = vpop.permute.xlu0 %1411
      %1413 = vrot.lane.b32.xlu0 %v190, 123
      %v1414 = vpop.permute.xlu0 %1413
      %1415 = vrot.lane.b32.xlu0 %v193, 123
      %v1416 = vpop.permute.xlu0 %1415
      %1417 = vrot.lane.b32.xlu0 %v194, 123
      %v1418 = vpop.permute.xlu0 %1417
      %1419 = vrot.lane.b32.xlu0 %v197, 123
      %v1420 = vpop.permute.xlu0 %1419
      %1421 = vrot.lane.b32.xlu0 %v198, 123
      %v1422 = vpop.permute.xlu0 %1421
      %1423 = vrot.lane.b32.xlu0 %v201, 123
      %v1424 = vpop.permute.xlu0 %1423
      %1425 = vrot.lane.b32.xlu0 %v202, 123
      %v1426 = vpop.permute.xlu0 %1425
      %1427 = vrot.lane.b32.xlu0 %v205, 123
      %v1428 = vpop.permute.xlu0 %1427
      %1429 = vrot.lane.b32.xlu0 %v206, 123
      %v1430 = vpop.permute.xlu0 %1429
      %1431 = vrot.lane.b32.xlu0 %v209, 123
      %v1432 = vpop.permute.xlu0 %1431
      %1433 = vrot.lane.b32.xlu0 %v210, 123
      %v1434 = vpop.permute.xlu0 %1433
      %1435 = vrot.lane.b32.xlu0 %v213, 123
      %v1436 = vpop.permute.xlu0 %1435
      %1437 = vrot.lane.b32.xlu0 %v214, 123
      %v1438 = vpop.permute.xlu0 %1437
      %1439 = vrot.lane.b32.xlu0 %v217, 123
      %v1440 = vpop.permute.xlu0 %1439
      %1441 = vrot.lane.b32.xlu0 %v218, 123
      %v1442 = vpop.permute.xlu0 %1441
      %1443 = vrot.lane.b32.xlu0 %v221, 123
      %v1444 = vpop.permute.xlu0 %1443
      %1445 = vrot.lane.b32.xlu0 %v222, 123
      %v1446 = vpop.permute.xlu0 %1445
      %1447 = vrot.lane.b32.xlu0 %v225, 123
      %v1448 = vpop.permute.xlu0 %1447
      %1449 = vrot.lane.b32.xlu0 %v226, 123
      %v1450 = vpop.permute.xlu0 %1449
      %1479 = vrot.lane.b32.xlu0 %v229, 5
      %v1480 = vpop.permute.xlu0 %1479
      %1481 = vrot.lane.b32.xlu0 %v230, 5
      %v1482 = vpop.permute.xlu0 %1481
      %1485 = vrot.lane.b32.xlu0 %v231, 10
      %v1486 = vpop.permute.xlu0 %1485
      %1487 = vrot.lane.b32.xlu0 %v232, 10
      %v1488 = vpop.permute.xlu0 %1487
      %1491 = vrot.lane.b32.xlu0 %v233, 15
      %v1492 = vpop.permute.xlu0 %1491
      %1493 = vrot.lane.b32.xlu0 %v234, 15
      %v1494 = vpop.permute.xlu0 %1493
      %v1497 = vsel %vm631, %v1396, %v175
      %v1498 = vsel %vm631, %v1398, %v176
      %v1499 = vsel %vm631, %v1400, %v179
      %v1500 = vsel %vm631, %v1402, %v180
      %v1501 = vsel %vm631, %v1404, %v183
      %v1502 = vsel %vm631, %v1406, %v184
      %v1503 = vsel %vm631, %v1408, %v187
      %v1504 = vsel %vm631, %v1410, %v188
      %v1505 = vsel %vm631, %v1412, %v191
      %v1506 = vsel %vm631, %v1414, %v192
      %v1507 = vsel %vm631, %v1416, %v195
      %v1508 = vsel %vm631, %v1418, %v196
      %v1509 = vsel %vm631, %v1420, %v199
      %v1510 = vsel %vm631, %v1422, %v200
      %v1511 = vsel %vm631, %v1424, %v203
      %v1512 = vsel %vm631, %v1426, %v204
      %v1513 = vsel %vm631, %v1428, %v207
      %v1514 = vsel %vm631, %v1430, %v208
      %v1515 = vsel %vm631, %v1432, %v211
      %v1516 = vsel %vm631, %v1434, %v212
      %v1517 = vsel %vm631, %v1436, %v215
      %v1518 = vsel %vm631, %v1438, %v216
      %v1519 = vsel %vm631, %v1440, %v219
      %v1520 = vsel %vm631, %v1442, %v220
      %v1521 = vsel %vm631, %v1444, %v223
      %v1522 = vsel %vm631, %v1446, %v224
      %v1523 = vsel %vm631, %v1448, %v227
      %v1524 = vsel %vm631, %v1450, %v228
      %v1525 = vsel %vm660, %v1497, %v268
      %v1526 = vsel %vm660, %v1498, %v270
      %v1527 = vsel %vm660, %v1499, %v272
      %v1528 = vsel %vm660, %v1500, %v274
      %v1529 = vsel %vm660, %v1501, %v276
      %v1530 = vsel %vm660, %v1502, %v278
      %v1531 = vsel %vm660, %v1503, %v280
      %v1532 = vsel %vm660, %v1504, %v282
      %v1533 = vsel %vm660, %v1505, %v284
      %v1534 = vsel %vm660, %v1506, %v286
      %v1535 = vsel %vm660, %v1507, %v288
      %v1536 = vsel %vm660, %v1508, %v290
      %v1537 = vsel %vm660, %v1509, %v292
      %v1538 = vsel %vm660, %v1510, %v294
      %v1539 = vsel %vm660, %v1511, %v296
      %v1540 = vsel %vm660, %v1512, %v298
      %v1541 = vsel %vm660, %v1513, %v300
      %v1542 = vsel %vm660, %v1514, %v302
      %v1543 = vsel %vm660, %v1515, %v304
      %v1544 = vsel %vm660, %v1516, %v306
      %v1545 = vsel %vm660, %v1517, %v308
      %v1546 = vsel %vm660, %v1518, %v310
      %v1547 = vsel %vm660, %v1519, %v312
      %v1548 = vsel %vm660, %v1520, %v314
      %v1549 = vsel %vm660, %v1521, %v316
      %v1550 = vsel %vm660, %v1522, %v318
      %v1551 = vsel %vm660, %v1523, %v1480
      %v1552 = vsel %vm660, %v1524, %v1482
      %v1553 = vsel %vm689, %v1525, %v380
      %v1554 = vsel %vm689, %v1526, %v382
      %v1555 = vsel %vm689, %v1527, %v384
      %v1556 = vsel %vm689, %v1528, %v386
      %v1557 = vsel %vm689, %v1529, %v388
      %v1558 = vsel %vm689, %v1530, %v390
      %v1559 = vsel %vm689, %v1531, %v392
      %v1560 = vsel %vm689, %v1532, %v394
      %v1561 = vsel %vm689, %v1533, %v396
      %v1562 = vsel %vm689, %v1534, %v398
      %v1563 = vsel %vm689, %v1535, %v400
      %v1564 = vsel %vm689, %v1536, %v402
      %v1565 = vsel %vm689, %v1537, %v404
      %v1566 = vsel %vm689, %v1538, %v406
      %v1567 = vsel %vm689, %v1539, %v408
      %v1568 = vsel %vm689, %v1540, %v410
      %v1569 = vsel %vm689, %v1541, %v412
      %v1570 = vsel %vm689, %v1542, %v414
      %v1571 = vsel %vm689, %v1543, %v416
      %v1572 = vsel %vm689, %v1544, %v418
      %v1573 = vsel %vm689, %v1545, %v420
      %v1574 = vsel %vm689, %v1546, %v422
      %v1575 = vsel %vm689, %v1547, %v424
      %v1576 = vsel %vm689, %v1548, %v426
      %v1577 = vsel %vm689, %v1549, %v428
      %v1578 = vsel %vm689, %v1550, %v430
      %v1579 = vsel %vm689, %v1551, %v1486
      %v1580 = vsel %vm689, %v1552, %v1488
      %v1581 = vsel %vm718, %v1553, %v466
      %v1582 = vsel %vm718, %v1554, %v468
      %v1583 = vsel %vm718, %v1555, %v470
      %v1584 = vsel %vm718, %v1556, %v472
      %v1585 = vsel %vm718, %v1557, %v474
      %v1586 = vsel %vm718, %v1558, %v476
      %v1587 = vsel %vm718, %v1559, %v478
      %v1588 = vsel %vm718, %v1560, %v480
      %v1589 = vsel %vm718, %v1561, %v482
      %v1590 = vsel %vm718, %v1562, %v484
      %v1591 = vsel %vm718, %v1563, %v486
      %v1592 = vsel %vm718, %v1564, %v488
      %v1593 = vsel %vm718, %v1565, %v490
      %v1594 = vsel %vm718, %v1566, %v492
      %v1595 = vsel %vm718, %v1567, %v494
      %v1596 = vsel %vm718, %v1568, %v496
      %v1597 = vsel %vm718, %v1569, %v498
      %v1598 = vsel %vm718, %v1570, %v500
      %v1599 = vsel %vm718, %v1571, %v502
      %v1600 = vsel %vm718, %v1572, %v504
      %v1601 = vsel %vm718, %v1573, %v506
      %v1602 = vsel %vm718, %v1574, %v508
      %v1603 = vsel %vm718, %v1575, %v510
      %v1604 = vsel %vm718, %v1576, %v512
      %v1605 = vsel %vm718, %v1577, %v514
      %v1606 = vsel %vm718, %v1578, %v516
      %v1607 = vsel %vm718, %v1579, %v1492
      %v1608 = vsel %vm718, %v1580, %v1494
      %v1609 = vld [vmem:[%s1] sm:$0xff]
      %v1610 = vld [vmem:[%s1 + $0x8] sm:$0xff]
      %v1611 = vld [vmem:[%s1 + $0x10] sm:$0xff]
      %v1612 = vld [vmem:[%s1 + $0x18] sm:$0x1]
      %vm1613 = vcmask 203776
      %v1615 = vsel %vm1613, %v719, 0
      %v1618 = vsel %vm1613, %v720, 0
      %v1621 = vsel %vm1613, %v721, 0
      %v1624 = vsel %vm1613, %v722, 0
      %v1627 = vsel %vm1613, %v723, 0
      %v1630 = vsel %vm1613, %v724, 0
      %v1633 = vsel %vm1613, %v725, 0
      %v1636 = vsel %vm1613, %v726, 0
      %v1639 = vsel %vm1613, %v727, 0
      %v1642 = vsel %vm1613, %v728, 0
      %v1645 = vsel %vm1613, %v729, 0
      %v1648 = vsel %vm1613, %v730, 0
      %v1651 = vsel %vm1613, %v731, 0
      %v1654 = vsel %vm1613, %v732, 0
      %v1657 = vsel %vm1613, %v733, 0
      %v1660 = vsel %vm1613, %v734, 0
      %v1663 = vsel %vm1613, %v735, 0
      %v1666 = vsel %vm1613, %v736, 0
      %v1669 = vsel %vm1613, %v737, 0
      %v1672 = vsel %vm1613, %v738, 0
      %v1675 = vsel %vm1613, %v739, 0
      %v1678 = vsel %vm1613, %v740, 0
      %v1681 = vsel %vm1613, %v741, 0
      %v1684 = vsel %vm1613, %v742, 0
      %v1687 = vsel %vm1613, %v743, 0
      %v1690 = vsel %vm1613, %v744, 0
      %v1693 = vsel %vm1613, %v745, 0
      %v1696 = vsel %vm1613, %v746, 0
      %v1699 = vsel %vm1613, %v1169, 0
      %v1702 = vsel %vm1613, %v1170, 0
      %v1705 = vsel %vm1613, %v1171, 0
      %v1708 = vsel %vm1613, %v1172, 0
      %v1711 = vsel %vm1613, %v1173, 0
      %v1714 = vsel %vm1613, %v1174, 0
      %v1717 = vsel %vm1613, %v1175, 0
      %v1720 = vsel %vm1613, %v1176, 0
      %v1723 = vsel %vm1613, %v1177, 0
      %v1726 = vsel %vm1613, %v1178, 0
      %v1729 = vsel %vm1613, %v1179, 0
      %v1732 = vsel %vm1613, %v1180, 0
      %v1735 = vsel %vm1613, %v1181, 0
      %v1738 = vsel %vm1613, %v1182, 0
      %v1741 = vsel %vm1613, %v1183, 0
      %v1744 = vsel %vm1613, %v1184, 0
      %v1747 = vsel %vm1613, %v1185, 0
      %v1750 = vsel %vm1613, %v1186, 0
      %v1753 = vsel %vm1613, %v1187, 0
      %v1756 = vsel %vm1613, %v1188, 0
      %v1759 = vsel %vm1613, %v1189, 0
      %v1762 = vsel %vm1613, %v1190, 0
      %v1765 = vsel %vm1613, %v1191, 0
      %v1768 = vsel %vm1613, %v1192, 0
      %v1771 = vsel %vm1613, %v1193, 0
      %v1774 = vsel %vm1613, %v1194, 0
      %v1777 = vsel %vm1613, %v1195, 0
      %v1780 = vsel %vm1613, %v1196, 0
      %v1783 = vsel %vm1613, %v1367, 0
      %v1786 = vsel %vm1613, %v1368, 0
      %v1789 = vsel %vm1613, %v1369, 0
      %v1792 = vsel %vm1613, %v1370, 0
      %v1795 = vsel %vm1613, %v1371, 0
      %v1798 = vsel %vm1613, %v1372, 0
      %v1801 = vsel %vm1613, %v1373, 0
      %v1804 = vsel %vm1613, %v1374, 0
      %v1807 = vsel %vm1613, %v1375, 0
      %v1810 = vsel %vm1613, %v1376, 0
      %v1813 = vsel %vm1613, %v1377, 0
      %v1816 = vsel %vm1613, %v1378, 0
      %v1819 = vsel %vm1613, %v1379, 0
      %v1822 = vsel %vm1613, %v1380, 0
      %v1825 = vsel %vm1613, %v1381, 0
      %v1828 = vsel %vm1613, %v1382, 0
      %v1831 = vsel %vm1613, %v1383, 0
      %v1834 = vsel %vm1613, %v1384, 0
      %v1837 = vsel %vm1613, %v1385, 0
      %v1840 = vsel %vm1613, %v1386, 0
      %v1843 = vsel %vm1613, %v1387, 0
      %v1846 = vsel %vm1613, %v1388, 0
      %v1849 = vsel %vm1613, %v1389, 0
      %v1852 = vsel %vm1613, %v1390, 0
      %v1855 = vsel %vm1613, %v1391, 0
      %v1858 = vsel %vm1613, %v1392, 0
      %v1861 = vsel %vm1613, %v1393, 0
      %v1864 = vsel %vm1613, %v1394, 0
      %v1867 = vsel %vm1613, %v1581, 0
      %v1870 = vsel %vm1613, %v1582, 0
      %v1873 = vsel %vm1613, %v1583, 0
      %v1876 = vsel %vm1613, %v1584, 0
      %v1879 = vsel %vm1613, %v1585, 0
      %v1882 = vsel %vm1613, %v1586, 0
      %v1885 = vsel %vm1613, %v1587, 0
      %v1888 = vsel %vm1613, %v1588, 0
      %v1891 = vsel %vm1613, %v1589, 0
      %v1894 = vsel %vm1613, %v1590, 0
      %v1897 = vsel %vm1613, %v1591, 0
      %v1900 = vsel %vm1613, %v1592, 0
      %v1903 = vsel %vm1613, %v1593, 0
      %v1906 = vsel %vm1613, %v1594, 0
      %v1909 = vsel %vm1613, %v1595, 0
      %v1912 = vsel %vm1613, %v1596, 0
      %v1915 = vsel %vm1613, %v1597, 0
      %v1918 = vsel %vm1613, %v1598, 0
      %v1921 = vsel %vm1613, %v1599, 0
      %v1924 = vsel %vm1613, %v1600, 0
      %v1927 = vsel %vm1613, %v1601, 0
      %v1930 = vsel %vm1613, %v1602, 0
      %v1933 = vsel %vm1613, %v1603, 0
      %v1936 = vsel %vm1613, %v1604, 0
      %v1939 = vsel %vm1613, %v1605, 0
      %v1942 = vsel %vm1613, %v1606, 0
      %v1945 = vsel %vm1613, %v1607, 0
      %v1948 = vsel %vm1613, %v1608, 0
      %vm1950 = vcmask 1040384
      %v1952 = vsel %vm1950, %v1612, 0
      %1954 = vmatpush.msra.mxu0 0.0
      %1955 = vmatpush.msra.mxu0 0.0
      %1956 = vmatpush.msra.mxu0 0.0
      %1957 = vmatpush.msra.mxu0 0.0
      %1958 = vmatpush.msra.mxu0 0.0
      %1959 = vmatpush.msra.mxu0 0.0
      %1960 = vmatpush.msra.mxu0 0.0
      %1961 = vmatpush.msra.mxu0 0.0
      %1962 = vmatpush.msra.mxu0 0.0
      %1963 = vmatpush.msra.mxu0 0.0
      %1964 = vmatpush.msra.mxu0 0.0
      %1965 = vmatpush.msra.mxu0 0.0
      %1966 = vmatpush.msra.mxu0 %v1952
      %1967 = vmatpush.msra.mxu0 %v1611
      %1968 = vmatpush.msra.mxu0 %v1610
      %1969 = vmatpush.msra.mxu0 %v1609
      %1970 = vmatmul.f32.gmra.mxu0 %v1615
      %v1971 = vpop.f32.mrf.mxu0
      %v1972 = vadd.f32 0.0, %v1971
      %1973 = vmatmul.f32.gmra.mxu0 %v1618
      %v1974 = vpop.f32.mrf.mxu0
      %v1975 = vadd.f32 0.0, %v1974
      %1976 = vmatmul.f32.gmra.mxu0 %v1621
      %v1977 = vpop.f32.mrf.mxu0
      %v1978 = vadd.f32 0.0, %v1977
      %1979 = vmatmul.f32.gmra.mxu0 %v1624
      %v1980 = vpop.f32.mrf.mxu0
      %v1981 = vadd.f32 0.0, %v1980
      %1982 = vmatmul.f32.gmra.mxu0 %v1627
      %v1983 = vpop.f32.mrf.mxu0
      %v1984 = vadd.f32 0.0, %v1983
      %1985 = vmatmul.f32.gmra.mxu0 %v1630
      %v1986 = vpop.f32.mrf.mxu0
      %v1987 = vadd.f32 0.0, %v1986
      %1988 = vmatmul.f32.gmra.mxu0 %v1633
      %v1989 = vpop.f32.mrf.mxu0
      %v1990 = vadd.f32 0.0, %v1989
      %1991 = vmatmul.f32.gmra.mxu0 %v1636
      %v1992 = vpop.f32.mrf.mxu0
      %v1993 = vadd.f32 0.0, %v1992
      %1994 = vmatmul.f32.gmra.mxu0 %v1639
      %v1995 = vpop.f32.mrf.mxu0
      %v1996 = vadd.f32 0.0, %v1995
      %1997 = vmatmul.f32.gmra.mxu0 %v1642
      %v1998 = vpop.f32.mrf.mxu0
      %v1999 = vadd.f32 0.0, %v1998
      %2000 = vmatmul.f32.gmra.mxu0 %v1645
      %v2001 = vpop.f32.mrf.mxu0
      %v2002 = vadd.f32 0.0, %v2001
      %2003 = vmatmul.f32.gmra.mxu0 %v1648
      %v2004 = vpop.f32.mrf.mxu0
      %v2005 = vadd.f32 0.0, %v2004
      %2006 = vmatmul.f32.gmra.mxu0 %v1651
      %v2007 = vpop.f32.mrf.mxu0
      %v2008 = vadd.f32 0.0, %v2007
      %2009 = vmatmul.f32.gmra.mxu0 %v1654
      %v2010 = vpop.f32.mrf.mxu0
      %v2011 = vadd.f32 0.0, %v2010
      %2012 = vmatmul.f32.gmra.mxu0 %v1657
      %v2013 = vpop.f32.mrf.mxu0
      %v2014 = vadd.f32 0.0, %v2013
      %2015 = vmatmul.f32.gmra.mxu0 %v1660
      %v2016 = vpop.f32.mrf.mxu0
      %v2017 = vadd.f32 0.0, %v2016
      %2018 = vmatmul.f32.gmra.mxu0 %v1663
      %v2019 = vpop.f32.mrf.mxu0
      %v2020 = vadd.f32 0.0, %v2019
      %2021 = vmatmul.f32.gmra.mxu0 %v1666
      %v2022 = vpop.f32.mrf.mxu0
      %v2023 = vadd.f32 0.0, %v2022
      %2024 = vmatmul.f32.gmra.mxu0 %v1669
      %v2025 = vpop.f32.mrf.mxu0
      %v2026 = vadd.f32 0.0, %v2025
      %2027 = vmatmul.f32.gmra.mxu0 %v1672
      %v2028 = vpop.f32.mrf.mxu0
      %v2029 = vadd.f32 0.0, %v2028
      %2030 = vmatmul.f32.gmra.mxu0 %v1675
      %v2031 = vpop.f32.mrf.mxu0
      %v2032 = vadd.f32 0.0, %v2031
      %2033 = vmatmul.f32.gmra.mxu0 %v1678
      %v2034 = vpop.f32.mrf.mxu0
      %v2035 = vadd.f32 0.0, %v2034
      %2036 = vmatmul.f32.gmra.mxu0 %v1681
      %v2037 = vpop.f32.mrf.mxu0
      %v2038 = vadd.f32 0.0, %v2037
      %2039 = vmatmul.f32.gmra.mxu0 %v1684
      %v2040 = vpop.f32.mrf.mxu0
      %v2041 = vadd.f32 0.0, %v2040
      %2042 = vmatmul.f32.gmra.mxu0 %v1687
      %v2043 = vpop.f32.mrf.mxu0
      %v2044 = vadd.f32 0.0, %v2043
      %2045 = vmatmul.f32.gmra.mxu0 %v1690
      %v2046 = vpop.f32.mrf.mxu0
      %v2047 = vadd.f32 0.0, %v2046
      %2048 = vmatmul.f32.gmra.mxu0 %v1693
      %v2049 = vpop.f32.mrf.mxu0
      %v2050 = vadd.f32 0.0, %v2049
      %2051 = vmatmul.f32.gmra.mxu0 %v1696
      %v2052 = vpop.f32.mrf.mxu0
      %v2053 = vadd.f32 0.0, %v2052
      %2054 = vmatmul.f32.gmra.mxu0 %v1699
      %v2055 = vpop.f32.mrf.mxu0
      %v2056 = vadd.f32 0.0, %v2055
      %2057 = vmatmul.f32.gmra.mxu0 %v1702
      %v2058 = vpop.f32.mrf.mxu0
      %v2059 = vadd.f32 0.0, %v2058
      %2060 = vmatmul.f32.gmra.mxu0 %v1705
      %v2061 = vpop.f32.mrf.mxu0
      %v2062 = vadd.f32 0.0, %v2061
      %2063 = vmatmul.f32.gmra.mxu0 %v1708
      %v2064 = vpop.f32.mrf.mxu0
      %v2065 = vadd.f32 0.0, %v2064
      %2066 = vmatmul.f32.gmra.mxu0 %v1711
      %v2067 = vpop.f32.mrf.mxu0
      %v2068 = vadd.f32 0.0, %v2067
      %2069 = vmatmul.f32.gmra.mxu0 %v1714
      %v2070 = vpop.f32.mrf.mxu0
      %v2071 = vadd.f32 0.0, %v2070
      %2072 = vmatmul.f32.gmra.mxu0 %v1717
      %v2073 = vpop.f32.mrf.mxu0
      %v2074 = vadd.f32 0.0, %v2073
      %2075 = vmatmul.f32.gmra.mxu0 %v1720
      %v2076 = vpop.f32.mrf.mxu0
      %v2077 = vadd.f32 0.0, %v2076
      %2078 = vmatmul.f32.gmra.mxu0 %v1723
      %v2079 = vpop.f32.mrf.mxu0
      %v2080 = vadd.f32 0.0, %v2079
      %2081 = vmatmul.f32.gmra.mxu0 %v1726
      %v2082 = vpop.f32.mrf.mxu0
      %v2083 = vadd.f32 0.0, %v2082
      %2084 = vmatmul.f32.gmra.mxu0 %v1729
      %v2085 = vpop.f32.mrf.mxu0
      %v2086 = vadd.f32 0.0, %v2085
      %2087 = vmatmul.f32.gmra.mxu0 %v1732
      %v2088 = vpop.f32.mrf.mxu0
      %v2089 = vadd.f32 0.0, %v2088
      %2090 = vmatmul.f32.gmra.mxu0 %v1735
      %v2091 = vpop.f32.mrf.mxu0
      %v2092 = vadd.f32 0.0, %v2091
      %2093 = vmatmul.f32.gmra.mxu0 %v1738
      %v2094 = vpop.f32.mrf.mxu0
      %v2095 = vadd.f32 0.0, %v2094
      %2096 = vmatmul.f32.gmra.mxu0 %v1741
      %v2097 = vpop.f32.mrf.mxu0
      %v2098 = vadd.f32 0.0, %v2097
      %2099 = vmatmul.f32.gmra.mxu0 %v1744
      %v2100 = vpop.f32.mrf.mxu0
      %v2101 = vadd.f32 0.0, %v2100
      %2102 = vmatmul.f32.gmra.mxu0 %v1747
      %v2103 = vpop.f32.mrf.mxu0
      %v2104 = vadd.f32 0.0, %v2103
      %2105 = vmatmul.f32.gmra.mxu0 %v1750
      %v2106 = vpop.f32.mrf.mxu0
      %v2107 = vadd.f32 0.0, %v2106
      %2108 = vmatmul.f32.gmra.mxu0 %v1753
      %v2109 = vpop.f32.mrf.mxu0
      %v2110 = vadd.f32 0.0, %v2109
      %2111 = vmatmul.f32.gmra.mxu0 %v1756
      %v2112 = vpop.f32.mrf.mxu0
      %v2113 = vadd.f32 0.0, %v2112
      %2114 = vmatmul.f32.gmra.mxu0 %v1759
      %v2115 = vpop.f32.mrf.mxu0
      %v2116 = vadd.f32 0.0, %v2115
      %2117 = vmatmul.f32.gmra.mxu0 %v1762
      %v2118 = vpop.f32.mrf.mxu0
      %v2119 = vadd.f32 0.0, %v2118
      %2120 = vmatmul.f32.gmra.mxu0 %v1765
      %v2121 = vpop.f32.mrf.mxu0
      %v2122 = vadd.f32 0.0, %v2121
      %2123 = vmatmul.f32.gmra.mxu0 %v1768
      %v2124 = vpop.f32.mrf.mxu0
      %v2125 = vadd.f32 0.0, %v2124
      %2126 = vmatmul.f32.gmra.mxu0 %v1771
      %v2127 = vpop.f32.mrf.mxu0
      %v2128 = vadd.f32 0.0, %v2127
      %2129 = vmatmul.f32.gmra.mxu0 %v1774
      %v2130 = vpop.f32.mrf.mxu0
      %v2131 = vadd.f32 0.0, %v2130
      %2132 = vmatmul.f32.gmra.mxu0 %v1777
      %v2133 = vpop.f32.mrf.mxu0
      %v2134 = vadd.f32 0.0, %v2133
      %2135 = vmatmul.f32.gmra.mxu0 %v1780
      %v2136 = vpop.f32.mrf.mxu0
      %v2137 = vadd.f32 0.0, %v2136
      %2138 = vmatmul.f32.gmra.mxu0 %v1783
      %v2139 = vpop.f32.mrf.mxu0
      %v2140 = vadd.f32 0.0, %v2139
      %2141 = vmatmul.f32.gmra.mxu0 %v1786
      %v2142 = vpop.f32.mrf.mxu0
      %v2143 = vadd.f32 0.0, %v2142
      %2144 = vmatmul.f32.gmra.mxu0 %v1789
      %v2145 = vpop.f32.mrf.mxu0
      %v2146 = vadd.f32 0.0, %v2145
      %2147 = vmatmul.f32.gmra.mxu0 %v1792
      %v2148 = vpop.f32.mrf.mxu0
      %v2149 = vadd.f32 0.0, %v2148
      %2150 = vmatmul.f32.gmra.mxu0 %v1795
      %v2151 = vpop.f32.mrf.mxu0
      %v2152 = vadd.f32 0.0, %v2151
      %2153 = vmatmul.f32.gmra.mxu0 %v1798
      %v2154 = vpop.f32.mrf.mxu0
      %v2155 = vadd.f32 0.0, %v2154
      %2156 = vmatmul.f32.gmra.mxu0 %v1801
      %v2157 = vpop.f32.mrf.mxu0
      %v2158 = vadd.f32 0.0, %v2157
      %2159 = vmatmul.f32.gmra.mxu0 %v1804
      %v2160 = vpop.f32.mrf.mxu0
      %v2161 = vadd.f32 0.0, %v2160
      %2162 = vmatmul.f32.gmra.mxu0 %v1807
      %v2163 = vpop.f32.mrf.mxu0
      %v2164 = vadd.f32 0.0, %v2163
      %2165 = vmatmul.f32.gmra.mxu0 %v1810
      %v2166 = vpop.f32.mrf.mxu0
      %v2167 = vadd.f32 0.0, %v2166
      %2168 = vmatmul.f32.gmra.mxu0 %v1813
      %v2169 = vpop.f32.mrf.mxu0
      %v2170 = vadd.f32 0.0, %v2169
      %2171 = vmatmul.f32.gmra.mxu0 %v1816
      %v2172 = vpop.f32.mrf.mxu0
      %v2173 = vadd.f32 0.0, %v2172
      %2174 = vmatmul.f32.gmra.mxu0 %v1819
      %v2175 = vpop.f32.mrf.mxu0
      %v2176 = vadd.f32 0.0, %v2175
      %2177 = vmatmul.f32.gmra.mxu0 %v1822
      %v2178 = vpop.f32.mrf.mxu0
      %v2179 = vadd.f32 0.0, %v2178
      %2180 = vmatmul.f32.gmra.mxu0 %v1825
      %v2181 = vpop.f32.mrf.mxu0
      %v2182 = vadd.f32 0.0, %v2181
      %2183 = vmatmul.f32.gmra.mxu0 %v1828
      %v2184 = vpop.f32.mrf.mxu0
      %v2185 = vadd.f32 0.0, %v2184
      %2186 = vmatmul.f32.gmra.mxu0 %v1831
      %v2187 = vpop.f32.mrf.mxu0
      %v2188 = vadd.f32 0.0, %v2187
      %2189 = vmatmul.f32.gmra.mxu0 %v1834
      %v2190 = vpop.f32.mrf.mxu0
      %v2191 = vadd.f32 0.0, %v2190
      %2192 = vmatmul.f32.gmra.mxu0 %v1837
      %v2193 = vpop.f32.mrf.mxu0
      %v2194 = vadd.f32 0.0, %v2193
      %2195 = vmatmul.f32.gmra.mxu0 %v1840
      %v2196 = vpop.f32.mrf.mxu0
      %v2197 = vadd.f32 0.0, %v2196
      %2198 = vmatmul.f32.gmra.mxu0 %v1843
      %v2199 = vpop.f32.mrf.mxu0
      %v2200 = vadd.f32 0.0, %v2199
      %2201 = vmatmul.f32.gmra.mxu0 %v1846
      %v2202 = vpop.f32.mrf.mxu0
      %v2203 = vadd.f32 0.0, %v2202
      %2204 = vmatmul.f32.gmra.mxu0 %v1849
      %v2205 = vpop.f32.mrf.mxu0
      %v2206 = vadd.f32 0.0, %v2205
      %2207 = vmatmul.f32.gmra.mxu0 %v1852
      %v2208 = vpop.f32.mrf.mxu0
      %v2209 = vadd.f32 0.0, %v2208
      %2210 = vmatmul.f32.gmra.mxu0 %v1855
      %v2211 = vpop.f32.mrf.mxu0
      %v2212 = vadd.f32 0.0, %v2211
      %2213 = vmatmul.f32.gmra.mxu0 %v1858
      %v2214 = vpop.f32.mrf.mxu0
      %v2215 = vadd.f32 0.0, %v2214
      %2216 = vmatmul.f32.gmra.mxu0 %v1861
      %v2217 = vpop.f32.mrf.mxu0
      %v2218 = vadd.f32 0.0, %v2217
      %2219 = vmatmul.f32.gmra.mxu0 %v1864
      %v2220 = vpop.f32.mrf.mxu0
      %v2221 = vadd.f32 0.0, %v2220
      %2222 = vmatmul.f32.gmra.mxu0 %v1867
      %v2223 = vpop.f32.mrf.mxu0
      %v2224 = vadd.f32 0.0, %v2223
      %2225 = vmatmul.f32.gmra.mxu0 %v1870
      %v2226 = vpop.f32.mrf.mxu0
      %v2227 = vadd.f32 0.0, %v2226
      %2228 = vmatmul.f32.gmra.mxu0 %v1873
      %v2229 = vpop.f32.mrf.mxu0
      %v2230 = vadd.f32 0.0, %v2229
      %2231 = vmatmul.f32.gmra.mxu0 %v1876
      %v2232 = vpop.f32.mrf.mxu0
      %v2233 = vadd.f32 0.0, %v2232
      %2234 = vmatmul.f32.gmra.mxu0 %v1879
      %v2235 = vpop.f32.mrf.mxu0
      %v2236 = vadd.f32 0.0, %v2235
      %2237 = vmatmul.f32.gmra.mxu0 %v1882
      %v2238 = vpop.f32.mrf.mxu0
      %v2239 = vadd.f32 0.0, %v2238
      %2240 = vmatmul.f32.gmra.mxu0 %v1885
      %v2241 = vpop.f32.mrf.mxu0
      %v2242 = vadd.f32 0.0, %v2241
      %2243 = vmatmul.f32.gmra.mxu0 %v1888
      %v2244 = vpop.f32.mrf.mxu0
      %v2245 = vadd.f32 0.0, %v2244
      %2246 = vmatmul.f32.gmra.mxu0 %v1891
      %v2247 = vpop.f32.mrf.mxu0
      %v2248 = vadd.f32 0.0, %v2247
      %2249 = vmatmul.f32.gmra.mxu0 %v1894
      %v2250 = vpop.f32.mrf.mxu0
      %v2251 = vadd.f32 0.0, %v2250
      %2252 = vmatmul.f32.gmra.mxu0 %v1897
      %v2253 = vpop.f32.mrf.mxu0
      %v2254 = vadd.f32 0.0, %v2253
      %2255 = vmatmul.f32.gmra.mxu0 %v1900
      %v2256 = vpop.f32.mrf.mxu0
      %v2257 = vadd.f32 0.0, %v2256
      %2258 = vmatmul.f32.gmra.mxu0 %v1903
      %v2259 = vpop.f32.mrf.mxu0
      %v2260 = vadd.f32 0.0, %v2259
      %2261 = vmatmul.f32.gmra.mxu0 %v1906
      %v2262 = vpop.f32.mrf.mxu0
      %v2263 = vadd.f32 0.0, %v2262
      %2264 = vmatmul.f32.gmra.mxu0 %v1909
      %v2265 = vpop.f32.mrf.mxu0
      %v2266 = vadd.f32 0.0, %v2265
      %2267 = vmatmul.f32.gmra.mxu0 %v1912
      %v2268 = vpop.f32.mrf.mxu0
      %v2269 = vadd.f32 0.0, %v2268
      %2270 = vmatmul.f32.gmra.mxu0 %v1915
      %v2271 = vpop.f32.mrf.mxu0
      %v2272 = vadd.f32 0.0, %v2271
      %2273 = vmatmul.f32.gmra.mxu0 %v1918
      %v2274 = vpop.f32.mrf.mxu0
      %v2275 = vadd.f32 0.0, %v2274
      %2276 = vmatmul.f32.gmra.mxu0 %v1921
      %v2277 = vpop.f32.mrf.mxu0
      %v2278 = vadd.f32 0.0, %v2277
      %2279 = vmatmul.f32.gmra.mxu0 %v1924
      %v2280 = vpop.f32.mrf.mxu0
      %v2281 = vadd.f32 0.0, %v2280
      %2282 = vmatmul.f32.gmra.mxu0 %v1927
      %v2283 = vpop.f32.mrf.mxu0
      %v2284 = vadd.f32 0.0, %v2283
      %2285 = vmatmul.f32.gmra.mxu0 %v1930
      %v2286 = vpop.f32.mrf.mxu0
      %v2287 = vadd.f32 0.0, %v2286
      %2288 = vmatmul.f32.gmra.mxu0 %v1933
      %v2289 = vpop.f32.mrf.mxu0
      %v2290 = vadd.f32 0.0, %v2289
      %2291 = vmatmul.f32.gmra.mxu0 %v1936
      %v2292 = vpop.f32.mrf.mxu0
      %v2293 = vadd.f32 0.0, %v2292
      %2294 = vmatmul.f32.gmra.mxu0 %v1939
      %v2295 = vpop.f32.mrf.mxu0
      %v2296 = vadd.f32 0.0, %v2295
      %2297 = vmatmul.f32.gmra.mxu0 %v1942
      %v2298 = vpop.f32.mrf.mxu0
      %v2299 = vadd.f32 0.0, %v2298
      %2300 = vmatmul.f32.gmra.mxu0 %v1945
      %v2301 = vpop.f32.mrf.mxu0
      %v2302 = vadd.f32 0.0, %v2301
      %2303 = vmatmul.f32.gmra.mxu0 %v1948
      %v2304 = vpop.f32.mrf.mxu0
      %v2305 = vadd.f32 0.0, %v2304
      %2306 = vdwg.mxu0
      %vm2307 = vcmask 48128
      %v2308 = vsel %vm2307, %v1972, -inf
      %v2309 = vsel %vm2307, %v2056, -inf
      %v2310 = vmax.f32 %v2308, %v2309
      %v2311 = vsel %vm2307, %v2140, -inf
      %v2312 = vmax.f32 %v2310, %v2311
      %v2313 = vsel %vm2307, %v2224, -inf
      %v2314 = vmax.f32 %v2312, %v2313
      %v2315 = vsel %vm2307, %v1975, -inf
      %v2316 = vsel %vm2307, %v2059, -inf
      %v2317 = vmax.f32 %v2315, %v2316
      %v2318 = vsel %vm2307, %v2143, -inf
      %v2319 = vmax.f32 %v2317, %v2318
      %v2320 = vsel %vm2307, %v2227, -inf
      %v2321 = vmax.f32 %v2319, %v2320
      %v2322 = vsel %vm2307, %v1978, -inf
      %v2323 = vsel %vm2307, %v2062, -inf
      %v2324 = vmax.f32 %v2322, %v2323
      %v2325 = vsel %vm2307, %v2146, -inf
      %v2326 = vmax.f32 %v2324, %v2325
      %v2327 = vsel %vm2307, %v2230, -inf
      %v2328 = vmax.f32 %v2326, %v2327
      %v2329 = vsel %vm2307, %v1981, -inf
      %v2330 = vsel %vm2307, %v2065, -inf
      %v2331 = vmax.f32 %v2329, %v2330
      %v2332 = vsel %vm2307, %v2149, -inf
      %v2333 = vmax.f32 %v2331, %v2332
      %v2334 = vsel %vm2307, %v2233, -inf
      %v2335 = vmax.f32 %v2333, %v2334
      %v2336 = vsel %vm2307, %v1984, -inf
      %v2337 = vsel %vm2307, %v2068, -inf
      %v2338 = vmax.f32 %v2336, %v2337
      %v2339 = vsel %vm2307, %v2152, -inf
      %v2340 = vmax.f32 %v2338, %v2339
      %v2341 = vsel %vm2307, %v2236, -inf
      %v2342 = vmax.f32 %v2340, %v2341
      %v2343 = vsel %vm2307, %v1987, -inf
      %v2344 = vsel %vm2307, %v2071, -inf
      %v2345 = vmax.f32 %v2343, %v2344
      %v2346 = vsel %vm2307, %v2155, -inf
      %v2347 = vmax.f32 %v2345, %v2346
      %v2348 = vsel %vm2307, %v2239, -inf
      %v2349 = vmax.f32 %v2347, %v2348
      %v2350 = vsel %vm2307, %v1990, -inf
      %v2351 = vsel %vm2307, %v2074, -inf
      %v2352 = vmax.f32 %v2350, %v2351
      %v2353 = vsel %vm2307, %v2158, -inf
      %v2354 = vmax.f32 %v2352, %v2353
      %v2355 = vsel %vm2307, %v2242, -inf
      %v2356 = vmax.f32 %v2354, %v2355
      %v2357 = vsel %vm2307, %v1993, -inf
      %v2358 = vsel %vm2307, %v2077, -inf
      %v2359 = vmax.f32 %v2357, %v2358
      %v2360 = vsel %vm2307, %v2161, -inf
      %v2361 = vmax.f32 %v2359, %v2360
      %v2362 = vsel %vm2307, %v2245, -inf
      %v2363 = vmax.f32 %v2361, %v2362
      %v2364 = vsel %vm2307, %v1996, -inf
      %v2365 = vsel %vm2307, %v2080, -inf
      %v2366 = vmax.f32 %v2364, %v2365
      %v2367 = vsel %vm2307, %v2164, -inf
      %v2368 = vmax.f32 %v2366, %v2367
      %v2369 = vsel %vm2307, %v2248, -inf
      %v2370 = vmax.f32 %v2368, %v2369
      %v2371 = vsel %vm2307, %v1999, -inf
      %v2372 = vsel %vm2307, %v2083, -inf
      %v2373 = vmax.f32 %v2371, %v2372
      %v2374 = vsel %vm2307, %v2167, -inf
      %v2375 = vmax.f32 %v2373, %v2374
      %v2376 = vsel %vm2307, %v2251, -inf
      %v2377 = vmax.f32 %v2375, %v2376
      %v2378 = vsel %vm2307, %v2002, -inf
      %v2379 = vsel %vm2307, %v2086, -inf
      %v2380 = vmax.f32 %v2378, %v2379
      %v2381 = vsel %vm2307, %v2170, -inf
      %v2382 = vmax.f32 %v2380, %v2381
      %v2383 = vsel %vm2307, %v2254, -inf
      %v2384 = vmax.f32 %v2382, %v2383
      %v2385 = vsel %vm2307, %v2005, -inf
      %v2386 = vsel %vm2307, %v2089, -inf
      %v2387 = vmax.f32 %v2385, %v2386
      %v2388 = vsel %vm2307, %v2173, -inf
      %v2389 = vmax.f32 %v2387, %v2388
      %v2390 = vsel %vm2307, %v2257, -inf
      %v2391 = vmax.f32 %v2389, %v2390
      %v2392 = vsel %vm2307, %v2008, -inf
      %v2393 = vsel %vm2307, %v2092, -inf
      %v2394 = vmax.f32 %v2392, %v2393
      %v2395 = vsel %vm2307, %v2176, -inf
      %v2396 = vmax.f32 %v2394, %v2395
      %v2397 = vsel %vm2307, %v2260, -inf
      %v2398 = vmax.f32 %v2396, %v2397
      %v2399 = vsel %vm2307, %v2011, -inf
      %v2400 = vsel %vm2307, %v2095, -inf
      %v2401 = vmax.f32 %v2399, %v2400
      %v2402 = vsel %vm2307, %v2179, -inf
      %v2403 = vmax.f32 %v2401, %v2402
      %v2404 = vsel %vm2307, %v2263, -inf
      %v2405 = vmax.f32 %v2403, %v2404
      %v2406 = vsel %vm2307, %v2014, -inf
      %v2407 = vsel %vm2307, %v2098, -inf
      %v2408 = vmax.f32 %v2406, %v2407
      %v2409 = vsel %vm2307, %v2182, -inf
      %v2410 = vmax.f32 %v2408, %v2409
      %v2411 = vsel %vm2307, %v2266, -inf
      %v2412 = vmax.f32 %v2410, %v2411
      %v2413 = vsel %vm2307, %v2017, -inf
      %v2414 = vsel %vm2307, %v2101, -inf
      %v2415 = vmax.f32 %v2413, %v2414
      %v2416 = vsel %vm2307, %v2185, -inf
      %v2417 = vmax.f32 %v2415, %v2416
      %v2418 = vsel %vm2307, %v2269, -inf
      %v2419 = vmax.f32 %v2417, %v2418
      %v2420 = vsel %vm2307, %v2020, -inf
      %v2421 = vsel %vm2307, %v2104, -inf
      %v2422 = vmax.f32 %v2420, %v2421
      %v2423 = vsel %vm2307, %v2188, -inf
      %v2424 = vmax.f32 %v2422, %v2423
      %v2425 = vsel %vm2307, %v2272, -inf
      %v2426 = vmax.f32 %v2424, %v2425
      %v2427 = vsel %vm2307, %v2023, -inf
      %v2428 = vsel %vm2307, %v2107, -inf
      %v2429 = vmax.f32 %v2427, %v2428
      %v2430 = vsel %vm2307, %v2191, -inf
      %v2431 = vmax.f32 %v2429, %v2430
      %v2432 = vsel %vm2307, %v2275, -inf
      %v2433 = vmax.f32 %v2431, %v2432
      %v2434 = vsel %vm2307, %v2026, -inf
      %v2435 = vsel %vm2307, %v2110, -inf
      %v2436 = vmax.f32 %v2434, %v2435
      %v2437 = vsel %vm2307, %v2194, -inf
      %v2438 = vmax.f32 %v2436, %v2437
      %v2439 = vsel %vm2307, %v2278, -inf
      %v2440 = vmax.f32 %v2438, %v2439
      %v2441 = vsel %vm2307, %v2029, -inf
      %v2442 = vsel %vm2307, %v2113, -inf
      %v2443 = vmax.f32 %v2441, %v2442
      %v2444 = vsel %vm2307, %v2197, -inf
      %v2445 = vmax.f32 %v2443, %v2444
      %v2446 = vsel %vm2307, %v2281, -inf
      %v2447 = vmax.f32 %v2445, %v2446
      %v2448 = vsel %vm2307, %v2032, -inf
      %v2449 = vsel %vm2307, %v2116, -inf
      %v2450 = vmax.f32 %v2448, %v2449
      %v2451 = vsel %vm2307, %v2200, -inf
      %v2452 = vmax.f32 %v2450, %v2451
      %v2453 = vsel %vm2307, %v2284, -inf
      %v2454 = vmax.f32 %v2452, %v2453
      %v2455 = vsel %vm2307, %v2035, -inf
      %v2456 = vsel %vm2307, %v2119, -inf
      %v2457 = vmax.f32 %v2455, %v2456
      %v2458 = vsel %vm2307, %v2203, -inf
      %v2459 = vmax.f32 %v2457, %v2458
      %v2460 = vsel %vm2307, %v2287, -inf
      %v2461 = vmax.f32 %v2459, %v2460
      %v2462 = vsel %vm2307, %v2038, -inf
      %v2463 = vsel %vm2307, %v2122, -inf
      %v2464 = vmax.f32 %v2462, %v2463
      %v2465 = vsel %vm2307, %v2206, -inf
      %v2466 = vmax.f32 %v2464, %v2465
      %v2467 = vsel %vm2307, %v2290, -inf
      %v2468 = vmax.f32 %v2466, %v2467
      %v2469 = vsel %vm2307, %v2041, -inf
      %v2470 = vsel %vm2307, %v2125, -inf
      %v2471 = vmax.f32 %v2469, %v2470
      %v2472 = vsel %vm2307, %v2209, -inf
      %v2473 = vmax.f32 %v2471, %v2472
      %v2474 = vsel %vm2307, %v2293, -inf
      %v2475 = vmax.f32 %v2473, %v2474
      %v2476 = vsel %vm2307, %v2044, -inf
      %v2477 = vsel %vm2307, %v2128, -inf
      %v2478 = vmax.f32 %v2476, %v2477
      %v2479 = vsel %vm2307, %v2212, -inf
      %v2480 = vmax.f32 %v2478, %v2479
      %v2481 = vsel %vm2307, %v2296, -inf
      %v2482 = vmax.f32 %v2480, %v2481
      %v2483 = vsel %vm2307, %v2047, -inf
      %v2484 = vsel %vm2307, %v2131, -inf
      %v2485 = vmax.f32 %v2483, %v2484
      %v2486 = vsel %vm2307, %v2215, -inf
      %v2487 = vmax.f32 %v2485, %v2486
      %v2488 = vsel %vm2307, %v2299, -inf
      %v2489 = vmax.f32 %v2487, %v2488
      %v2490 = vsel %vm2307, %v2050, -inf
      %v2491 = vsel %vm2307, %v2134, -inf
      %v2492 = vmax.f32 %v2490, %v2491
      %v2493 = vsel %vm2307, %v2218, -inf
      %v2494 = vmax.f32 %v2492, %v2493
      %v2495 = vsel %vm2307, %v2302, -inf
      %v2496 = vmax.f32 %v2494, %v2495
      %v2497 = vsel %vm2307, %v2053, -inf
      %v2498 = vsel %vm2307, %v2137, -inf
      %v2499 = vmax.f32 %v2497, %v2498
      %v2500 = vsel %vm2307, %v2221, -inf
      %v2501 = vmax.f32 %v2499, %v2500
      %v2502 = vsel %vm2307, %v2305, -inf
      %v2503 = vmax.f32 %v2501, %v2502
      %v2504 = vld [vmem:[%s2] sm:$0x1]
      %v2506 = vperm.slane %v2504, 0
      %v2508 = vadd.f32 %v2314, %v2506
      %v2509 = vadd.f32 %v2321, %v2506
      %v2510 = vadd.f32 %v2328, %v2506
      %v2511 = vadd.f32 %v2335, %v2506
      %v2512 = vadd.f32 %v2342, %v2506
      %v2513 = vadd.f32 %v2349, %v2506
      %v2514 = vadd.f32 %v2356, %v2506
      %v2515 = vadd.f32 %v2363, %v2506
      %v2516 = vadd.f32 %v2370, %v2506
      %v2517 = vadd.f32 %v2377, %v2506
      %v2518 = vadd.f32 %v2384, %v2506
      %v2519 = vadd.f32 %v2391, %v2506
      %v2520 = vadd.f32 %v2398, %v2506
      %v2521 = vadd.f32 %v2405, %v2506
      %v2522 = vadd.f32 %v2412, %v2506
      %v2523 = vadd.f32 %v2419, %v2506
      %v2524 = vadd.f32 %v2426, %v2506
      %v2525 = vadd.f32 %v2433, %v2506
      %v2526 = vadd.f32 %v2440, %v2506
      %v2527 = vadd.f32 %v2447, %v2506
      %v2528 = vadd.f32 %v2454, %v2506
      %v2529 = vadd.f32 %v2461, %v2506
      %v2530 = vadd.f32 %v2468, %v2506
      %v2531 = vadd.f32 %v2475, %v2506
      %v2532 = vadd.f32 %v2482, %v2506
      %v2533 = vadd.f32 %v2489, %v2506
      %v2534 = vadd.f32 %v2496, %v2506
      %v2535 = vadd.f32 %v2503, %v2506
      %v2536 = vmax.f32 %v2508, 0.0
      %v2537 = vmax.f32 %v2509, 0.0
      %v2538 = vmax.f32 %v2510, 0.0
      %v2539 = vmax.f32 %v2511, 0.0
      %v2540 = vmax.f32 %v2512, 0.0
      %v2541 = vmax.f32 %v2513, 0.0
      %v2542 = vmax.f32 %v2514, 0.0
      %v2543 = vmax.f32 %v2515, 0.0
      %v2544 = vmax.f32 %v2516, 0.0
      %v2545 = vmax.f32 %v2517, 0.0
      %v2546 = vmax.f32 %v2518, 0.0
      %v2547 = vmax.f32 %v2519, 0.0
      %v2548 = vmax.f32 %v2520, 0.0
      %v2549 = vmax.f32 %v2521, 0.0
      %v2550 = vmax.f32 %v2522, 0.0
      %v2551 = vmax.f32 %v2523, 0.0
      %v2552 = vmax.f32 %v2524, 0.0
      %v2553 = vmax.f32 %v2525, 0.0
      %v2554 = vmax.f32 %v2526, 0.0
      %v2555 = vmax.f32 %v2527, 0.0
      %v2556 = vmax.f32 %v2528, 0.0
      %v2557 = vmax.f32 %v2529, 0.0
      %v2558 = vmax.f32 %v2530, 0.0
      %v2559 = vmax.f32 %v2531, 0.0
      %v2560 = vmax.f32 %v2532, 0.0
      %v2561 = vmax.f32 %v2533, 0.0
      %v2562 = vmax.f32 %v2534, 0.0
      %v2563 = vmax.f32 %v2535, 0.0
      %2564 = vst.msk [vmem:[%s170] sm:$0xff] %vm2307, %v2536
      %2565 = vst.msk [vmem:[%s170 + $0x8] sm:$0xff] %vm2307, %v2537
      %2566 = vst.msk [vmem:[%s170 + $0x10] sm:$0xff] %vm2307, %v2538
      %2567 = vst.msk [vmem:[%s170 + $0x18] sm:$0xff] %vm2307, %v2539
      %2568 = vst.msk [vmem:[%s170 + $0x20] sm:$0xff] %vm2307, %v2540
      %2569 = vst.msk [vmem:[%s170 + $0x28] sm:$0xff] %vm2307, %v2541
      %2570 = vst.msk [vmem:[%s170 + $0x30] sm:$0xff] %vm2307, %v2542
      %2571 = vst.msk [vmem:[%s170 + $0x38] sm:$0xff] %vm2307, %v2543
      %2572 = vst.msk [vmem:[%s170 + $0x40] sm:$0xff] %vm2307, %v2544
      %2573 = vst.msk [vmem:[%s170 + $0x48] sm:$0xff] %vm2307, %v2545
      %2574 = vst.msk [vmem:[%s170 + $0x50] sm:$0xff] %vm2307, %v2546
      %2575 = vst.msk [vmem:[%s170 + $0x58] sm:$0xff] %vm2307, %v2547
      %2576 = vst.msk [vmem:[%s170 + $0x60] sm:$0xff] %vm2307, %v2548
      %2577 = vst.msk [vmem:[%s170 + $0x68] sm:$0xff] %vm2307, %v2549
      %2578 = vst.msk [vmem:[%s170 + $0x70] sm:$0xff] %vm2307, %v2550
      %2579 = vst.msk [vmem:[%s170 + $0x78] sm:$0xff] %vm2307, %v2551
      %2580 = vst.msk [vmem:[%s170 + $0x80] sm:$0xff] %vm2307, %v2552
      %2581 = vst.msk [vmem:[%s170 + $0x88] sm:$0xff] %vm2307, %v2553
      %2582 = vst.msk [vmem:[%s170 + $0x90] sm:$0xff] %vm2307, %v2554
      %2583 = vst.msk [vmem:[%s170 + $0x98] sm:$0xff] %vm2307, %v2555
      %2584 = vst.msk [vmem:[%s170 + $0xa0] sm:$0xff] %vm2307, %v2556
      %2585 = vst.msk [vmem:[%s170 + $0xa8] sm:$0xff] %vm2307, %v2557
      %2586 = vst.msk [vmem:[%s170 + $0xb0] sm:$0xff] %vm2307, %v2558
      %2587 = vst.msk [vmem:[%s170 + $0xb8] sm:$0xff] %vm2307, %v2559
      %2588 = vst.msk [vmem:[%s170 + $0xc0] sm:$0xff] %vm2307, %v2560
      %2589 = vst.msk [vmem:[%s170 + $0xc8] sm:$0xff] %vm2307, %v2561
      %2590 = vst.msk [vmem:[%s170 + $0xd0] sm:$0xff] %vm2307, %v2562
      %2591 = vst.msk [vmem:[%s170 + $0xd8] sm:$0xff] %vm2307, %v2563
      %p2592 = scmp.lt.s32.totalorder %s14, 1
      %s2593 = scalar_select %p2592, %s14, 1
      %s2594 = smul.addr %s2593, 28
      %s2595 = smul.addr %s2594, 8
      %s2596 = scalar_lea.vmem %s3, %s2595
      // Predicated region
      $region33: #{lenet5_forward.3} parent=31 // pred_check
        %p2597 = pneg %p100
      $region34: #{lenet5_forward.3} parent=31 // pred_check_branch
        %2599 = sbr.rel (%p2597) target = $region36
      $region35: #{lenet5_forward.3} parent=31 // pred_region
        _
      $region36: #{lenet5_forward.3} parent=31 // pred_fallthru
        _
    $region32: #{lenet5_forward.3} parent=5 // pred_fallthru
      _
    %p2600 = scmp.le.s32.totalorder 2, %s9
    // Predicated region
    $region37: #{lenet5_forward.3} parent=5 // pred_check
      %p2601 = pneg %p2600
    $region38: #{lenet5_forward.3} parent=5 // pred_check_branch
      %2603 = sbr.rel (%p2601) target = $region40
    $region39: #{lenet5_forward.3} parent=5 // pred_region
      %s2604 = ssub.s32 %s9, 2
      // Predicated region
      $region41: #{lenet5_forward.3} parent=39 // pred_check
        %p2605 = pneg %p106
      $region42: #{lenet5_forward.3} parent=39 // pred_check_branch
        %2607 = sbr.rel (%p2605) target = $region44
      $region43: #{lenet5_forward.3} parent=39 // pred_region
        %p2608 = scmp.lt.s32.totalorder %s15, 1
        %s2609 = scalar_select %p2608, %s15, 1
        %s2610 = smul.addr %s2609, 28
        %s2611 = smul.addr %s2610, 8
        %s2612 = scalar_lea.vmem %s3, %s2611
      $region44: #{lenet5_forward.3} parent=39 // pred_fallthru
        _
    $region40: #{lenet5_forward.3} parent=5 // pred_fallthru
      _
  $region6: #{lenet5_forward.3} parent=0 // loop_footer
    %s13 = sadd.s32 1, %s9
  $region7: #{lenet5_forward.3} parent=0 // loop_footer_branch
    %8 = sbr.rel target = $region3
  $region8: #{lenet5_forward.3} parent=0 // loop_exit
    _

// kernel: lenet5_forward.5
$region0: #{lenet5_forward.5}
  #allocation0 [shape = 'u32[]', space=smem, size = 0x4, offset = 0x4, fixed_abs, tag = 'smem constant byte address 0x4 - core index']
  #allocation1 [shape = 'u32[72,128]{1,0:T(1,128)}', space=vmem, size = 0x9000, scoped, tag = 'internal scratch']
  %s0 = inlined_call_operand.vmem [shape: f32[8,400], index: 0, kind: input, shape index: {}]
  %s1 = inlined_call_operand.vmem [shape: f32[400,120], index: 1, kind: input, shape index: {}]
  %s2 = inlined_call_operand.vmem [shape: f32[1,120], index: 2, kind: input, shape index: {}]
  %s3 = inlined_call_operand.vmem [shape: f32[120,84], index: 3, kind: input, shape index: {}]
  %s4 = inlined_call_operand.vmem [shape: f32[1,84], index: 4, kind: input, shape index: {}]
  %s5 = inlined_call_operand.vmem [shape: f32[84,10], index: 5, kind: input, shape index: {}]
  %s6 = inlined_call_operand.vmem [shape: f32[1,10], index: 6, kind: input, shape index: {}]
  %s7 = inlined_call_operand.vmem [shape: f32[8,10], index: 7, kind: output, shape index: {}]
  %s8 = sld [smem:[#allocation0]]
  $region38: #{lenet5_forward.5} parent=0
    _
  %s10 = ssub.s32 1, %s8
  %s11 = scalar_select 0, %s10, %s8
  // Predicated region
  $region2: #{lenet5_forward.5} parent=0 // pred_check
    _
  $region3: #{lenet5_forward.5} parent=0 // pred_check_branch
    %13 = sbr.rel (0) target = $region5
  $region4: #{lenet5_forward.5} parent=0 // pred_region
    _
  $region5: #{lenet5_forward.5} parent=0 // pred_fallthru
    _
  // Predicated region
  $region6: #{lenet5_forward.5} parent=0 // pred_check
    _
  $region7: #{lenet5_forward.5} parent=0 // pred_check_branch
    %15 = sbr.rel (0) target = $region9
  $region8: #{lenet5_forward.5} parent=0 // pred_region
    _
  $region9: #{lenet5_forward.5} parent=0 // pred_fallthru
    _
  // Predicated region
  $region10: #{lenet5_forward.5} parent=0 // pred_check
    _
  $region11: #{lenet5_forward.5} parent=0 // pred_check_branch
    %17 = sbr.rel (0) target = $region13
  $region12: #{lenet5_forward.5} parent=0 // pred_region
    _
  $region13: #{lenet5_forward.5} parent=0 // pred_fallthru
    _
  // Predicated region
  $region14: #{lenet5_forward.5} parent=0 // pred_check
    _
  $region15: #{lenet5_forward.5} parent=0 // pred_check_branch
    %19 = sbr.rel (0) target = $region17
  $region16: #{lenet5_forward.5} parent=0 // pred_region
    _
  $region17: #{lenet5_forward.5} parent=0 // pred_fallthru
    _
  // Predicated region
  $region18: #{lenet5_forward.5} parent=0 // pred_check
    _
  $region19: #{lenet5_forward.5} parent=0 // pred_check_branch
    %21 = sbr.rel (0) target = $region21
  $region20: #{lenet5_forward.5} parent=0 // pred_region
    _
  $region21: #{lenet5_forward.5} parent=0 // pred_fallthru
    _
  // Predicated region
  $region22: #{lenet5_forward.5} parent=0 // pred_check
    _
  $region23: #{lenet5_forward.5} parent=0 // pred_check_branch
    %23 = sbr.rel (0) target = $region25
  $region24: #{lenet5_forward.5} parent=0 // pred_region
    _
  $region25: #{lenet5_forward.5} parent=0 // pred_fallthru
    _
  // Predicated region
  $region26: #{lenet5_forward.5} parent=0 // pred_check
    _
  $region27: #{lenet5_forward.5} parent=0 // pred_check_branch
    %25 = sbr.rel (0) target = $region29
  $region28: #{lenet5_forward.5} parent=0 // pred_region
    _
  $region29: #{lenet5_forward.5} parent=0 // pred_fallthru
    _
  %v26 = vld [vmem:[%s0] sm:$0xff]
  %v27 = vld [vmem:[%s0 + $0x8] sm:$0xff]
  %v28 = vld [vmem:[%s0 + $0x10] sm:$0xff]
  %v29 = vld [vmem:[%s0 + $0x18] sm:$0xff]
  %v30 = vld [vmem:[%s1] sm:$0xff]
  %v31 = vld [vmem:[%s1 + $0x8] sm:$0xff]
  %v32 = vld [vmem:[%s1 + $0x10] sm:$0xff]
  %v33 = vld [vmem:[%s1 + $0x18] sm:$0xff]
  %v34 = vld [vmem:[%s1 + $0x20] sm:$0xff]
  %v35 = vld [vmem:[%s1 + $0x28] sm:$0xff]
  %v36 = vld [vmem:[%s1 + $0x30] sm:$0xff]
  %v37 = vld [vmem:[%s1 + $0x38] sm:$0xff]
  %v38 = vld [vmem:[%s1 + $0x40] sm:$0xff]
  %v39 = vld [vmem:[%s1 + $0x48] sm:$0xff]
  %v40 = vld [vmem:[%s1 + $0x50] sm:$0xff]
  %v41 = vld [vmem:[%s1 + $0x58] sm:$0xff]
  %v42 = vld [vmem:[%s1 + $0x60] sm:$0xff]
  %v43 = vld [vmem:[%s1 + $0x68] sm:$0xff]
  %v44 = vld [vmem:[%s1 + $0x70] sm:$0xff]
  %v45 = vld [vmem:[%s1 + $0x78] sm:$0xff]
  %v46 = vld [vmem:[%s1 + $0x80] sm:$0xff]
  %v47 = vld [vmem:[%s1 + $0x88] sm:$0xff]
  %v48 = vld [vmem:[%s1 + $0x90] sm:$0xff]
  %v49 = vld [vmem:[%s1 + $0x98] sm:$0xff]
  %v50 = vld [vmem:[%s1 + $0xa0] sm:$0xff]
  %v51 = vld [vmem:[%s1 + $0xa8] sm:$0xff]
  %v52 = vld [vmem:[%s1 + $0xb0] sm:$0xff]
  %v53 = vld [vmem:[%s1 + $0xb8] sm:$0xff]
  %v54 = vld [vmem:[%s1 + $0xc0] sm:$0xff]
  %v55 = vld [vmem:[%s1 + $0xc8] sm:$0xff]
  %v56 = vld [vmem:[%s1 + $0xd0] sm:$0xff]
  %v57 = vld [vmem:[%s1 + $0xd8] sm:$0xff]
  %v58 = vld [vmem:[%s1 + $0xe0] sm:$0xff]
  %v59 = vld [vmem:[%s1 + $0xe8] sm:$0xff]
  %v60 = vld [vmem:[%s1 + $0xf0] sm:$0xff]
  %v61 = vld [vmem:[%s1 + $0xf8] sm:$0xff]
  %v62 = vld [vmem:[%s1 + $0x100] sm:$0xff]
  %v63 = vld [vmem:[%s1 + $0x108] sm:$0xff]
  %v64 = vld [vmem:[%s1 + $0x110] sm:$0xff]
  %v65 = vld [vmem:[%s1 + $0x118] sm:$0xff]
  %v66 = vld [vmem:[%s1 + $0x120] sm:$0xff]
  %v67 = vld [vmem:[%s1 + $0x128] sm:$0xff]
  %v68 = vld [vmem:[%s1 + $0x130] sm:$0xff]
  %v69 = vld [vmem:[%s1 + $0x138] sm:$0xff]
  %v70 = vld [vmem:[%s1 + $0x140] sm:$0xff]
  %v71 = vld [vmem:[%s1 + $0x148] sm:$0xff]
  %v72 = vld [vmem:[%s1 + $0x150] sm:$0xff]
  %v73 = vld [vmem:[%s1 + $0x158] sm:$0xff]
  %v74 = vld [vmem:[%s1 + $0x160] sm:$0xff]
  %v75 = vld [vmem:[%s1 + $0x168] sm:$0xff]
  %v76 = vld [vmem:[%s1 + $0x170] sm:$0xff]
  %v77 = vld [vmem:[%s1 + $0x178] sm:$0xff]
  %v78 = vld [vmem:[%s1 + $0x180] sm:$0xff]
  %v79 = vld [vmem:[%s1 + $0x188] sm:$0xff]
  %v80 = vld [vmem:[%s2] sm:$0x1]
  %v82 = vperm.slane %v80, 0
  %vm84 = vcmask 130048
  %v86 = vsel %vm84, %v29, 0
  %88 = vmatpush.msra.mxu0 %v45
  %89 = vmatpush.msra.mxu0 %v44
  %90 = vmatpush.msra.mxu0 %v43
  %91 = vmatpush.msra.mxu0 %v42
  %92 = vmatpush.msra.mxu0 %v41
  %93 = vmatpush.msra.mxu0 %v40
  %94 = vmatpush.msra.mxu0 %v39
  %95 = vmatpush.msra.mxu0 %v38
  %96 = vmatpush.msra.mxu0 %v37
  %97 = vmatpush.msra.mxu0 %v36
  %98 = vmatpush.msra.mxu0 %v35
  %99 = vmatpush.msra.mxu0 %v34
  %100 = vmatpush.msra.mxu0 %v33
  %101 = vmatpush.msra.mxu0 %v32
  %102 = vmatpush.msra.mxu0 %v31
  %103 = vmatpush.msra.mxu0 %v30
  %104 = vmatmul.f32.gmra.mxu0 %v26
  %v105 = vpop.f32.mrf.mxu0
  %v106 = vadd.f32 %v82, %v105
  %107 = vdwg.mxu0
  %108 = vmatpush.msra.mxu0 %v61
  %109 = vmatpush.msra.mxu0 %v60
  %110 = vmatpush.msra.mxu0 %v59
  %111 = vmatpush.msra.mxu0 %v58
  %112 = vmatpush.msra.mxu0 %v57
  %113 = vmatpush.msra.mxu0 %v56
  %114 = vmatpush.msra.mxu0 %v55
  %115 = vmatpush.msra.mxu0 %v54
  %116 = vmatpush.msra.mxu0 %v53
  %117 = vmatpush.msra.mxu0 %v52
  %118 = vmatpush.msra.mxu0 %v51
  %119 = vmatpush.msra.mxu0 %v50
  %120 = vmatpush.msra.mxu0 %v49
  %121 = vmatpush.msra.mxu0 %v48
  %122 = vmatpush.msra.mxu0 %v47
  %123 = vmatpush.msra.mxu0 %v46
  %124 = vmatmul.f32.gmra.mxu0 %v27
  %v125 = vpop.f32.mrf.mxu0
  %v126 = vadd.f32 %v106, %v125
  %127 = vdwg.mxu0
  %128 = vmatpush.msra.mxu0 %v77
  %129 = vmatpush.msra.mxu0 %v76
  %130 = vmatpush.msra.mxu0 %v75
  %131 = vmatpush.msra.mxu0 %v74
  %132 = vmatpush.msra.mxu0 %v73
  %133 = vmatpush.msra.mxu0 %v72
  %134 = vmatpush.msra.mxu0 %v71
  %135 = vmatpush.msra.mxu0 %v70
  %136 = vmatpush.msra.mxu0 %v69
  %137 = vmatpush.msra.mxu0 %v68
  %138 = vmatpush.msra.mxu0 %v67
  %139 = vmatpush.msra.mxu0 %v66
  %140 = vmatpush.msra.mxu0 %v65
  %141 = vmatpush.msra.mxu0 %v64
  %142 = vmatpush.msra.mxu0 %v63
  %143 = vmatpush.msra.mxu0 %v62
  %144 = vmatmul.f32.gmra.mxu0 %v28
  %v145 = vpop.f32.mrf.mxu0
  %v146 = vadd.f32 %v126, %v145
  %147 = vdwg.mxu0
  %148 = vmatpush.msra.mxu0 0.0
  %149 = vmatpush.msra.mxu0 0.0
  %150 = vmatpush.msra.mxu0 0.0
  %151 = vmatpush.msra.mxu0 0.0
  %152 = vmatpush.msra.mxu0 0.0
  %153 = vmatpush.msra.mxu0 0.0
  %154 = vmatpush.msra.mxu0 0.0
  %155 = vmatpush.msra.mxu0 0.0
  %156 = vmatpush.msra.mxu0 0.0
  %157 = vmatpush.msra.mxu0 0.0
  %158 = vmatpush.msra.mxu0 0.0
  %159 = vmatpush.msra.mxu0 0.0
  %160 = vmatpush.msra.mxu0 0.0
  %161 = vmatpush.msra.mxu0 0.0
  %162 = vmatpush.msra.mxu0 %v79
  %163 = vmatpush.msra.mxu0 %v78
  %164 = vmatmul.f32.gmra.mxu0 %v86
  %v165 = vpop.f32.mrf.mxu0
  %v166 = vadd.f32 %v146, %v165
  %167 = vdwg.mxu0
  %v168 = vmax.f32 %v166, 0.0
  %v169 = vld [vmem:[%s3] sm:$0xff]
  %v170 = vld [vmem:[%s3 + $0x8] sm:$0xff]
  %v171 = vld [vmem:[%s3 + $0x10] sm:$0xff]
  %v172 = vld [vmem:[%s3 + $0x18] sm:$0xff]
  %v173 = vld [vmem:[%s3 + $0x20] sm:$0xff]
  %v174 = vld [vmem:[%s3 + $0x28] sm:$0xff]
  %v175 = vld [vmem:[%s3 + $0x30] sm:$0xff]
  %v176 = vld [vmem:[%s3 + $0x38] sm:$0xff]
  %v177 = vld [vmem:[%s3 + $0x40] sm:$0xff]
  %v178 = vld [vmem:[%s3 + $0x48] sm:$0xff]
  %v179 = vld [vmem:[%s3 + $0x50] sm:$0xff]
  %v180 = vld [vmem:[%s3 + $0x58] sm:$0xff]
  %v181 = vld [vmem:[%s3 + $0x60] sm:$0xff]
  %v182 = vld [vmem:[%s3 + $0x68] sm:$0xff]
  %v183 = vld [vmem:[%s3 + $0x70] sm:$0xff]
  %v184 = vld [vmem:[%s4] sm:$0x1]
  %v186 = vperm.slane %v184, 0
  %vm188 = vcmask 982016
  %v190 = vsel %vm188, %v168, 0
  %192 = vmatpush.msra.mxu0 0.0
  %193 = vmatpush.msra.mxu0 %v183
  %194 = vmatpush.msra.mxu0 %v182
  %195 = vmatpush.msra.mxu0 %v181
  %196 = vmatpush.msra.mxu0 %v180
  %197 = vmatpush.msra.mxu0 %v179
  %198 = vmatpush.msra.mxu0 %v178
  %199 = vmatpush.msra.mxu0 %v177
  %200 = vmatpush.msra.mxu0 %v176
  %201 = vmatpush.msra.mxu0 %v175
  %202 = vmatpush.msra.mxu0 %v174
  %203 = vmatpush.msra.mxu0 %v173
  %204 = vmatpush.msra.mxu0 %v172
  %205 = vmatpush.msra.mxu0 %v171
  %206 = vmatpush.msra.mxu0 %v170
  %207 = vmatpush.msra.mxu0 %v169
  %208 = vmatmul.f32.gmra.mxu0 %v190
  %v209 = vpop.f32.mrf.mxu0
  %v210 = vadd.f32 %v186, %v209
  %211 = vdwg.mxu0
  %v212 = vmax.f32 %v210, 0.0
  %v213 = vld [vmem:[%s5] sm:$0xff]
  %v214 = vld [vmem:[%s5 + $0x8] sm:$0xff]
  %v215 = vld [vmem:[%s5 + $0x10] sm:$0xff]
  %v216 = vld [vmem:[%s5 + $0x18] sm:$0xff]
  %v217 = vld [vmem:[%s5 + $0x20] sm:$0xff]
  %v218 = vld [vmem:[%s5 + $0x28] sm:$0xff]
  %v219 = vld [vmem:[%s5 + $0x30] sm:$0xff]
  %v220 = vld [vmem:[%s5 + $0x38] sm:$0xff]
  %v221 = vld [vmem:[%s5 + $0x40] sm:$0xff]
  %v222 = vld [vmem:[%s5 + $0x48] sm:$0xff]
  %v223 = vld [vmem:[%s5 + $0x50] sm:$0xf]
  %v224 = vld [vmem:[%s6] sm:$0x1]
  %v226 = vperm.slane %v224, 0
  %vm228 = vcmask 687104
  %v230 = vsel %vm228, %v212, 0
  %vm232 = vcmask 1043456
  %v234 = vsel %vm232, %v223, 0
  %236 = vmatpush.msra.mxu0 0.0
  %237 = vmatpush.msra.mxu0 0.0
  %238 = vmatpush.msra.mxu0 0.0
  %239 = vmatpush.msra.mxu0 0.0
  %240 = vmatpush.msra.mxu0 0.0
  %241 = vmatpush.msra.mxu0 %v234
  %242 = vmatpush.msra.mxu0 %v222
  %243 = vmatpush.msra.mxu0 %v221
  %244 = vmatpush.msra.mxu0 %v220
  %245 = vmatpush.msra.mxu0 %v219
  %246 = vmatpush.msra.mxu0 %v218
  %247 = vmatpush.msra.mxu0 %v217
  %248 = vmatpush.msra.mxu0 %v216
  %249 = vmatpush.msra.mxu0 %v215
  %250 = vmatpush.msra.mxu0 %v214
  %251 = vmatpush.msra.mxu0 %v213
  %252 = vmatmul.f32.gmra.mxu0 %v230
  %v253 = vpop.f32.mrf.mxu0
  %v254 = vadd.f32 %v226, %v253
  %255 = vdwg.mxu0
  %vm256 = vcmask 80896
  %257 = vst.msk [vmem:[%s7] sm:$0xff] %vm256, %v254
  // Predicated region
  $region30: #{lenet5_forward.5} parent=0 // pred_check
    _
  $region31: #{lenet5_forward.5} parent=0 // pred_check_branch
    %259 = sbr.rel (0) target = $region33
  $region32: #{lenet5_forward.5} parent=0 // pred_region
    _
  $region33: #{lenet5_forward.5} parent=0 // pred_fallthru
    _
  // Predicated region
  $region34: #{lenet5_forward.5} parent=0 // pred_check
    _
  $region35: #{lenet5_forward.5} parent=0 // pred_check_branch
    %261 = sbr.rel (0) target = $region37
  $region36: #{lenet5_forward.5} parent=0 // pred_region
    _
  $region37: #{lenet5_forward.5} parent=0 // pred_fallthru
    _

</llo_original>
